<compile_context>
chip_gen: v6e
topology: v6e:2x2x1
jax: 0.10.0
libtpu: 0.0.40
codegen_flags: <defaults>
</compile_context>

<pallas_src>
import numpy as np
import jax
import jax.numpy as jnp
from jax.experimental import pallas as pl
from jax.experimental.pallas import tpu as pltpu


def lstm_kernel(tmax_ref, emb_ref, wih_ref, whh_ref, b_ref, valid_ref,
                wout_ref, bout_ref, y_ref, gx_sc, h_sc, c_sc):
    t_i = pl.program_id(0)
    Bp, Hp = h_sc.shape
    Tc = gx_sc.shape[0] // Bp
    tmax = tmax_ref[0]
    t0 = t_i * Tc

    @pl.when(t_i == 0)
    def _init():
        h_sc[...] = jnp.zeros_like(h_sc)
        c_sc[...] = jnp.zeros_like(c_sc)
        y_ref[...] = jnp.zeros_like(y_ref)

    # Skip whole dead time-chunks (t0 >= max(x_len)).
    @pl.when(t0 < tmax)
    def _chunk():
        # Hoisted input projection + bias for the whole chunk: one MXU matmul
        # of shape [Tc*Bp, E] x [E, 4Hp], off the sequential critical path.
        gx_sc[...] = (jnp.dot(emb_ref[...], wih_ref[...],
                              preferred_element_type=jnp.float32)
                      + b_ref[...])

        # Statically unrolled recurrence over the chunk (Tc is a compile-time
        # constant); only h @ W_hh + activations remain per step.
        for tl in range(Tc):
            @pl.when(t0 + tl < tmax)            # skip dead timesteps
            def _step():
                gates = (gx_sc[tl * Bp:(tl + 1) * Bp, :]
                         + jnp.dot(h_sc[...], whh_ref[...],
                                   preferred_element_type=jnp.float32))
                # Hp is a multiple of 128, so every gate slice is a whole
                # 128-lane-aligned vreg block (no lane relayouts).
                i_g = jax.nn.sigmoid(gates[:, 0 * Hp:1 * Hp])
                f_g = jax.nn.sigmoid(gates[:, 1 * Hp:2 * Hp])
                g_g = jnp.tanh(gates[:, 2 * Hp:3 * Hp])
                o_g = jax.nn.sigmoid(gates[:, 3 * Hp:4 * Hp])
                c_new = f_g * c_sc[...] + i_g * g_g
                c_sc[...] = c_new
                h_sc[...] = o_g * jnp.tanh(c_new)

    # pad_packed_sequence: y = (h_{Tmax-1} masked by len > Tmax-1) @ W_out + b.
    @pl.when(t_i == pl.num_programs(0) - 1)
    def _final():
        last_h = h_sc[...] * valid_ref[...]
        y_ref[...] = (jnp.dot(last_h, wout_ref[...],
                              preferred_element_type=jnp.float32)
                      + bout_ref[...])


def _round_up(x, m):
    return (x + m - 1) // m * m


def lstm_forward(x_ids, x_len, emb_w, w_ih, w_hh, b_ih, b_hh, w_lin, b_lin,
                 *, time_chunk=32):
    """Embedding lookup (wrapper glue) + Pallas LSTM/linear kernel."""
    B, T = x_ids.shape
    E = emb_w.shape[1]
    H = w_hh.shape[1]
    L = w_lin.shape[0]

    # ---- padded, hardware-friendly shapes -------------------------------
    Bp = _round_up(B, 8)          # sublane alignment
    Hp = _round_up(H, 128)        # each gate slice = whole 128-lane blocks
    Lp = _round_up(L, 128)        # lane-dense output store
    Tc = min(time_chunk, T)       # timesteps per grid step
    Tp = _round_up(T, Tc)
    NT = Tp // Tc

    # ---- pad inputs ------------------------------------------------------
    ids_p = jnp.zeros((Bp, Tp), jnp.int32).at[:B, :T].set(x_ids.astype(jnp.int32))
    len_p = jnp.zeros((Bp,), jnp.int32).at[:B].set(x_len.astype(jnp.int32))
    tmax = jnp.max(len_p).astype(jnp.int32)
    valid = (len_p >= tmax).astype(jnp.float32).reshape(Bp, 1)

    # Time-major embedding gather; flatten of leading dims is a free reshape
    # (no extra HBM transpose pass).
    emb_flat = emb_w[ids_p.T].reshape(Tp * Bp, E).astype(jnp.float32)

    # ---- pad weights per-gate (gate order i, f, g, o) --------------------
    padH = Hp - H
    w_ih_p = jnp.pad(w_ih.reshape(4, H, E), ((0, 0), (0, padH), (0, 0)))
    w_ih_p = w_ih_p.reshape(4 * Hp, E).T                       # [E, 4Hp]
    w_hh_p = jnp.pad(w_hh.reshape(4, H, H), ((0, 0), (0, padH), (0, padH)))
    w_hh_p = w_hh_p.reshape(4 * Hp, Hp).T                      # [Hp, 4Hp]
    bias_p = jnp.pad((b_ih + b_hh).reshape(4, H), ((0, 0), (0, padH)))
    bias_p = bias_p.reshape(1, 4 * Hp)
    w_out_p = jnp.pad(w_lin, ((0, Lp - L), (0, padH))).T       # [Hp, Lp]
    b_out_p = jnp.pad(b_lin, (0, Lp - L)).reshape(1, Lp)

    grid_spec = pltpu.PrefetchScalarGridSpec(
        num_scalar_prefetch=1,                                  # tmax in SMEM
        grid=(NT,),
        in_specs=[
            pl.BlockSpec((Tc * Bp, E), lambda t, tm: (t, 0)),   # emb chunk
            pl.BlockSpec((E, 4 * Hp), lambda t, tm: (0, 0)),    # W_ih^T (resident)
            pl.BlockSpec((Hp, 4 * Hp), lambda t, tm: (0, 0)),   # W_hh^T (resident)
            pl.BlockSpec((1, 4 * Hp), lambda t, tm: (0, 0)),    # b_ih + b_hh
            pl.BlockSpec((Bp, 1), lambda t, tm: (0, 0)),        # valid mask
            pl.BlockSpec((Hp, Lp), lambda t, tm: (0, 0)),       # W_lin^T
            pl.BlockSpec((1, Lp), lambda t, tm: (0, 0)),        # b_lin
        ],
        out_specs=pl.BlockSpec((Bp, Lp), lambda t, tm: (0, 0)),
        scratch_shapes=[
            pltpu.VMEM((Tc * Bp, 4 * Hp), jnp.float32),         # hoisted gates_x
            pltpu.VMEM((Bp, Hp), jnp.float32),                  # h carry
            pltpu.VMEM((Bp, Hp), jnp.float32),                  # c carry
        ],
    )

    y_p = pl.pallas_call(
        lstm_kernel,
        out_shape=jax.ShapeDtypeStruct((Bp, Lp), jnp.float32),
        grid_spec=grid_spec,
        compiler_params=pltpu.CompilerParams(
            dimension_semantics=("arbitrary",)),                # sequential recurrence
    )(tmax.reshape(1), emb_flat, w_ih_p, w_hh_p, bias_p, valid, w_out_p, b_out_p)

    return y_p[:B, :L]


def lstm_reference(x_ids, x_len, emb_w, w_ih, w_hh, b_ih, b_hh, w_lin, b_lin):
    """Pure-JAX reference replicating the PyTorch module forward exactly."""
    emb = emb_w[x_ids]                                  # [B, T, E]
    B, T, E = emb.shape
    H = w_hh.shape[1]

    def step(carry, x_t):
        h, c = carry
        gates = x_t @ w_ih.T + b_ih + h @ w_hh.T + b_hh
        i = jax.nn.sigmoid(gates[:, 0:H])
        f = jax.nn.sigmoid(gates[:, H:2 * H])
        g = jnp.tanh(gates[:, 2 * H:3 * H])
        o = jax.nn.sigmoid(gates[:, 3 * H:4 * H])
        c = f * c + i * g
        h = o * jnp.tanh(c)
        return (h, c), h

    h0 = jnp.zeros((B, H), jnp.float32)
    c0 = jnp.zeros((B, H), jnp.float32)
    _, hs = jax.lax.scan(step, (h0, c0), jnp.transpose(emb, (1, 0, 2)))
    hs = jnp.transpose(hs, (1, 0, 2))                   # [B, T, H]

    tmax = int(jnp.max(x_len))                          # pad_packed_sequence length
    last = hs[:, tmax - 1, :] * (x_len > (tmax - 1)).astype(jnp.float32)[:, None]
    return last @ w_lin.T + b_lin


if __name__ == "__main__":
    # small, module-consistent shapes
    B, T = 2, 8
    vocab_size = 20
    embedding_dim = 32
    hidden_dim = 32
    label_num = 4

    key = jax.random.PRNGKey(0)
    k_emb, k_ih, k_hh, k_bih, k_bhh, k_lw, k_lb, k_ids = jax.random.split(key, 8)

    # deterministic parameter init (shapes follow torch.nn.{Embedding,LSTM,Linear})
    emb_w = 0.1 * jax.random.normal(k_emb, (vocab_size, embedding_dim), jnp.float32)
    emb_w = emb_w.at[0].set(0.0)                        # padding_idx=0
    klstm = 1.0 / np.sqrt(hidden_dim)
    w_ih = jax.random.uniform(k_ih, (4 * hidden_dim, embedding_dim), jnp.float32, -klstm, klstm)
    w_hh = jax.random.uniform(k_hh, (4 * hidden_dim, hidden_dim), jnp.float32, -klstm, klstm)
    b_ih = jax.random.uniform(k_bih, (4 * hidden_dim,), jnp.float32, -klstm, klstm)
    b_hh = jax.random.uniform(k_bhh, (4 * hidden_dim,), jnp.float32, -klstm, klstm)
    klin = 1.0 / np.sqrt(hidden_dim)
    w_lin = jax.random.uniform(k_lw, (label_num, hidden_dim), jnp.float32, -klin, klin)
    b_lin = jax.random.uniform(k_lb, (label_num,), jnp.float32, -klin, klin)

    # token ids with padding (id 0 past each sequence length); max(len) < T to
    # exercise the pad_packed_sequence truncation path
    x_len = jnp.array([6, 4], dtype=jnp.int32)
    x_ids = jax.random.randint(k_ids, (B, T), 1, vocab_size, dtype=jnp.int32)
    pos = jnp.arange(T)[None, :]
    x_ids = jnp.where(pos < x_len[:, None], x_ids, 0)

    y = lstm_forward(x_ids, x_len, emb_w, w_ih, w_hh, b_ih, b_hh, w_lin, b_lin)
    y = jax.block_until_ready(y)

    y_ref = lstm_reference(x_ids, x_len, emb_w, w_ih, w_hh, b_ih, b_hh, w_lin, b_lin)
    np.testing.assert_allclose(np.asarray(y), np.asarray(y_ref), rtol=1e-3, atol=1e-3)

    print("KERNEL_OK")
</pallas_src>

<mosaic_0001>
module attributes {stable_mosaic.version = 11 : i64} {
  func.func @lstm_kernel(%arg0: i32, %arg1: memref<1xi32, #tpu.memory_space<smem>>, %arg2: memref<64x32xf32, #tpu.memory_space<vmem>>, %arg3: memref<32x512xf32, #tpu.memory_space<vmem>>, %arg4: memref<128x512xf32, #tpu.memory_space<vmem>>, %arg5: memref<1x512xf32, #tpu.memory_space<vmem>>, %arg6: memref<8x1xf32, #tpu.memory_space<vmem>>, %arg7: memref<128x128xf32, #tpu.memory_space<vmem>>, %arg8: memref<1x128xf32, #tpu.memory_space<vmem>>, %arg9: memref<8x128xf32, #tpu.memory_space<vmem>>, %arg10: memref<64x512xf32, #tpu.memory_space<vmem>>, %arg11: memref<8x128xf32, #tpu.memory_space<vmem>>, %arg12: memref<8x128xf32, #tpu.memory_space<vmem>>) attributes {dimension_semantics = [#tpu.dimension_semantics<arbitrary>], iteration_bounds = array<i64: 1>, scalar_prefetch = 1 : i64, scratch_operands = 3 : i64, tpu.core_type = #tpu.core_type<tc>, window_params = [{transform_indices = @transform_0, window_bounds = array<i64: 64, 32>}, {pipeline_mode = #tpu.pipeline_mode<synchronous>, transform_indices = @transform_1, window_bounds = array<i64: 32, 512>}, {pipeline_mode = #tpu.pipeline_mode<synchronous>, transform_indices = @transform_2, window_bounds = array<i64: 128, 512>}, {pipeline_mode = #tpu.pipeline_mode<synchronous>, transform_indices = @transform_3, window_bounds = array<i64: 1, 512>}, {pipeline_mode = #tpu.pipeline_mode<synchronous>, transform_indices = @transform_4, window_bounds = array<i64: 8, 1>}, {pipeline_mode = #tpu.pipeline_mode<synchronous>, transform_indices = @transform_5, window_bounds = array<i64: 128, 128>}, {pipeline_mode = #tpu.pipeline_mode<synchronous>, transform_indices = @transform_6, window_bounds = array<i64: 1, 128>}, {pipeline_mode = #tpu.pipeline_mode<synchronous>, transform_indices = @transform_7, window_bounds = array<i64: 8, 128>}]} {
    %c0 = arith.constant 0 : index
    %0 = memref.load %arg1[%c0] : memref<1xi32, #tpu.memory_space<smem>>
    %c8_i32 = arith.constant 8 : i32
    %1 = arith.muli %arg0, %c8_i32 : i32
    %c0_i32 = arith.constant 0 : i32
    %2 = arith.cmpi eq, %arg0, %c0_i32 : i32
    %3 = arith.extui %2 : i1 to i32
    %c0_i32_0 = arith.constant 0 : i32
    %4 = arith.cmpi ne, %3, %c0_i32_0 : i32
    scf.if %4 {
      %cst = arith.constant 0.000000e+00 : f32
      %11 = vector.broadcast %cst : f32 to vector<8x128xf32>
      %c0_4 = arith.constant 0 : index
      %c0_5 = arith.constant 0 : index
      %12 = vector.load %arg11[%c0_4, %c0_5] : memref<8x128xf32, #tpu.memory_space<vmem>>, vector<8x128xf32>
      tpu.vector_store %arg11[%c0_4, %c0_5], %11 {strides = array<i32>} : memref<8x128xf32, #tpu.memory_space<vmem>>, vector<8x128xf32>,
      %cst_6 = arith.constant 0.000000e+00 : f32
      %13 = vector.broadcast %cst_6 : f32 to vector<8x128xf32>
      %c0_7 = arith.constant 0 : index
      %c0_8 = arith.constant 0 : index
      %14 = vector.load %arg12[%c0_7, %c0_8] : memref<8x128xf32, #tpu.memory_space<vmem>>, vector<8x128xf32>
      tpu.vector_store %arg12[%c0_7, %c0_8], %13 {strides = array<i32>} : memref<8x128xf32, #tpu.memory_space<vmem>>, vector<8x128xf32>,
      %cst_9 = arith.constant 0.000000e+00 : f32
      %15 = vector.broadcast %cst_9 : f32 to vector<8x128xf32>
      %c0_10 = arith.constant 0 : index
      %c0_11 = arith.constant 0 : index
      %16 = vector.load %arg9[%c0_10, %c0_11] : memref<8x128xf32, #tpu.memory_space<vmem>>, vector<8x128xf32>
      tpu.vector_store %arg9[%c0_10, %c0_11], %15 {strides = array<i32>} : memref<8x128xf32, #tpu.memory_space<vmem>>, vector<8x128xf32>,
    } else {
    }
    %5 = arith.cmpi slt, %1, %0 : i32
    %6 = arith.extui %5 : i1 to i32
    %c0_i32_1 = arith.constant 0 : i32
    %7 = arith.cmpi ne, %6, %c0_i32_1 : i32
    scf.if %7 {
      %c0_4 = arith.constant 0 : index
      %c0_5 = arith.constant 0 : index
      %11 = vector.load %arg2[%c0_4, %c0_5] : memref<64x32xf32, #tpu.memory_space<vmem>>, vector<64x32xf32>
      %c0_6 = arith.constant 0 : index
      %c0_7 = arith.constant 0 : index
      %12 = vector.load %arg3[%c0_6, %c0_7] : memref<32x512xf32, #tpu.memory_space<vmem>>, vector<32x512xf32>
      %cst = arith.constant dense<0.000000e+00> : vector<64x512xf32>
      %13 = tpu.matmul %11, %12, %cst {dimension_numbers = #tpu.dot_dimension_numbers<[1], [0], [0], [1], [0, 0, 1, 1], [], []>} : vector<64x32xf32>, vector<32x512xf32>, vector<64x512xf32> -> vector<64x512xf32>
      %c0_8 = arith.constant 0 : index
      %c0_9 = arith.constant 0 : index
      %14 = vector.load %arg5[%c0_8, %c0_9] : memref<1x512xf32, #tpu.memory_space<vmem>>, vector<1x512xf32>
      %15 = vector.broadcast %14 : vector<1x512xf32> to vector<64x512xf32>
      %16 = arith.addf %13, %15 : vector<64x512xf32>
      %c0_10 = arith.constant 0 : index
      %c0_11 = arith.constant 0 : index
      %17 = vector.load %arg10[%c0_10, %c0_11] : memref<64x512xf32, #tpu.memory_space<vmem>>, vector<64x512xf32>
      tpu.vector_store %arg10[%c0_10, %c0_11], %16 {strides = array<i32>} : memref<64x512xf32, #tpu.memory_space<vmem>>, vector<64x512xf32>,
      %c0_i32_12 = arith.constant 0 : i32
      %18 = arith.addi %1, %c0_i32_12 : i32
      %19 = arith.cmpi slt, %18, %0 : i32
      %20 = arith.extui %19 : i1 to i32
      %c0_i32_13 = arith.constant 0 : i32
      %21 = arith.cmpi ne, %20, %c0_i32_13 : i32
      scf.if %21 {
        %c0_21 = arith.constant 0 : index
        %c0_22 = arith.constant 0 : index
        %50 = vector.load %arg10[%c0_21, %c0_22] : memref<64x512xf32, #tpu.memory_space<vmem>>, vector<8x512xf32>
        %c0_23 = arith.constant 0 : index
        %c0_24 = arith.constant 0 : index
        %51 = vector.load %arg11[%c0_23, %c0_24] : memref<8x128xf32, #tpu.memory_space<vmem>>, vector<8x128xf32>
        %c0_25 = arith.constant 0 : index
        %c0_26 = arith.constant 0 : index
        %52 = vector.load %arg4[%c0_25, %c0_26] : memref<128x512xf32, #tpu.memory_space<vmem>>, vector<128x512xf32>
        %cst_27 = arith.constant dense<0.000000e+00> : vector<8x512xf32>
        %53 = tpu.matmul %51, %52, %cst_27 {dimension_numbers = #tpu.dot_dimension_numbers<[1], [0], [0], [1], [0, 0, 1, 1], [], []>} : vector<8x128xf32>, vector<128x512xf32>, vector<8x512xf32> -> vector<8x512xf32>
        %54 = arith.addf %50, %53 : vector<8x512xf32>
        %55 = vector.extract_strided_slice %54 {offsets = [0, 0], sizes = [8, 128], strides = [1, 1]} : vector<8x512xf32> to vector<8x128xf32>
        %56 = arith.negf %55 : vector<8x128xf32>
        %57 = math.exp %56 : vector<8x128xf32>
        %cst_28 = arith.constant 1.000000e+00 : f32
        %58 = vector.broadcast %cst_28 : f32 to vector<8x128xf32>
        %59 = arith.addf %58, %57 : vector<8x128xf32>
        %60 = arith.divf %58, %59 : vector<8x128xf32>
        %61 = vector.extract_strided_slice %54 {offsets = [0, 128], sizes = [8, 128], strides = [1, 1]} : vector<8x512xf32> to vector<8x128xf32>
        %62 = arith.negf %61 : vector<8x128xf32>
        %63 = math.exp %62 : vector<8x128xf32>
        %cst_29 = arith.constant 1.000000e+00 : f32
        %64 = vector.broadcast %cst_29 : f32 to vector<8x128xf32>
        %65 = arith.addf %64, %63 : vector<8x128xf32>
        %66 = arith.divf %64, %65 : vector<8x128xf32>
        %67 = vector.extract_strided_slice %54 {offsets = [0, 256], sizes = [8, 128], strides = [1, 1]} : vector<8x512xf32> to vector<8x128xf32>
        %68 = math.tanh %67 : vector<8x128xf32>
        %69 = vector.extract_strided_slice %54 {offsets = [0, 384], sizes = [8, 128], strides = [1, 1]} : vector<8x512xf32> to vector<8x128xf32>
        %70 = arith.negf %69 : vector<8x128xf32>
        %71 = math.exp %70 : vector<8x128xf32>
        %cst_30 = arith.constant 1.000000e+00 : f32
        %72 = vector.broadcast %cst_30 : f32 to vector<8x128xf32>
        %73 = arith.addf %72, %71 : vector<8x128xf32>
        %74 = arith.divf %72, %73 : vector<8x128xf32>
        %c0_31 = arith.constant 0 : index
        %c0_32 = arith.constant 0 : index
        %75 = vector.load %arg12[%c0_31, %c0_32] : memref<8x128xf32, #tpu.memory_space<vmem>>, vector<8x128xf32>
        %76 = arith.mulf %66, %75 : vector<8x128xf32>
        %77 = arith.mulf %60, %68 : vector<8x128xf32>
        %78 = arith.addf %76, %77 : vector<8x128xf32>
        %c0_33 = arith.constant 0 : index
        %c0_34 = arith.constant 0 : index
        %79 = vector.load %arg12[%c0_33, %c0_34] : memref<8x128xf32, #tpu.memory_space<vmem>>, vector<8x128xf32>
        tpu.vector_store %arg12[%c0_33, %c0_34], %78 {strides = array<i32>} : memref<8x128xf32, #tpu.memory_space<vmem>>, vector<8x128xf32>,
        %80 = math.tanh %78 : vector<8x128xf32>
        %81 = arith.mulf %74, %80 : vector<8x128xf32>
        %c0_35 = arith.constant 0 : index
        %c0_36 = arith.constant 0 : index
        %82 = vector.load %arg11[%c0_35, %c0_36] : memref<8x128xf32, #tpu.memory_space<vmem>>, vector<8x128xf32>
        tpu.vector_store %arg11[%c0_35, %c0_36], %81 {strides = array<i32>} : memref<8x128xf32, #tpu.memory_space<vmem>>, vector<8x128xf32>,
      } else {
      }
      %c1_i32 = arith.constant 1 : i32
      %22 = arith.addi %1, %c1_i32 : i32
      %23 = arith.cmpi slt, %22, %0 : i32
      %24 = arith.extui %23 : i1 to i32
      %c0_i32_14 = arith.constant 0 : i32
      %25 = arith.cmpi ne, %24, %c0_i32_14 : i32
      scf.if %25 {
        %c8 = arith.constant 8 : index
        %c0_21 = arith.constant 0 : index
        %50 = vector.load %arg10[%c8, %c0_21] : memref<64x512xf32, #tpu.memory_space<vmem>>, vector<8x512xf32>
        %c0_22 = arith.constant 0 : index
        %c0_23 = arith.constant 0 : index
        %51 = vector.load %arg11[%c0_22, %c0_23] : memref<8x128xf32, #tpu.memory_space<vmem>>, vector<8x128xf32>
        %c0_24 = arith.constant 0 : index
        %c0_25 = arith.constant 0 : index
        %52 = vector.load %arg4[%c0_24, %c0_25] : memref<128x512xf32, #tpu.memory_space<vmem>>, vector<128x512xf32>
        %cst_26 = arith.constant dense<0.000000e+00> : vector<8x512xf32>
        %53 = tpu.matmul %51, %52, %cst_26 {dimension_numbers = #tpu.dot_dimension_numbers<[1], [0], [0], [1], [0, 0, 1, 1], [], []>} : vector<8x128xf32>, vector<128x512xf32>, vector<8x512xf32> -> vector<8x512xf32>
        %54 = arith.addf %50, %53 : vector<8x512xf32>
        %55 = vector.extract_strided_slice %54 {offsets = [0, 0], sizes = [8, 128], strides = [1, 1]} : vector<8x512xf32> to vector<8x128xf32>
        %56 = arith.negf %55 : vector<8x128xf32>
        %57 = math.exp %56 : vector<8x128xf32>
        %cst_27 = arith.constant 1.000000e+00 : f32
        %58 = vector.broadcast %cst_27 : f32 to vector<8x128xf32>
        %59 = arith.addf %58, %57 : vector<8x128xf32>
        %60 = arith.divf %58, %59 : vector<8x128xf32>
        %61 = vector.extract_strided_slice %54 {offsets = [0, 128], sizes = [8, 128], strides = [1, 1]} : vector<8x512xf32> to vector<8x128xf32>
        %62 = arith.negf %61 : vector<8x128xf32>
        %63 = math.exp %62 : vector<8x128xf32>
        %cst_28 = arith.constant 1.000000e+00 : f32
        %64 = vector.broadcast %cst_28 : f32 to vector<8x128xf32>
        %65 = arith.addf %64, %63 : vector<8x128xf32>
        %66 = arith.divf %64, %65 : vector<8x128xf32>
        %67 = vector.extract_strided_slice %54 {offsets = [0, 256], sizes = [8, 128], strides = [1, 1]} : vector<8x512xf32> to vector<8x128xf32>
        %68 = math.tanh %67 : vector<8x128xf32>
        %69 = vector.extract_strided_slice %54 {offsets = [0, 384], sizes = [8, 128], strides = [1, 1]} : vector<8x512xf32> to vector<8x128xf32>
        %70 = arith.negf %69 : vector<8x128xf32>
        %71 = math.exp %70 : vector<8x128xf32>
        %cst_29 = arith.constant 1.000000e+00 : f32
        %72 = vector.broadcast %cst_29 : f32 to vector<8x128xf32>
        %73 = arith.addf %72, %71 : vector<8x128xf32>
        %74 = arith.divf %72, %73 : vector<8x128xf32>
        %c0_30 = arith.constant 0 : index
        %c0_31 = arith.constant 0 : index
        %75 = vector.load %arg12[%c0_30, %c0_31] : memref<8x128xf32, #tpu.memory_space<vmem>>, vector<8x128xf32>
        %76 = arith.mulf %66, %75 : vector<8x128xf32>
        %77 = arith.mulf %60, %68 : vector<8x128xf32>
        %78 = arith.addf %76, %77 : vector<8x128xf32>
        %c0_32 = arith.constant 0 : index
        %c0_33 = arith.constant 0 : index
        %79 = vector.load %arg12[%c0_32, %c0_33] : memref<8x128xf32, #tpu.memory_space<vmem>>, vector<8x128xf32>
        tpu.vector_store %arg12[%c0_32, %c0_33], %78 {strides = array<i32>} : memref<8x128xf32, #tpu.memory_space<vmem>>, vector<8x128xf32>,
        %80 = math.tanh %78 : vector<8x128xf32>
        %81 = arith.mulf %74, %80 : vector<8x128xf32>
        %c0_34 = arith.constant 0 : index
        %c0_35 = arith.constant 0 : index
        %82 = vector.load %arg11[%c0_34, %c0_35] : memref<8x128xf32, #tpu.memory_space<vmem>>, vector<8x128xf32>
        tpu.vector_store %arg11[%c0_34, %c0_35], %81 {strides = array<i32>} : memref<8x128xf32, #tpu.memory_space<vmem>>, vector<8x128xf32>,
      } else {
      }
      %c2_i32 = arith.constant 2 : i32
      %26 = arith.addi %1, %c2_i32 : i32
      %27 = arith.cmpi slt, %26, %0 : i32
      %28 = arith.extui %27 : i1 to i32
      %c0_i32_15 = arith.constant 0 : i32
      %29 = arith.cmpi ne, %28, %c0_i32_15 : i32
      scf.if %29 {
        %c16 = arith.constant 16 : index
        %c0_21 = arith.constant 0 : index
        %50 = vector.load %arg10[%c16, %c0_21] : memref<64x512xf32, #tpu.memory_space<vmem>>, vector<8x512xf32>
        %c0_22 = arith.constant 0 : index
        %c0_23 = arith.constant 0 : index
        %51 = vector.load %arg11[%c0_22, %c0_23] : memref<8x128xf32, #tpu.memory_space<vmem>>, vector<8x128xf32>
        %c0_24 = arith.constant 0 : index
        %c0_25 = arith.constant 0 : index
        %52 = vector.load %arg4[%c0_24, %c0_25] : memref<128x512xf32, #tpu.memory_space<vmem>>, vector<128x512xf32>
        %cst_26 = arith.constant dense<0.000000e+00> : vector<8x512xf32>
        %53 = tpu.matmul %51, %52, %cst_26 {dimension_numbers = #tpu.dot_dimension_numbers<[1], [0], [0], [1], [0, 0, 1, 1], [], []>} : vector<8x128xf32>, vector<128x512xf32>, vector<8x512xf32> -> vector<8x512xf32>
        %54 = arith.addf %50, %53 : vector<8x512xf32>
        %55 = vector.extract_strided_slice %54 {offsets = [0, 0], sizes = [8, 128], strides = [1, 1]} : vector<8x512xf32> to vector<8x128xf32>
        %56 = arith.negf %55 : vector<8x128xf32>
        %57 = math.exp %56 : vector<8x128xf32>
        %cst_27 = arith.constant 1.000000e+00 : f32
        %58 = vector.broadcast %cst_27 : f32 to vector<8x128xf32>
        %59 = arith.addf %58, %57 : vector<8x128xf32>
        %60 = arith.divf %58, %59 : vector<8x128xf32>
        %61 = vector.extract_strided_slice %54 {offsets = [0, 128], sizes = [8, 128], strides = [1, 1]} : vector<8x512xf32> to vector<8x128xf32>
        %62 = arith.negf %61 : vector<8x128xf32>
        %63 = math.exp %62 : vector<8x128xf32>
        %cst_28 = arith.constant 1.000000e+00 : f32
        %64 = vector.broadcast %cst_28 : f32 to vector<8x128xf32>
        %65 = arith.addf %64, %63 : vector<8x128xf32>
        %66 = arith.divf %64, %65 : vector<8x128xf32>
        %67 = vector.extract_strided_slice %54 {offsets = [0, 256], sizes = [8, 128], strides = [1, 1]} : vector<8x512xf32> to vector<8x128xf32>
        %68 = math.tanh %67 : vector<8x128xf32>
        %69 = vector.extract_strided_slice %54 {offsets = [0, 384], sizes = [8, 128], strides = [1, 1]} : vector<8x512xf32> to vector<8x128xf32>
        %70 = arith.negf %69 : vector<8x128xf32>
        %71 = math.exp %70 : vector<8x128xf32>
        %cst_29 = arith.constant 1.000000e+00 : f32
        %72 = vector.broadcast %cst_29 : f32 to vector<8x128xf32>
        %73 = arith.addf %72, %71 : vector<8x128xf32>
        %74 = arith.divf %72, %73 : vector<8x128xf32>
        %c0_30 = arith.constant 0 : index
        %c0_31 = arith.constant 0 : index
        %75 = vector.load %arg12[%c0_30, %c0_31] : memref<8x128xf32, #tpu.memory_space<vmem>>, vector<8x128xf32>
        %76 = arith.mulf %66, %75 : vector<8x128xf32>
        %77 = arith.mulf %60, %68 : vector<8x128xf32>
        %78 = arith.addf %76, %77 : vector<8x128xf32>
        %c0_32 = arith.constant 0 : index
        %c0_33 = arith.constant 0 : index
        %79 = vector.load %arg12[%c0_32, %c0_33] : memref<8x128xf32, #tpu.memory_space<vmem>>, vector<8x128xf32>
        tpu.vector_store %arg12[%c0_32, %c0_33], %78 {strides = array<i32>} : memref<8x128xf32, #tpu.memory_space<vmem>>, vector<8x128xf32>,
        %80 = math.tanh %78 : vector<8x128xf32>
        %81 = arith.mulf %74, %80 : vector<8x128xf32>
        %c0_34 = arith.constant 0 : index
        %c0_35 = arith.constant 0 : index
        %82 = vector.load %arg11[%c0_34, %c0_35] : memref<8x128xf32, #tpu.memory_space<vmem>>, vector<8x128xf32>
        tpu.vector_store %arg11[%c0_34, %c0_35], %81 {strides = array<i32>} : memref<8x128xf32, #tpu.memory_space<vmem>>, vector<8x128xf32>,
      } else {
      }
      %c3_i32 = arith.constant 3 : i32
      %30 = arith.addi %1, %c3_i32 : i32
      %31 = arith.cmpi slt, %30, %0 : i32
      %32 = arith.extui %31 : i1 to i32
      %c0_i32_16 = arith.constant 0 : i32
      %33 = arith.cmpi ne, %32, %c0_i32_16 : i32
      scf.if %33 {
        %c24 = arith.constant 24 : index
        %c0_21 = arith.constant 0 : index
        %50 = vector.load %arg10[%c24, %c0_21] : memref<64x512xf32, #tpu.memory_space<vmem>>, vector<8x512xf32>
        %c0_22 = arith.constant 0 : index
        %c0_23 = arith.constant 0 : index
        %51 = vector.load %arg11[%c0_22, %c0_23] : memref<8x128xf32, #tpu.memory_space<vmem>>, vector<8x128xf32>
        %c0_24 = arith.constant 0 : index
        %c0_25 = arith.constant 0 : index
        %52 = vector.load %arg4[%c0_24, %c0_25] : memref<128x512xf32, #tpu.memory_space<vmem>>, vector<128x512xf32>
        %cst_26 = arith.constant dense<0.000000e+00> : vector<8x512xf32>
        %53 = tpu.matmul %51, %52, %cst_26 {dimension_numbers = #tpu.dot_dimension_numbers<[1], [0], [0], [1], [0, 0, 1, 1], [], []>} : vector<8x128xf32>, vector<128x512xf32>, vector<8x512xf32> -> vector<8x512xf32>
        %54 = arith.addf %50, %53 : vector<8x512xf32>
        %55 = vector.extract_strided_slice %54 {offsets = [0, 0], sizes = [8, 128], strides = [1, 1]} : vector<8x512xf32> to vector<8x128xf32>
        %56 = arith.negf %55 : vector<8x128xf32>
        %57 = math.exp %56 : vector<8x128xf32>
        %cst_27 = arith.constant 1.000000e+00 : f32
        %58 = vector.broadcast %cst_27 : f32 to vector<8x128xf32>
        %59 = arith.addf %58, %57 : vector<8x128xf32>
        %60 = arith.divf %58, %59 : vector<8x128xf32>
        %61 = vector.extract_strided_slice %54 {offsets = [0, 128], sizes = [8, 128], strides = [1, 1]} : vector<8x512xf32> to vector<8x128xf32>
        %62 = arith.negf %61 : vector<8x128xf32>
        %63 = math.exp %62 : vector<8x128xf32>
        %cst_28 = arith.constant 1.000000e+00 : f32
        %64 = vector.broadcast %cst_28 : f32 to vector<8x128xf32>
        %65 = arith.addf %64, %63 : vector<8x128xf32>
        %66 = arith.divf %64, %65 : vector<8x128xf32>
        %67 = vector.extract_strided_slice %54 {offsets = [0, 256], sizes = [8, 128], strides = [1, 1]} : vector<8x512xf32> to vector<8x128xf32>
        %68 = math.tanh %67 : vector<8x128xf32>
        %69 = vector.extract_strided_slice %54 {offsets = [0, 384], sizes = [8, 128], strides = [1, 1]} : vector<8x512xf32> to vector<8x128xf32>
        %70 = arith.negf %69 : vector<8x128xf32>
        %71 = math.exp %70 : vector<8x128xf32>
        %cst_29 = arith.constant 1.000000e+00 : f32
        %72 = vector.broadcast %cst_29 : f32 to vector<8x128xf32>
        %73 = arith.addf %72, %71 : vector<8x128xf32>
        %74 = arith.divf %72, %73 : vector<8x128xf32>
        %c0_30 = arith.constant 0 : index
        %c0_31 = arith.constant 0 : index
        %75 = vector.load %arg12[%c0_30, %c0_31] : memref<8x128xf32, #tpu.memory_space<vmem>>, vector<8x128xf32>
        %76 = arith.mulf %66, %75 : vector<8x128xf32>
        %77 = arith.mulf %60, %68 : vector<8x128xf32>
        %78 = arith.addf %76, %77 : vector<8x128xf32>
        %c0_32 = arith.constant 0 : index
        %c0_33 = arith.constant 0 : index
        %79 = vector.load %arg12[%c0_32, %c0_33] : memref<8x128xf32, #tpu.memory_space<vmem>>, vector<8x128xf32>
        tpu.vector_store %arg12[%c0_32, %c0_33], %78 {strides = array<i32>} : memref<8x128xf32, #tpu.memory_space<vmem>>, vector<8x128xf32>,
        %80 = math.tanh %78 : vector<8x128xf32>
        %81 = arith.mulf %74, %80 : vector<8x128xf32>
        %c0_34 = arith.constant 0 : index
        %c0_35 = arith.constant 0 : index
        %82 = vector.load %arg11[%c0_34, %c0_35] : memref<8x128xf32, #tpu.memory_space<vmem>>, vector<8x128xf32>
        tpu.vector_store %arg11[%c0_34, %c0_35], %81 {strides = array<i32>} : memref<8x128xf32, #tpu.memory_space<vmem>>, vector<8x128xf32>,
      } else {
      }
      %c4_i32 = arith.constant 4 : i32
      %34 = arith.addi %1, %c4_i32 : i32
      %35 = arith.cmpi slt, %34, %0 : i32
      %36 = arith.extui %35 : i1 to i32
      %c0_i32_17 = arith.constant 0 : i32
      %37 = arith.cmpi ne, %36, %c0_i32_17 : i32
      scf.if %37 {
        %c32 = arith.constant 32 : index
        %c0_21 = arith.constant 0 : index
        %50 = vector.load %arg10[%c32, %c0_21] : memref<64x512xf32, #tpu.memory_space<vmem>>, vector<8x512xf32>
        %c0_22 = arith.constant 0 : index
        %c0_23 = arith.constant 0 : index
        %51 = vector.load %arg11[%c0_22, %c0_23] : memref<8x128xf32, #tpu.memory_space<vmem>>, vector<8x128xf32>
        %c0_24 = arith.constant 0 : index
        %c0_25 = arith.constant 0 : index
        %52 = vector.load %arg4[%c0_24, %c0_25] : memref<128x512xf32, #tpu.memory_space<vmem>>, vector<128x512xf32>
        %cst_26 = arith.constant dense<0.000000e+00> : vector<8x512xf32>
        %53 = tpu.matmul %51, %52, %cst_26 {dimension_numbers = #tpu.dot_dimension_numbers<[1], [0], [0], [1], [0, 0, 1, 1], [], []>} : vector<8x128xf32>, vector<128x512xf32>, vector<8x512xf32> -> vector<8x512xf32>
        %54 = arith.addf %50, %53 : vector<8x512xf32>
        %55 = vector.extract_strided_slice %54 {offsets = [0, 0], sizes = [8, 128], strides = [1, 1]} : vector<8x512xf32> to vector<8x128xf32>
        %56 = arith.negf %55 : vector<8x128xf32>
        %57 = math.exp %56 : vector<8x128xf32>
        %cst_27 = arith.constant 1.000000e+00 : f32
        %58 = vector.broadcast %cst_27 : f32 to vector<8x128xf32>
        %59 = arith.addf %58, %57 : vector<8x128xf32>
        %60 = arith.divf %58, %59 : vector<8x128xf32>
        %61 = vector.extract_strided_slice %54 {offsets = [0, 128], sizes = [8, 128], strides = [1, 1]} : vector<8x512xf32> to vector<8x128xf32>
        %62 = arith.negf %61 : vector<8x128xf32>
        %63 = math.exp %62 : vector<8x128xf32>
        %cst_28 = arith.constant 1.000000e+00 : f32
        %64 = vector.broadcast %cst_28 : f32 to vector<8x128xf32>
        %65 = arith.addf %64, %63 : vector<8x128xf32>
        %66 = arith.divf %64, %65 : vector<8x128xf32>
        %67 = vector.extract_strided_slice %54 {offsets = [0, 256], sizes = [8, 128], strides = [1, 1]} : vector<8x512xf32> to vector<8x128xf32>
        %68 = math.tanh %67 : vector<8x128xf32>
        %69 = vector.extract_strided_slice %54 {offsets = [0, 384], sizes = [8, 128], strides = [1, 1]} : vector<8x512xf32> to vector<8x128xf32>
        %70 = arith.negf %69 : vector<8x128xf32>
        %71 = math.exp %70 : vector<8x128xf32>
        %cst_29 = arith.constant 1.000000e+00 : f32
        %72 = vector.broadcast %cst_29 : f32 to vector<8x128xf32>
        %73 = arith.addf %72, %71 : vector<8x128xf32>
        %74 = arith.divf %72, %73 : vector<8x128xf32>
        %c0_30 = arith.constant 0 : index
        %c0_31 = arith.constant 0 : index
        %75 = vector.load %arg12[%c0_30, %c0_31] : memref<8x128xf32, #tpu.memory_space<vmem>>, vector<8x128xf32>
        %76 = arith.mulf %66, %75 : vector<8x128xf32>
        %77 = arith.mulf %60, %68 : vector<8x128xf32>
        %78 = arith.addf %76, %77 : vector<8x128xf32>
        %c0_32 = arith.constant 0 : index
        %c0_33 = arith.constant 0 : index
        %79 = vector.load %arg12[%c0_32, %c0_33] : memref<8x128xf32, #tpu.memory_space<vmem>>, vector<8x128xf32>
        tpu.vector_store %arg12[%c0_32, %c0_33], %78 {strides = array<i32>} : memref<8x128xf32, #tpu.memory_space<vmem>>, vector<8x128xf32>,
        %80 = math.tanh %78 : vector<8x128xf32>
        %81 = arith.mulf %74, %80 : vector<8x128xf32>
        %c0_34 = arith.constant 0 : index
        %c0_35 = arith.constant 0 : index
        %82 = vector.load %arg11[%c0_34, %c0_35] : memref<8x128xf32, #tpu.memory_space<vmem>>, vector<8x128xf32>
        tpu.vector_store %arg11[%c0_34, %c0_35], %81 {strides = array<i32>} : memref<8x128xf32, #tpu.memory_space<vmem>>, vector<8x128xf32>,
      } else {
      }
      %c5_i32 = arith.constant 5 : i32
      %38 = arith.addi %1, %c5_i32 : i32
      %39 = arith.cmpi slt, %38, %0 : i32
      %40 = arith.extui %39 : i1 to i32
      %c0_i32_18 = arith.constant 0 : i32
      %41 = arith.cmpi ne, %40, %c0_i32_18 : i32
      scf.if %41 {
        %c40 = arith.constant 40 : index
        %c0_21 = arith.constant 0 : index
        %50 = vector.load %arg10[%c40, %c0_21] : memref<64x512xf32, #tpu.memory_space<vmem>>, vector<8x512xf32>
        %c0_22 = arith.constant 0 : index
        %c0_23 = arith.constant 0 : index
        %51 = vector.load %arg11[%c0_22, %c0_23] : memref<8x128xf32, #tpu.memory_space<vmem>>, vector<8x128xf32>
        %c0_24 = arith.constant 0 : index
        %c0_25 = arith.constant 0 : index
        %52 = vector.load %arg4[%c0_24, %c0_25] : memref<128x512xf32, #tpu.memory_space<vmem>>, vector<128x512xf32>
        %cst_26 = arith.constant dense<0.000000e+00> : vector<8x512xf32>
        %53 = tpu.matmul %51, %52, %cst_26 {dimension_numbers = #tpu.dot_dimension_numbers<[1], [0], [0], [1], [0, 0, 1, 1], [], []>} : vector<8x128xf32>, vector<128x512xf32>, vector<8x512xf32> -> vector<8x512xf32>
        %54 = arith.addf %50, %53 : vector<8x512xf32>
        %55 = vector.extract_strided_slice %54 {offsets = [0, 0], sizes = [8, 128], strides = [1, 1]} : vector<8x512xf32> to vector<8x128xf32>
        %56 = arith.negf %55 : vector<8x128xf32>
        %57 = math.exp %56 : vector<8x128xf32>
        %cst_27 = arith.constant 1.000000e+00 : f32
        %58 = vector.broadcast %cst_27 : f32 to vector<8x128xf32>
        %59 = arith.addf %58, %57 : vector<8x128xf32>
        %60 = arith.divf %58, %59 : vector<8x128xf32>
        %61 = vector.extract_strided_slice %54 {offsets = [0, 128], sizes = [8, 128], strides = [1, 1]} : vector<8x512xf32> to vector<8x128xf32>
        %62 = arith.negf %61 : vector<8x128xf32>
        %63 = math.exp %62 : vector<8x128xf32>
        %cst_28 = arith.constant 1.000000e+00 : f32
        %64 = vector.broadcast %cst_28 : f32 to vector<8x128xf32>
        %65 = arith.addf %64, %63 : vector<8x128xf32>
        %66 = arith.divf %64, %65 : vector<8x128xf32>
        %67 = vector.extract_strided_slice %54 {offsets = [0, 256], sizes = [8, 128], strides = [1, 1]} : vector<8x512xf32> to vector<8x128xf32>
        %68 = math.tanh %67 : vector<8x128xf32>
        %69 = vector.extract_strided_slice %54 {offsets = [0, 384], sizes = [8, 128], strides = [1, 1]} : vector<8x512xf32> to vector<8x128xf32>
        %70 = arith.negf %69 : vector<8x128xf32>
        %71 = math.exp %70 : vector<8x128xf32>
        %cst_29 = arith.constant 1.000000e+00 : f32
        %72 = vector.broadcast %cst_29 : f32 to vector<8x128xf32>
        %73 = arith.addf %72, %71 : vector<8x128xf32>
        %74 = arith.divf %72, %73 : vector<8x128xf32>
        %c0_30 = arith.constant 0 : index
        %c0_31 = arith.constant 0 : index
        %75 = vector.load %arg12[%c0_30, %c0_31] : memref<8x128xf32, #tpu.memory_space<vmem>>, vector<8x128xf32>
        %76 = arith.mulf %66, %75 : vector<8x128xf32>
        %77 = arith.mulf %60, %68 : vector<8x128xf32>
        %78 = arith.addf %76, %77 : vector<8x128xf32>
        %c0_32 = arith.constant 0 : index
        %c0_33 = arith.constant 0 : index
        %79 = vector.load %arg12[%c0_32, %c0_33] : memref<8x128xf32, #tpu.memory_space<vmem>>, vector<8x128xf32>
        tpu.vector_store %arg12[%c0_32, %c0_33], %78 {strides = array<i32>} : memref<8x128xf32, #tpu.memory_space<vmem>>, vector<8x128xf32>,
        %80 = math.tanh %78 : vector<8x128xf32>
        %81 = arith.mulf %74, %80 : vector<8x128xf32>
        %c0_34 = arith.constant 0 : index
        %c0_35 = arith.constant 0 : index
        %82 = vector.load %arg11[%c0_34, %c0_35] : memref<8x128xf32, #tpu.memory_space<vmem>>, vector<8x128xf32>
        tpu.vector_store %arg11[%c0_34, %c0_35], %81 {strides = array<i32>} : memref<8x128xf32, #tpu.memory_space<vmem>>, vector<8x128xf32>,
      } else {
      }
      %c6_i32 = arith.constant 6 : i32
      %42 = arith.addi %1, %c6_i32 : i32
      %43 = arith.cmpi slt, %42, %0 : i32
      %44 = arith.extui %43 : i1 to i32
      %c0_i32_19 = arith.constant 0 : i32
      %45 = arith.cmpi ne, %44, %c0_i32_19 : i32
      scf.if %45 {
        %c48 = arith.constant 48 : index
        %c0_21 = arith.constant 0 : index
        %50 = vector.load %arg10[%c48, %c0_21] : memref<64x512xf32, #tpu.memory_space<vmem>>, vector<8x512xf32>
        %c0_22 = arith.constant 0 : index
        %c0_23 = arith.constant 0 : index
        %51 = vector.load %arg11[%c0_22, %c0_23] : memref<8x128xf32, #tpu.memory_space<vmem>>, vector<8x128xf32>
        %c0_24 = arith.constant 0 : index
        %c0_25 = arith.constant 0 : index
        %52 = vector.load %arg4[%c0_24, %c0_25] : memref<128x512xf32, #tpu.memory_space<vmem>>, vector<128x512xf32>
        %cst_26 = arith.constant dense<0.000000e+00> : vector<8x512xf32>
        %53 = tpu.matmul %51, %52, %cst_26 {dimension_numbers = #tpu.dot_dimension_numbers<[1], [0], [0], [1], [0, 0, 1, 1], [], []>} : vector<8x128xf32>, vector<128x512xf32>, vector<8x512xf32> -> vector<8x512xf32>
        %54 = arith.addf %50, %53 : vector<8x512xf32>
        %55 = vector.extract_strided_slice %54 {offsets = [0, 0], sizes = [8, 128], strides = [1, 1]} : vector<8x512xf32> to vector<8x128xf32>
        %56 = arith.negf %55 : vector<8x128xf32>
        %57 = math.exp %56 : vector<8x128xf32>
        %cst_27 = arith.constant 1.000000e+00 : f32
        %58 = vector.broadcast %cst_27 : f32 to vector<8x128xf32>
        %59 = arith.addf %58, %57 : vector<8x128xf32>
        %60 = arith.divf %58, %59 : vector<8x128xf32>
        %61 = vector.extract_strided_slice %54 {offsets = [0, 128], sizes = [8, 128], strides = [1, 1]} : vector<8x512xf32> to vector<8x128xf32>
        %62 = arith.negf %61 : vector<8x128xf32>
        %63 = math.exp %62 : vector<8x128xf32>
        %cst_28 = arith.constant 1.000000e+00 : f32
        %64 = vector.broadcast %cst_28 : f32 to vector<8x128xf32>
        %65 = arith.addf %64, %63 : vector<8x128xf32>
        %66 = arith.divf %64, %65 : vector<8x128xf32>
        %67 = vector.extract_strided_slice %54 {offsets = [0, 256], sizes = [8, 128], strides = [1, 1]} : vector<8x512xf32> to vector<8x128xf32>
        %68 = math.tanh %67 : vector<8x128xf32>
        %69 = vector.extract_strided_slice %54 {offsets = [0, 384], sizes = [8, 128], strides = [1, 1]} : vector<8x512xf32> to vector<8x128xf32>
        %70 = arith.negf %69 : vector<8x128xf32>
        %71 = math.exp %70 : vector<8x128xf32>
        %cst_29 = arith.constant 1.000000e+00 : f32
        %72 = vector.broadcast %cst_29 : f32 to vector<8x128xf32>
        %73 = arith.addf %72, %71 : vector<8x128xf32>
        %74 = arith.divf %72, %73 : vector<8x128xf32>
        %c0_30 = arith.constant 0 : index
        %c0_31 = arith.constant 0 : index
        %75 = vector.load %arg12[%c0_30, %c0_31] : memref<8x128xf32, #tpu.memory_space<vmem>>, vector<8x128xf32>
        %76 = arith.mulf %66, %75 : vector<8x128xf32>
        %77 = arith.mulf %60, %68 : vector<8x128xf32>
        %78 = arith.addf %76, %77 : vector<8x128xf32>
        %c0_32 = arith.constant 0 : index
        %c0_33 = arith.constant 0 : index
        %79 = vector.load %arg12[%c0_32, %c0_33] : memref<8x128xf32, #tpu.memory_space<vmem>>, vector<8x128xf32>
        tpu.vector_store %arg12[%c0_32, %c0_33], %78 {strides = array<i32>} : memref<8x128xf32, #tpu.memory_space<vmem>>, vector<8x128xf32>,
        %80 = math.tanh %78 : vector<8x128xf32>
        %81 = arith.mulf %74, %80 : vector<8x128xf32>
        %c0_34 = arith.constant 0 : index
        %c0_35 = arith.constant 0 : index
        %82 = vector.load %arg11[%c0_34, %c0_35] : memref<8x128xf32, #tpu.memory_space<vmem>>, vector<8x128xf32>
        tpu.vector_store %arg11[%c0_34, %c0_35], %81 {strides = array<i32>} : memref<8x128xf32, #tpu.memory_space<vmem>>, vector<8x128xf32>,
      } else {
      }
      %c7_i32 = arith.constant 7 : i32
      %46 = arith.addi %1, %c7_i32 : i32
      %47 = arith.cmpi slt, %46, %0 : i32
      %48 = arith.extui %47 : i1 to i32
      %c0_i32_20 = arith.constant 0 : i32
      %49 = arith.cmpi ne, %48, %c0_i32_20 : i32
      scf.if %49 {
        %c56 = arith.constant 56 : index
        %c0_21 = arith.constant 0 : index
        %50 = vector.load %arg10[%c56, %c0_21] : memref<64x512xf32, #tpu.memory_space<vmem>>, vector<8x512xf32>
        %c0_22 = arith.constant 0 : index
        %c0_23 = arith.constant 0 : index
        %51 = vector.load %arg11[%c0_22, %c0_23] : memref<8x128xf32, #tpu.memory_space<vmem>>, vector<8x128xf32>
        %c0_24 = arith.constant 0 : index
        %c0_25 = arith.constant 0 : index
        %52 = vector.load %arg4[%c0_24, %c0_25] : memref<128x512xf32, #tpu.memory_space<vmem>>, vector<128x512xf32>
        %cst_26 = arith.constant dense<0.000000e+00> : vector<8x512xf32>
        %53 = tpu.matmul %51, %52, %cst_26 {dimension_numbers = #tpu.dot_dimension_numbers<[1], [0], [0], [1], [0, 0, 1, 1], [], []>} : vector<8x128xf32>, vector<128x512xf32>, vector<8x512xf32> -> vector<8x512xf32>
        %54 = arith.addf %50, %53 : vector<8x512xf32>
        %55 = vector.extract_strided_slice %54 {offsets = [0, 0], sizes = [8, 128], strides = [1, 1]} : vector<8x512xf32> to vector<8x128xf32>
        %56 = arith.negf %55 : vector<8x128xf32>
        %57 = math.exp %56 : vector<8x128xf32>
        %cst_27 = arith.constant 1.000000e+00 : f32
        %58 = vector.broadcast %cst_27 : f32 to vector<8x128xf32>
        %59 = arith.addf %58, %57 : vector<8x128xf32>
        %60 = arith.divf %58, %59 : vector<8x128xf32>
        %61 = vector.extract_strided_slice %54 {offsets = [0, 128], sizes = [8, 128], strides = [1, 1]} : vector<8x512xf32> to vector<8x128xf32>
        %62 = arith.negf %61 : vector<8x128xf32>
        %63 = math.exp %62 : vector<8x128xf32>
        %cst_28 = arith.constant 1.000000e+00 : f32
        %64 = vector.broadcast %cst_28 : f32 to vector<8x128xf32>
        %65 = arith.addf %64, %63 : vector<8x128xf32>
        %66 = arith.divf %64, %65 : vector<8x128xf32>
        %67 = vector.extract_strided_slice %54 {offsets = [0, 256], sizes = [8, 128], strides = [1, 1]} : vector<8x512xf32> to vector<8x128xf32>
        %68 = math.tanh %67 : vector<8x128xf32>
        %69 = vector.extract_strided_slice %54 {offsets = [0, 384], sizes = [8, 128], strides = [1, 1]} : vector<8x512xf32> to vector<8x128xf32>
        %70 = arith.negf %69 : vector<8x128xf32>
        %71 = math.exp %70 : vector<8x128xf32>
        %cst_29 = arith.constant 1.000000e+00 : f32
        %72 = vector.broadcast %cst_29 : f32 to vector<8x128xf32>
        %73 = arith.addf %72, %71 : vector<8x128xf32>
        %74 = arith.divf %72, %73 : vector<8x128xf32>
        %c0_30 = arith.constant 0 : index
        %c0_31 = arith.constant 0 : index
        %75 = vector.load %arg12[%c0_30, %c0_31] : memref<8x128xf32, #tpu.memory_space<vmem>>, vector<8x128xf32>
        %76 = arith.mulf %66, %75 : vector<8x128xf32>
        %77 = arith.mulf %60, %68 : vector<8x128xf32>
        %78 = arith.addf %76, %77 : vector<8x128xf32>
        %c0_32 = arith.constant 0 : index
        %c0_33 = arith.constant 0 : index
        %79 = vector.load %arg12[%c0_32, %c0_33] : memref<8x128xf32, #tpu.memory_space<vmem>>, vector<8x128xf32>
        tpu.vector_store %arg12[%c0_32, %c0_33], %78 {strides = array<i32>} : memref<8x128xf32, #tpu.memory_space<vmem>>, vector<8x128xf32>,
        %80 = math.tanh %78 : vector<8x128xf32>
        %81 = arith.mulf %74, %80 : vector<8x128xf32>
        %c0_34 = arith.constant 0 : index
        %c0_35 = arith.constant 0 : index
        %82 = vector.load %arg11[%c0_34, %c0_35] : memref<8x128xf32, #tpu.memory_space<vmem>>, vector<8x128xf32>
        tpu.vector_store %arg11[%c0_34, %c0_35], %81 {strides = array<i32>} : memref<8x128xf32, #tpu.memory_space<vmem>>, vector<8x128xf32>,
      } else {
      }
    } else {
    }
    %c0_i32_2 = arith.constant 0 : i32
    %8 = arith.cmpi eq, %arg0, %c0_i32_2 : i32
    %9 = arith.extui %8 : i1 to i32
    %c0_i32_3 = arith.constant 0 : i32
    %10 = arith.cmpi ne, %9, %c0_i32_3 : i32
    scf.if %10 {
      %c0_4 = arith.constant 0 : index
      %c0_5 = arith.constant 0 : index
      %11 = vector.load %arg11[%c0_4, %c0_5] : memref<8x128xf32, #tpu.memory_space<vmem>>, vector<8x128xf32>
      %c0_6 = arith.constant 0 : index
      %c0_7 = arith.constant 0 : index
      %12 = vector.load %arg6[%c0_6, %c0_7] : memref<8x1xf32, #tpu.memory_space<vmem>>, vector<8x1xf32>
      %13 = vector.broadcast %12 : vector<8x1xf32> to vector<8x128xf32>
      %14 = arith.mulf %11, %13 : vector<8x128xf32>
      %c0_8 = arith.constant 0 : index
      %c0_9 = arith.constant 0 : index
      %15 = vector.load %arg7[%c0_8, %c0_9] : memref<128x128xf32, #tpu.memory_space<vmem>>, vector<128x128xf32>
      %cst = arith.constant dense<0.000000e+00> : vector<8x128xf32>
      %16 = tpu.matmul %14, %15, %cst {dimension_numbers = #tpu.dot_dimension_numbers<[1], [0], [0], [1], [0, 0, 1, 1], [], []>} : vector<8x128xf32>, vector<128x128xf32>, vector<8x128xf32> -> vector<8x128xf32>
      %c0_10 = arith.constant 0 : index
      %c0_11 = arith.constant 0 : index
      %17 = vector.load %arg8[%c0_10, %c0_11] : memref<1x128xf32, #tpu.memory_space<vmem>>, vector<1x128xf32>
      %18 = vector.broadcast %17 : vector<1x128xf32> to vector<8x128xf32>
      %19 = arith.addf %16, %18 : vector<8x128xf32>
      %c0_12 = arith.constant 0 : index
      %c0_13 = arith.constant 0 : index
      %20 = vector.load %arg9[%c0_12, %c0_13] : memref<8x128xf32, #tpu.memory_space<vmem>>, vector<8x128xf32>
      tpu.vector_store %arg9[%c0_12, %c0_13], %19 {strides = array<i32>} : memref<8x128xf32, #tpu.memory_space<vmem>>, vector<8x128xf32>,
    } else {
    }
    return
  }
  func.func @transform_0(%arg0: i32, %arg1: memref<1xi32, #tpu.memory_space<smem>>) -> (i32, i32) {
    %c0_i32 = arith.constant 0 : i32
    %c0_i32_0 = arith.constant 0 : i32
    return %arg0, %c0_i32 : i32, i32
  }
  func.func @transform_1(%arg0: i32, %arg1: memref<1xi32, #tpu.memory_space<smem>>) -> (i32, i32) {
    %c0_i32 = arith.constant 0 : i32
    %c0_i32_0 = arith.constant 0 : i32
    %c0_i32_1 = arith.constant 0 : i32
    return %c0_i32, %c0_i32_0 : i32, i32
  }
  func.func @transform_2(%arg0: i32, %arg1: memref<1xi32, #tpu.memory_space<smem>>) -> (i32, i32) {
    %c0_i32 = arith.constant 0 : i32
    %c0_i32_0 = arith.constant 0 : i32
    %c0_i32_1 = arith.constant 0 : i32
    return %c0_i32, %c0_i32_0 : i32, i32
  }
  func.func @transform_3(%arg0: i32, %arg1: memref<1xi32, #tpu.memory_space<smem>>) -> (i32, i32) {
    %c0_i32 = arith.constant 0 : i32
    %c0_i32_0 = arith.constant 0 : i32
    %c0_i32_1 = arith.constant 0 : i32
    return %c0_i32, %c0_i32_0 : i32, i32
  }
  func.func @transform_4(%arg0: i32, %arg1: memref<1xi32, #tpu.memory_space<smem>>) -> (i32, i32) {
    %c0_i32 = arith.constant 0 : i32
    %c0_i32_0 = arith.constant 0 : i32
    %c0_i32_1 = arith.constant 0 : i32
    return %c0_i32, %c0_i32_0 : i32, i32
  }
  func.func @transform_5(%arg0: i32, %arg1: memref<1xi32, #tpu.memory_space<smem>>) -> (i32, i32) {
    %c0_i32 = arith.constant 0 : i32
    %c0_i32_0 = arith.constant 0 : i32
    %c0_i32_1 = arith.constant 0 : i32
    return %c0_i32, %c0_i32_0 : i32, i32
  }
  func.func @transform_6(%arg0: i32, %arg1: memref<1xi32, #tpu.memory_space<smem>>) -> (i32, i32) {
    %c0_i32 = arith.constant 0 : i32
    %c0_i32_0 = arith.constant 0 : i32
    %c0_i32_1 = arith.constant 0 : i32
    return %c0_i32, %c0_i32_0 : i32, i32
  }
  func.func @transform_7(%arg0: i32, %arg1: memref<1xi32, #tpu.memory_space<smem>>) -> (i32, i32) {
    %c0_i32 = arith.constant 0 : i32
    %c0_i32_0 = arith.constant 0 : i32
    %c0_i32_1 = arith.constant 0 : i32
    return %c0_i32, %c0_i32_0 : i32, i32
  }
}

</mosaic_0001>

<llo_original>
// kernel: tpu_custom_call.1
$region0: #{tpu_custom_call.1}
  #allocation0 [shape = 'u32[]', space=smem, size = 0x4, offset = 0x4, fixed_abs, tag = 'smem constant byte address 0x4 - core index']
  #allocation1 [shape = 'u32[144,128]{1,0:T(1,128)}', space=vmem, size = 0x12000, scoped, tag = 'internal scratch']
  #allocation2 [shape = 'f32[64,512]{1,0:T(8,128)}', space=vmem, size = 0x20000, scoped, tag = 'scratch operand']
  #allocation3 [shape = 'f32[8,128]{1,0:T(8,128)}', space=vmem, size = 0x1000, scoped, tag = 'scratch operand']
  #allocation4 [shape = 'f32[8,128]{1,0:T(8,128)}', space=vmem, size = 0x1000, scoped, tag = 'scratch operand']
  #allocation5 [shape = 's32[1]{0}', space=sflag, size = 0x4, scoped, tag = 'scoped memory for tpu_custom_call.1']
  #allocation6 [shape = 's32[1]{0:T(128)S(6)}', space=smem, size = 0x200, scoped, tag = 'prefetched SMEM operand 0']
  %s0 = inlined_call_operand.<no memory space> [shape: s32[1], index: 0, kind: input, shape index: {}]
  %s1 = inlined_call_operand.vmem [shape: f32[64,32], index: 1, kind: input, shape index: {}]
  %s2 = inlined_call_operand.hbm [shape: f32[32,512], index: 2, kind: input, shape index: {}]
  %s3 = inlined_call_operand.hbm [shape: f32[128,512], index: 3, kind: input, shape index: {}]
  %s4 = inlined_call_operand.vmem [shape: f32[1,512], index: 4, kind: input, shape index: {}]
  %s5 = inlined_call_operand.vmem [shape: f32[8,1], index: 5, kind: input, shape index: {}]
  %s6 = inlined_call_operand.hbm [shape: f32[128,128], index: 6, kind: input, shape index: {}]
  %s7 = inlined_call_operand.vmem [shape: f32[1,128], index: 7, kind: input, shape index: {}]
  %s8 = inlined_call_operand.hbm [shape: f32[8,128], index: 8, kind: output, shape index: {}]
  %s9 = sld [smem:[#allocation0]]
  $region90: #{tpu_custom_call.1} parent=0
    _
  %s11 = ssub.s32 1, %s9
  %s12 = scalar_select 0, %s11, %s9
  %13 = sst [smem:[#allocation6]] %s0
  $region1: #{tpu_custom_call.1} parent=0
    #allocation7 [shape = 'u8[65536]{0}', space=vmem, size = 0x10000, scoped, tag = 'input window, operand 2, single buffered']
    #allocation8 [shape = 's32[1]{0}', space=sflag, size = 0x4, scoped, tag = 'scoped memory for tpu_custom_call.1']
    #allocation9 [shape = 's32[1]{0}', space=sflag, size = 0x4, scoped, tag = 'scoped memory for tpu_custom_call.1']
    #allocation10 [shape = 'u8[262144]{0}', space=vmem, size = 0x40000, scoped, tag = 'input window, operand 3, single buffered']
    #allocation11 [shape = 's32[1]{0}', space=sflag, size = 0x4, scoped, tag = 'scoped memory for tpu_custom_call.1']
    #allocation12 [shape = 'u8[65536]{0}', space=vmem, size = 0x10000, scoped, tag = 'input window, operand 6, single buffered']
    #allocation13 [shape = 'u8[4096]{0}', space=vmem, size = 0x1000, scoped, tag = 'output window, operand 0, single buffered']
    %14 = vsyncpa [#allocation8], 0
    %15 = vsyncpa [#allocation11], 0
    %16 = vsyncpa [#allocation9], 0
    // Predicated region
    $region2: #{tpu_custom_call.1} parent=1 // pred_check
      _
    $region3: #{tpu_custom_call.1} parent=1 // pred_check_branch
      %18 = sbr.rel (0) target = $region5
    $region4: #{tpu_custom_call.1} parent=1 // pred_region
      _
    $region5: #{tpu_custom_call.1} parent=1 // pred_fallthru
      _
    // Predicated region
    $region6: #{tpu_custom_call.1} parent=1 // pred_check
      _
    $region7: #{tpu_custom_call.1} parent=1 // pred_check_branch
      %20 = sbr.rel (0) target = $region9
    $region8: #{tpu_custom_call.1} parent=1 // pred_region
      %s22 = ssub.s32 2048, 2048
      %23 = vsyncadd [#allocation8], %s22
      %s24 = sshll.u32 [#allocation7], 4
      %s25 = int_to_ptr.vmem [resolvable:$true] %s24
      %30 = dma.hbm_to_vmem [thread:$0]  %s2, 2048, %s25, [#allocation8], 512, 512, 32
    $region9: #{tpu_custom_call.1} parent=1 // pred_fallthru
      _
    // Predicated region
    $region10: #{tpu_custom_call.1} parent=1 // pred_check
      _
    $region11: #{tpu_custom_call.1} parent=1 // pred_check_branch
      %32 = sbr.rel (0) target = $region13
    $region12: #{tpu_custom_call.1} parent=1 // pred_region
      %s34 = ssub.s32 8192, 8192
      %35 = vsyncadd [#allocation11], %s34
      %s36 = sshll.u32 [#allocation10], 4
      %s37 = int_to_ptr.vmem [resolvable:$true] %s36
      %42 = dma.hbm_to_vmem [thread:$0]  %s3, 8192, %s37, [#allocation11], 512, 512, 32
    $region13: #{tpu_custom_call.1} parent=1 // pred_fallthru
      _
    // Predicated region
    $region14: #{tpu_custom_call.1} parent=1 // pred_check
      _
    $region15: #{tpu_custom_call.1} parent=1 // pred_check_branch
      %44 = sbr.rel (0) target = $region17
    $region16: #{tpu_custom_call.1} parent=1 // pred_region
      _
    $region17: #{tpu_custom_call.1} parent=1 // pred_fallthru
      _
    // Predicated region
    $region18: #{tpu_custom_call.1} parent=1 // pred_check
      _
    $region19: #{tpu_custom_call.1} parent=1 // pred_check_branch
      %46 = sbr.rel (0) target = $region21
    $region20: #{tpu_custom_call.1} parent=1 // pred_region
      _
    $region21: #{tpu_custom_call.1} parent=1 // pred_fallthru
      _
    // Predicated region
    $region22: #{tpu_custom_call.1} parent=1 // pred_check
      _
    $region23: #{tpu_custom_call.1} parent=1 // pred_check_branch
      %48 = sbr.rel (0) target = $region25
    $region24: #{tpu_custom_call.1} parent=1 // pred_region
      %s50 = ssub.s32 2048, 2048
      %51 = vsyncadd [#allocation11], %s50
      %s52 = sshll.u32 [#allocation12], 4
      %s53 = int_to_ptr.vmem [resolvable:$true] %s52
      %58 = dma.hbm_to_vmem [thread:$0]  %s6, 2048, %s53, [#allocation11], 128, 128, 8
    $region25: #{tpu_custom_call.1} parent=1 // pred_fallthru
      _
    // Predicated region
    $region26: #{tpu_custom_call.1} parent=1 // pred_check
      _
    $region27: #{tpu_custom_call.1} parent=1 // pred_check_branch
      %60 = sbr.rel (0) target = $region29
    $region28: #{tpu_custom_call.1} parent=1 // pred_region
      _
    $region29: #{tpu_custom_call.1} parent=1 // pred_fallthru
      _
    // Predicated region
    $region30: #{tpu_custom_call.1} parent=1 // pred_check
      _
    $region31: #{tpu_custom_call.1} parent=1 // pred_check_branch
      %62 = sbr.rel (0) target = $region33
    $region32: #{tpu_custom_call.1} parent=1 // pred_region
      %63 = dma.done [#allocation8], 2048
    $region33: #{tpu_custom_call.1} parent=1 // pred_fallthru
      _
    // Predicated region
    $region34: #{tpu_custom_call.1} parent=1 // pred_check
      _
    $region35: #{tpu_custom_call.1} parent=1 // pred_check_branch
      %65 = sbr.rel (0) target = $region37
    $region36: #{tpu_custom_call.1} parent=1 // pred_region
      %66 = dma.done [#allocation11], 8192
    $region37: #{tpu_custom_call.1} parent=1 // pred_fallthru
      _
    // Predicated region
    $region38: #{tpu_custom_call.1} parent=1 // pred_check
      _
    $region39: #{tpu_custom_call.1} parent=1 // pred_check_branch
      %68 = sbr.rel (0) target = $region41
    $region40: #{tpu_custom_call.1} parent=1 // pred_region
      %69 = dma.done [#allocation11], 2048
    $region41: #{tpu_custom_call.1} parent=1 // pred_fallthru
      _
    %s70 = sld [smem:[#allocation6]]
    %s71 = smul.u32 0, 8
    %p72 = scmp.eq.s32.totalorder 0, 0
    // Predicated region
    $region42: #{tpu_custom_call.1} parent=1 // pred_check
      %p73 = pneg %p72
    $region43: #{tpu_custom_call.1} parent=1 // pred_check_branch
      %75 = sbr.rel (%p73) target = $region45
    $region44: #{tpu_custom_call.1} parent=1 // pred_region
      %76 = vst [vmem:[#allocation3] sm:$0xff] 0.0
      %77 = vst [vmem:[#allocation4] sm:$0xff] 0.0
      %78 = vst [vmem:[#allocation13] sm:$0xff] 0.0
    $region45: #{tpu_custom_call.1} parent=1 // pred_fallthru
      _
    %p79 = scmp.lt.s32.totalorder %s71, %s70
    // Predicated region
    $region46: #{tpu_custom_call.1} parent=1 // pred_check
      %p80 = pneg %p79
    $region47: #{tpu_custom_call.1} parent=1 // pred_check_branch
      %82 = sbr.rel (%p80) target = $region49
    $region48: #{tpu_custom_call.1} parent=1 // pred_region
      %v83 = vld [vmem:[%s1] sm:$0xff]
      %v84 = vld [vmem:[%s1 + $0x8] sm:$0xff]
      %v85 = vld [vmem:[%s1 + $0x10] sm:$0xff]
      %v86 = vld [vmem:[%s1 + $0x18] sm:$0xff]
      %v87 = vld [vmem:[%s1 + $0x20] sm:$0xff]
      %v88 = vld [vmem:[%s1 + $0x28] sm:$0xff]
      %v89 = vld [vmem:[%s1 + $0x30] sm:$0xff]
      %v90 = vld [vmem:[%s1 + $0x38] sm:$0xff]
      %v91 = vld [vmem:[#allocation7] sm:$0xff]
      %v92 = vld [vmem:[#allocation7 + $0x8] sm:$0xff]
      %v93 = vld [vmem:[#allocation7 + $0x10] sm:$0xff]
      %v94 = vld [vmem:[#allocation7 + $0x18] sm:$0xff]
      %v95 = vld [vmem:[#allocation7 + $0x20] sm:$0xff]
      %v96 = vld [vmem:[#allocation7 + $0x28] sm:$0xff]
      %v97 = vld [vmem:[#allocation7 + $0x30] sm:$0xff]
      %v98 = vld [vmem:[#allocation7 + $0x38] sm:$0xff]
      %v99 = vld [vmem:[#allocation7 + $0x40] sm:$0xff]
      %v100 = vld [vmem:[#allocation7 + $0x48] sm:$0xff]
      %v101 = vld [vmem:[#allocation7 + $0x50] sm:$0xff]
      %v102 = vld [vmem:[#allocation7 + $0x58] sm:$0xff]
      %v103 = vld [vmem:[#allocation7 + $0x60] sm:$0xff]
      %v104 = vld [vmem:[#allocation7 + $0x68] sm:$0xff]
      %v105 = vld [vmem:[#allocation7 + $0x70] sm:$0xff]
      %v106 = vld [vmem:[#allocation7 + $0x78] sm:$0xff]
      %v107 = vld [vmem:[%s4] sm:$0xf]
      %v109 = vlaneseq
      %v110 = vshrl.u32 %v109, 7
      %v111 = vsub.s32 0, %v110
      %v112 = vrot.slane %v107, %v111
      %v113 = vlaneseq
      %v114 = vshrl.u32 %v113, 7
      %v115 = vsub.s32 1, %v114
      %v116 = vrot.slane %v107, %v115
      %v117 = vlaneseq
      %v118 = vshrl.u32 %v117, 7
      %v119 = vsub.s32 2, %v118
      %v120 = vrot.slane %v107, %v119
      %v121 = vlaneseq
      %v122 = vshrl.u32 %v121, 7
      %v123 = vsub.s32 3, %v122
      %v124 = vrot.slane %v107, %v123
      %vm129 = vcmask 261120
      %v131 = vsel %vm129, %v83, 0
      %v134 = vsel %vm129, %v84, 0
      %v137 = vsel %vm129, %v85, 0
      %v140 = vsel %vm129, %v86, 0
      %v143 = vsel %vm129, %v87, 0
      %v146 = vsel %vm129, %v88, 0
      %v149 = vsel %vm129, %v89, 0
      %v152 = vsel %vm129, %v90, 0
      %154 = vmatprep.subr.mxu0 0.0
      %155 = vmatpush1.msra.mxu0 0.0
      %156 = vmatprep.subr.mxu0 0.0
      %157 = vmatpush1.msra.mxu0 0.0
      %158 = vmatprep.subr.mxu0 0.0
      %159 = vmatpush1.msra.mxu0 0.0
      %160 = vmatprep.subr.mxu0 0.0
      %161 = vmatpush1.msra.mxu0 0.0
      %162 = vmatprep.subr.mxu0 0.0
      %163 = vmatpush1.msra.mxu0 0.0
      %164 = vmatprep.subr.mxu0 0.0
      %165 = vmatpush1.msra.mxu0 0.0
      %166 = vmatprep.subr.mxu0 0.0
      %167 = vmatpush1.msra.mxu0 0.0
      %168 = vmatprep.subr.mxu0 0.0
      %169 = vmatpush1.msra.mxu0 0.0
      %170 = vmatprep.subr.mxu0 0.0
      %171 = vmatpush1.msra.mxu0 0.0
      %172 = vmatprep.subr.mxu0 0.0
      %173 = vmatpush1.msra.mxu0 0.0
      %174 = vmatprep.subr.mxu0 0.0
      %175 = vmatpush1.msra.mxu0 0.0
      %176 = vmatprep.subr.mxu0 0.0
      %177 = vmatpush1.msra.mxu0 0.0
      %178 = vmatprep.subr.mxu0 %v104
      %179 = vmatpush1.msra.mxu0 %v103
      %180 = vmatprep.subr.mxu0 %v100
      %181 = vmatpush1.msra.mxu0 %v99
      %182 = vmatprep.subr.mxu0 %v96
      %183 = vmatpush1.msra.mxu0 %v95
      %184 = vmatprep.subr.mxu0 %v92
      %185 = vmatpush1.msra.mxu0 %v91
      %186 = vmatprep.subr.mxu0 0.0
      %187 = vmatpush2.msra.mxu0 0.0
      %188 = vmatprep.subr.mxu0 0.0
      %189 = vmatpush2.msra.mxu0 0.0
      %190 = vmatprep.subr.mxu0 0.0
      %191 = vmatpush2.msra.mxu0 0.0
      %192 = vmatprep.subr.mxu0 0.0
      %193 = vmatpush2.msra.mxu0 0.0
      %194 = vmatprep.subr.mxu0 0.0
      %195 = vmatpush2.msra.mxu0 0.0
      %196 = vmatprep.subr.mxu0 0.0
      %197 = vmatpush2.msra.mxu0 0.0
      %198 = vmatprep.subr.mxu0 0.0
      %199 = vmatpush2.msra.mxu0 0.0
      %200 = vmatprep.subr.mxu0 0.0
      %201 = vmatpush2.msra.mxu0 0.0
      %202 = vmatprep.subr.mxu0 0.0
      %203 = vmatpush2.msra.mxu0 0.0
      %204 = vmatprep.subr.mxu0 0.0
      %205 = vmatpush2.msra.mxu0 0.0
      %206 = vmatprep.subr.mxu0 0.0
      %207 = vmatpush2.msra.mxu0 0.0
      %208 = vmatprep.subr.mxu0 0.0
      %209 = vmatpush2.msra.mxu0 0.0
      %210 = vmatprep.subr.mxu0 0.0
      %211 = vmatpush2.msra.mxu0 0.0
      %212 = vmatprep.subr.mxu0 0.0
      %213 = vmatpush2.msra.mxu0 0.0
      %214 = vmatprep.subr.mxu0 0.0
      %215 = vmatpush2.msra.mxu0 0.0
      %216 = vmatprep.subr.mxu0 0.0
      %217 = vmatpush2.msra.mxu0 0.0
      %218 = vmatprep.mubr.f32.mxu0 0.0
      %219 = vmatmul.mubr.f32.gmra.mxu0 %v131
      %v220 = vpop.f32.mrf.mxu0
      %v221 = vadd.f32 %v112, %v220
      %v222 = vpop.f32.mrf.mxu0
      %v223 = vadd.f32 %v116, %v222
      %224 = vmatprep.mubr.f32.mxu0 0.0
      %225 = vmatmul.mubr.f32.gmra.mxu0 %v134
      %v226 = vpop.f32.mrf.mxu0
      %v227 = vadd.f32 %v112, %v226
      %v228 = vpop.f32.mrf.mxu0
      %v229 = vadd.f32 %v116, %v228
      %230 = vmatprep.mubr.f32.mxu0 0.0
      %231 = vmatmul.mubr.f32.gmra.mxu0 %v137
      %v232 = vpop.f32.mrf.mxu0
      %v233 = vadd.f32 %v112, %v232
      %v234 = vpop.f32.mrf.mxu0
      %v235 = vadd.f32 %v116, %v234
      %236 = vmatprep.mubr.f32.mxu0 0.0
      %237 = vmatmul.mubr.f32.gmra.mxu0 %v140
      %v238 = vpop.f32.mrf.mxu0
      %v239 = vadd.f32 %v112, %v238
      %v240 = vpop.f32.mrf.mxu0
      %v241 = vadd.f32 %v116, %v240
      %242 = vmatprep.mubr.f32.mxu0 0.0
      %243 = vmatmul.mubr.f32.gmra.mxu0 %v143
      %v244 = vpop.f32.mrf.mxu0
      %v245 = vadd.f32 %v112, %v244
      %v246 = vpop.f32.mrf.mxu0
      %v247 = vadd.f32 %v116, %v246
      %248 = vmatprep.mubr.f32.mxu0 0.0
      %249 = vmatmul.mubr.f32.gmra.mxu0 %v146
      %v250 = vpop.f32.mrf.mxu0
      %v251 = vadd.f32 %v112, %v250
      %v252 = vpop.f32.mrf.mxu0
      %v253 = vadd.f32 %v116, %v252
      %254 = vmatprep.mubr.f32.mxu0 0.0
      %255 = vmatmul.mubr.f32.gmra.mxu0 %v149
      %v256 = vpop.f32.mrf.mxu0
      %v257 = vadd.f32 %v112, %v256
      %v258 = vpop.f32.mrf.mxu0
      %v259 = vadd.f32 %v116, %v258
      %260 = vmatprep.mubr.f32.mxu0 0.0
      %261 = vmatmul.mubr.f32.gmra.mxu0 %v152
      %v262 = vpop.f32.mrf.mxu0
      %v263 = vadd.f32 %v112, %v262
      %v264 = vpop.f32.mrf.mxu0
      %v265 = vadd.f32 %v116, %v264
      %266 = vdwg.mxu0
      %267 = vmatprep.subr.mxu0 0.0
      %268 = vmatpush1.msra.mxu0 0.0
      %269 = vmatprep.subr.mxu0 0.0
      %270 = vmatpush1.msra.mxu0 0.0
      %271 = vmatprep.subr.mxu0 0.0
      %272 = vmatpush1.msra.mxu0 0.0
      %273 = vmatprep.subr.mxu0 0.0
      %274 = vmatpush1.msra.mxu0 0.0
      %275 = vmatprep.subr.mxu0 0.0
      %276 = vmatpush1.msra.mxu0 0.0
      %277 = vmatprep.subr.mxu0 0.0
      %278 = vmatpush1.msra.mxu0 0.0
      %279 = vmatprep.subr.mxu0 0.0
      %280 = vmatpush1.msra.mxu0 0.0
      %281 = vmatprep.subr.mxu0 0.0
      %282 = vmatpush1.msra.mxu0 0.0
      %283 = vmatprep.subr.mxu0 0.0
      %284 = vmatpush1.msra.mxu0 0.0
      %285 = vmatprep.subr.mxu0 0.0
      %286 = vmatpush1.msra.mxu0 0.0
      %287 = vmatprep.subr.mxu0 0.0
      %288 = vmatpush1.msra.mxu0 0.0
      %289 = vmatprep.subr.mxu0 0.0
      %290 = vmatpush1.msra.mxu0 0.0
      %291 = vmatprep.subr.mxu0 %v106
      %292 = vmatpush1.msra.mxu0 %v105
      %293 = vmatprep.subr.mxu0 %v102
      %294 = vmatpush1.msra.mxu0 %v101
      %295 = vmatprep.subr.mxu0 %v98
      %296 = vmatpush1.msra.mxu0 %v97
      %297 = vmatprep.subr.mxu0 %v94
      %298 = vmatpush1.msra.mxu0 %v93
      %299 = vmatprep.subr.mxu0 0.0
      %300 = vmatpush2.msra.mxu0 0.0
      %301 = vmatprep.subr.mxu0 0.0
      %302 = vmatpush2.msra.mxu0 0.0
      %303 = vmatprep.subr.mxu0 0.0
      %304 = vmatpush2.msra.mxu0 0.0
      %305 = vmatprep.subr.mxu0 0.0
      %306 = vmatpush2.msra.mxu0 0.0
      %307 = vmatprep.subr.mxu0 0.0
      %308 = vmatpush2.msra.mxu0 0.0
      %309 = vmatprep.subr.mxu0 0.0
      %310 = vmatpush2.msra.mxu0 0.0
      %311 = vmatprep.subr.mxu0 0.0
      %312 = vmatpush2.msra.mxu0 0.0
      %313 = vmatprep.subr.mxu0 0.0
      %314 = vmatpush2.msra.mxu0 0.0
      %315 = vmatprep.subr.mxu0 0.0
      %316 = vmatpush2.msra.mxu0 0.0
      %317 = vmatprep.subr.mxu0 0.0
      %318 = vmatpush2.msra.mxu0 0.0
      %319 = vmatprep.subr.mxu0 0.0
      %320 = vmatpush2.msra.mxu0 0.0
      %321 = vmatprep.subr.mxu0 0.0
      %322 = vmatpush2.msra.mxu0 0.0
      %323 = vmatprep.subr.mxu0 0.0
      %324 = vmatpush2.msra.mxu0 0.0
      %325 = vmatprep.subr.mxu0 0.0
      %326 = vmatpush2.msra.mxu0 0.0
      %327 = vmatprep.subr.mxu0 0.0
      %328 = vmatpush2.msra.mxu0 0.0
      %329 = vmatprep.subr.mxu0 0.0
      %330 = vmatpush2.msra.mxu0 0.0
      %331 = vmatprep.mubr.f32.mxu0 0.0
      %332 = vmatmul.mubr.f32.gmra.mxu0 %v131
      %v333 = vpop.f32.mrf.mxu0
      %v334 = vadd.f32 %v120, %v333
      %v335 = vpop.f32.mrf.mxu0
      %v336 = vadd.f32 %v124, %v335
      %337 = vmatprep.mubr.f32.mxu0 0.0
      %338 = vmatmul.mubr.f32.gmra.mxu0 %v134
      %v339 = vpop.f32.mrf.mxu0
      %v340 = vadd.f32 %v120, %v339
      %v341 = vpop.f32.mrf.mxu0
      %v342 = vadd.f32 %v124, %v341
      %343 = vmatprep.mubr.f32.mxu0 0.0
      %344 = vmatmul.mubr.f32.gmra.mxu0 %v137
      %v345 = vpop.f32.mrf.mxu0
      %v346 = vadd.f32 %v120, %v345
      %v347 = vpop.f32.mrf.mxu0
      %v348 = vadd.f32 %v124, %v347
      %349 = vmatprep.mubr.f32.mxu0 0.0
      %350 = vmatmul.mubr.f32.gmra.mxu0 %v140
      %v351 = vpop.f32.mrf.mxu0
      %v352 = vadd.f32 %v120, %v351
      %v353 = vpop.f32.mrf.mxu0
      %v354 = vadd.f32 %v124, %v353
      %355 = vmatprep.mubr.f32.mxu0 0.0
      %356 = vmatmul.mubr.f32.gmra.mxu0 %v143
      %v357 = vpop.f32.mrf.mxu0
      %v358 = vadd.f32 %v120, %v357
      %v359 = vpop.f32.mrf.mxu0
      %v360 = vadd.f32 %v124, %v359
      %361 = vmatprep.mubr.f32.mxu0 0.0
      %362 = vmatmul.mubr.f32.gmra.mxu0 %v146
      %v363 = vpop.f32.mrf.mxu0
      %v364 = vadd.f32 %v120, %v363
      %v365 = vpop.f32.mrf.mxu0
      %v366 = vadd.f32 %v124, %v365
      %367 = vmatprep.mubr.f32.mxu0 0.0
      %368 = vmatmul.mubr.f32.gmra.mxu0 %v149
      %v369 = vpop.f32.mrf.mxu0
      %v370 = vadd.f32 %v120, %v369
      %v371 = vpop.f32.mrf.mxu0
      %v372 = vadd.f32 %v124, %v371
      %373 = vmatprep.mubr.f32.mxu0 0.0
      %374 = vmatmul.mubr.f32.gmra.mxu0 %v152
      %v375 = vpop.f32.mrf.mxu0
      %v376 = vadd.f32 %v120, %v375
      %v377 = vpop.f32.mrf.mxu0
      %v378 = vadd.f32 %v124, %v377
      %379 = vdwg.mxu0
      %380 = vst [vmem:[#allocation2] sm:$0xff] %v221
      %381 = vst [vmem:[#allocation2 + $0x8] sm:$0xff] %v223
      %382 = vst [vmem:[#allocation2 + $0x10] sm:$0xff] %v334
      %383 = vst [vmem:[#allocation2 + $0x18] sm:$0xff] %v336
      %384 = vst [vmem:[#allocation2 + $0x20] sm:$0xff] %v227
      %385 = vst [vmem:[#allocation2 + $0x28] sm:$0xff] %v229
      %386 = vst [vmem:[#allocation2 + $0x30] sm:$0xff] %v340
      %387 = vst [vmem:[#allocation2 + $0x38] sm:$0xff] %v342
      %388 = vst [vmem:[#allocation2 + $0x40] sm:$0xff] %v233
      %389 = vst [vmem:[#allocation2 + $0x48] sm:$0xff] %v235
      %390 = vst [vmem:[#allocation2 + $0x50] sm:$0xff] %v346
      %391 = vst [vmem:[#allocation2 + $0x58] sm:$0xff] %v348
      %392 = vst [vmem:[#allocation2 + $0x60] sm:$0xff] %v239
      %393 = vst [vmem:[#allocation2 + $0x68] sm:$0xff] %v241
      %394 = vst [vmem:[#allocation2 + $0x70] sm:$0xff] %v352
      %395 = vst [vmem:[#allocation2 + $0x78] sm:$0xff] %v354
      %396 = vst [vmem:[#allocation2 + $0x80] sm:$0xff] %v245
      %397 = vst [vmem:[#allocation2 + $0x88] sm:$0xff] %v247
      %398 = vst [vmem:[#allocation2 + $0x90] sm:$0xff] %v358
      %399 = vst [vmem:[#allocation2 + $0x98] sm:$0xff] %v360
      %400 = vst [vmem:[#allocation2 + $0xa0] sm:$0xff] %v251
      %401 = vst [vmem:[#allocation2 + $0xa8] sm:$0xff] %v253
      %402 = vst [vmem:[#allocation2 + $0xb0] sm:$0xff] %v364
      %403 = vst [vmem:[#allocation2 + $0xb8] sm:$0xff] %v366
      %404 = vst [vmem:[#allocation2 + $0xc0] sm:$0xff] %v257
      %405 = vst [vmem:[#allocation2 + $0xc8] sm:$0xff] %v259
      %406 = vst [vmem:[#allocation2 + $0xd0] sm:$0xff] %v370
      %407 = vst [vmem:[#allocation2 + $0xd8] sm:$0xff] %v372
      %408 = vst [vmem:[#allocation2 + $0xe0] sm:$0xff] %v263
      %409 = vst [vmem:[#allocation2 + $0xe8] sm:$0xff] %v265
      %410 = vst [vmem:[#allocation2 + $0xf0] sm:$0xff] %v376
      %411 = vst [vmem:[#allocation2 + $0xf8] sm:$0xff] %v378
      %v412 = vld [vmem:[#allocation2] sm:$0xff]
      %v413 = vld [vmem:[#allocation2 + $0x8] sm:$0xff]
      %v414 = vld [vmem:[#allocation2 + $0x10] sm:$0xff]
      %v415 = vld [vmem:[#allocation2 + $0x18] sm:$0xff]
      %v416 = vld [vmem:[#allocation3] sm:$0xff]
      %v417 = vld [vmem:[#allocation10] sm:$0xff]
      %v418 = vld [vmem:[#allocation10 + $0x8] sm:$0xff]
      %v419 = vld [vmem:[#allocation10 + $0x10] sm:$0xff]
      %v420 = vld [vmem:[#allocation10 + $0x18] sm:$0xff]
      %v421 = vld [vmem:[#allocation10 + $0x20] sm:$0xff]
      %v422 = vld [vmem:[#allocation10 + $0x28] sm:$0xff]
      %v423 = vld [vmem:[#allocation10 + $0x30] sm:$0xff]
      %v424 = vld [vmem:[#allocation10 + $0x38] sm:$0xff]
      %v425 = vld [vmem:[#allocation10 + $0x40] sm:$0xff]
      %v426 = vld [vmem:[#allocation10 + $0x48] sm:$0xff]
      %v427 = vld [vmem:[#allocation10 + $0x50] sm:$0xff]
      %v428 = vld [vmem:[#allocation10 + $0x58] sm:$0xff]
      %v429 = vld [vmem:[#allocation10 + $0x60] sm:$0xff]
      %v430 = vld [vmem:[#allocation10 + $0x68] sm:$0xff]
      %v431 = vld [vmem:[#allocation10 + $0x70] sm:$0xff]
      %v432 = vld [vmem:[#allocation10 + $0x78] sm:$0xff]
      %v433 = vld [vmem:[#allocation10 + $0x80] sm:$0xff]
      %v434 = vld [vmem:[#allocation10 + $0x88] sm:$0xff]
      %v435 = vld [vmem:[#allocation10 + $0x90] sm:$0xff]
      %v436 = vld [vmem:[#allocation10 + $0x98] sm:$0xff]
      %v437 = vld [vmem:[#allocation10 + $0xa0] sm:$0xff]
      %v438 = vld [vmem:[#allocation10 + $0xa8] sm:$0xff]
      %v439 = vld [vmem:[#allocation10 + $0xb0] sm:$0xff]
      %v440 = vld [vmem:[#allocation10 + $0xb8] sm:$0xff]
      %v441 = vld [vmem:[#allocation10 + $0xc0] sm:$0xff]
      %v442 = vld [vmem:[#allocation10 + $0xc8] sm:$0xff]
      %v443 = vld [vmem:[#allocation10 + $0xd0] sm:$0xff]
      %v444 = vld [vmem:[#allocation10 + $0xd8] sm:$0xff]
      %v445 = vld [vmem:[#allocation10 + $0xe0] sm:$0xff]
      %v446 = vld [vmem:[#allocation10 + $0xe8] sm:$0xff]
      %v447 = vld [vmem:[#allocation10 + $0xf0] sm:$0xff]
      %v448 = vld [vmem:[#allocation10 + $0xf8] sm:$0xff]
      %v449 = vld [vmem:[#allocation10 + $0x100] sm:$0xff]
      %v450 = vld [vmem:[#allocation10 + $0x108] sm:$0xff]
      %v451 = vld [vmem:[#allocation10 + $0x110] sm:$0xff]
      %v452 = vld [vmem:[#allocation10 + $0x118] sm:$0xff]
      %v453 = vld [vmem:[#allocation10 + $0x120] sm:$0xff]
      %v454 = vld [vmem:[#allocation10 + $0x128] sm:$0xff]
      %v455 = vld [vmem:[#allocation10 + $0x130] sm:$0xff]
      %v456 = vld [vmem:[#allocation10 + $0x138] sm:$0xff]
      %v457 = vld [vmem:[#allocation10 + $0x140] sm:$0xff]
      %v458 = vld [vmem:[#allocation10 + $0x148] sm:$0xff]
      %v459 = vld [vmem:[#allocation10 + $0x150] sm:$0xff]
      %v460 = vld [vmem:[#allocation10 + $0x158] sm:$0xff]
      %v461 = vld [vmem:[#allocation10 + $0x160] sm:$0xff]
      %v462 = vld [vmem:[#allocation10 + $0x168] sm:$0xff]
      %v463 = vld [vmem:[#allocation10 + $0x170] sm:$0xff]
      %v464 = vld [vmem:[#allocation10 + $0x178] sm:$0xff]
      %v465 = vld [vmem:[#allocation10 + $0x180] sm:$0xff]
      %v466 = vld [vmem:[#allocation10 + $0x188] sm:$0xff]
      %v467 = vld [vmem:[#allocation10 + $0x190] sm:$0xff]
      %v468 = vld [vmem:[#allocation10 + $0x198] sm:$0xff]
      %v469 = vld [vmem:[#allocation10 + $0x1a0] sm:$0xff]
      %v470 = vld [vmem:[#allocation10 + $0x1a8] sm:$0xff]
      %v471 = vld [vmem:[#allocation10 + $0x1b0] sm:$0xff]
      %v472 = vld [vmem:[#allocation10 + $0x1b8] sm:$0xff]
      %v473 = vld [vmem:[#allocation10 + $0x1c0] sm:$0xff]
      %v474 = vld [vmem:[#allocation10 + $0x1c8] sm:$0xff]
      %v475 = vld [vmem:[#allocation10 + $0x1d0] sm:$0xff]
      %v476 = vld [vmem:[#allocation10 + $0x1d8] sm:$0xff]
      %v477 = vld [vmem:[#allocation10 + $0x1e0] sm:$0xff]
      %v478 = vld [vmem:[#allocation10 + $0x1e8] sm:$0xff]
      %v479 = vld [vmem:[#allocation10 + $0x1f0] sm:$0xff]
      %v480 = vld [vmem:[#allocation10 + $0x1f8] sm:$0xff]
      %481 = vmatprep.subr.mxu0 %v478
      %482 = vmatpush1.msra.mxu0 %v477
      %483 = vmatprep.subr.mxu0 %v474
      %484 = vmatpush1.msra.mxu0 %v473
      %485 = vmatprep.subr.mxu0 %v470
      %486 = vmatpush1.msra.mxu0 %v469
      %487 = vmatprep.subr.mxu0 %v466
      %488 = vmatpush1.msra.mxu0 %v465
      %489 = vmatprep.subr.mxu0 %v462
      %490 = vmatpush1.msra.mxu0 %v461
      %491 = vmatprep.subr.mxu0 %v458
      %492 = vmatpush1.msra.mxu0 %v457
      %493 = vmatprep.subr.mxu0 %v454
      %494 = vmatpush1.msra.mxu0 %v453
      %495 = vmatprep.subr.mxu0 %v450
      %496 = vmatpush1.msra.mxu0 %v449
      %497 = vmatprep.subr.mxu0 %v446
      %498 = vmatpush1.msra.mxu0 %v445
      %499 = vmatprep.subr.mxu0 %v442
      %500 = vmatpush1.msra.mxu0 %v441
      %501 = vmatprep.subr.mxu0 %v438
      %502 = vmatpush1.msra.mxu0 %v437
      %503 = vmatprep.subr.mxu0 %v434
      %504 = vmatpush1.msra.mxu0 %v433
      %505 = vmatprep.subr.mxu0 %v430
      %506 = vmatpush1.msra.mxu0 %v429
      %507 = vmatprep.subr.mxu0 %v426
      %508 = vmatpush1.msra.mxu0 %v425
      %509 = vmatprep.subr.mxu0 %v422
      %510 = vmatpush1.msra.mxu0 %v421
      %511 = vmatprep.subr.mxu0 %v418
      %512 = vmatpush1.msra.mxu0 %v417
      %513 = vmatprep.subr.mxu0 0.0
      %514 = vmatpush2.msra.mxu0 0.0
      %515 = vmatprep.subr.mxu0 0.0
      %516 = vmatpush2.msra.mxu0 0.0
      %517 = vmatprep.subr.mxu0 0.0
      %518 = vmatpush2.msra.mxu0 0.0
      %519 = vmatprep.subr.mxu0 0.0
      %520 = vmatpush2.msra.mxu0 0.0
      %521 = vmatprep.subr.mxu0 0.0
      %522 = vmatpush2.msra.mxu0 0.0
      %523 = vmatprep.subr.mxu0 0.0
      %524 = vmatpush2.msra.mxu0 0.0
      %525 = vmatprep.subr.mxu0 0.0
      %526 = vmatpush2.msra.mxu0 0.0
      %527 = vmatprep.subr.mxu0 0.0
      %528 = vmatpush2.msra.mxu0 0.0
      %529 = vmatprep.subr.mxu0 0.0
      %530 = vmatpush2.msra.mxu0 0.0
      %531 = vmatprep.subr.mxu0 0.0
      %532 = vmatpush2.msra.mxu0 0.0
      %533 = vmatprep.subr.mxu0 0.0
      %534 = vmatpush2.msra.mxu0 0.0
      %535 = vmatprep.subr.mxu0 0.0
      %536 = vmatpush2.msra.mxu0 0.0
      %537 = vmatprep.subr.mxu0 0.0
      %538 = vmatpush2.msra.mxu0 0.0
      %539 = vmatprep.subr.mxu0 0.0
      %540 = vmatpush2.msra.mxu0 0.0
      %541 = vmatprep.subr.mxu0 0.0
      %542 = vmatpush2.msra.mxu0 0.0
      %543 = vmatprep.subr.mxu0 0.0
      %544 = vmatpush2.msra.mxu0 0.0
      %545 = vmatprep.mubr.f32.mxu0 0.0
      %546 = vmatmul.mubr.f32.gmra.mxu0 %v416
      %v547 = vpop.f32.mrf.mxu0
      %v548 = vadd.f32 0.0, %v547
      %v549 = vpop.f32.mrf.mxu0
      %v550 = vadd.f32 0.0, %v549
      %551 = vdwg.mxu0
      %552 = vmatprep.subr.mxu0 %v480
      %553 = vmatpush1.msra.mxu0 %v479
      %554 = vmatprep.subr.mxu0 %v476
      %555 = vmatpush1.msra.mxu0 %v475
      %556 = vmatprep.subr.mxu0 %v472
      %557 = vmatpush1.msra.mxu0 %v471
      %558 = vmatprep.subr.mxu0 %v468
      %559 = vmatpush1.msra.mxu0 %v467
      %560 = vmatprep.subr.mxu0 %v464
      %561 = vmatpush1.msra.mxu0 %v463
      %562 = vmatprep.subr.mxu0 %v460
      %563 = vmatpush1.msra.mxu0 %v459
      %564 = vmatprep.subr.mxu0 %v456
      %565 = vmatpush1.msra.mxu0 %v455
      %566 = vmatprep.subr.mxu0 %v452
      %567 = vmatpush1.msra.mxu0 %v451
      %568 = vmatprep.subr.mxu0 %v448
      %569 = vmatpush1.msra.mxu0 %v447
      %570 = vmatprep.subr.mxu0 %v444
      %571 = vmatpush1.msra.mxu0 %v443
      %572 = vmatprep.subr.mxu0 %v440
      %573 = vmatpush1.msra.mxu0 %v439
      %574 = vmatprep.subr.mxu0 %v436
      %575 = vmatpush1.msra.mxu0 %v435
      %576 = vmatprep.subr.mxu0 %v432
      %577 = vmatpush1.msra.mxu0 %v431
      %578 = vmatprep.subr.mxu0 %v428
      %579 = vmatpush1.msra.mxu0 %v427
      %580 = vmatprep.subr.mxu0 %v424
      %581 = vmatpush1.msra.mxu0 %v423
      %582 = vmatprep.subr.mxu0 %v420
      %583 = vmatpush1.msra.mxu0 %v419
      %584 = vmatprep.subr.mxu0 0.0
      %585 = vmatpush2.msra.mxu0 0.0
      %586 = vmatprep.subr.mxu0 0.0
      %587 = vmatpush2.msra.mxu0 0.0
      %588 = vmatprep.subr.mxu0 0.0
      %589 = vmatpush2.msra.mxu0 0.0
      %590 = vmatprep.subr.mxu0 0.0
      %591 = vmatpush2.msra.mxu0 0.0
      %592 = vmatprep.subr.mxu0 0.0
      %593 = vmatpush2.msra.mxu0 0.0
      %594 = vmatprep.subr.mxu0 0.0
      %595 = vmatpush2.msra.mxu0 0.0
      %596 = vmatprep.subr.mxu0 0.0
      %597 = vmatpush2.msra.mxu0 0.0
      %598 = vmatprep.subr.mxu0 0.0
      %599 = vmatpush2.msra.mxu0 0.0
      %600 = vmatprep.subr.mxu0 0.0
      %601 = vmatpush2.msra.mxu0 0.0
      %602 = vmatprep.subr.mxu0 0.0
      %603 = vmatpush2.msra.mxu0 0.0
      %604 = vmatprep.subr.mxu0 0.0
      %605 = vmatpush2.msra.mxu0 0.0
      %606 = vmatprep.subr.mxu0 0.0
      %607 = vmatpush2.msra.mxu0 0.0
      %608 = vmatprep.subr.mxu0 0.0
      %609 = vmatpush2.msra.mxu0 0.0
      %610 = vmatprep.subr.mxu0 0.0
      %611 = vmatpush2.msra.mxu0 0.0
      %612 = vmatprep.subr.mxu0 0.0
      %613 = vmatpush2.msra.mxu0 0.0
      %614 = vmatprep.subr.mxu0 0.0
      %615 = vmatpush2.msra.mxu0 0.0
      %616 = vmatprep.mubr.f32.mxu0 0.0
      %617 = vmatmul.mubr.f32.gmra.mxu0 %v416
      %v618 = vpop.f32.mrf.mxu0
      %v619 = vadd.f32 0.0, %v618
      %v620 = vpop.f32.mrf.mxu0
      %v621 = vadd.f32 0.0, %v620
      %622 = vdwg.mxu0
      %v623 = vadd.f32 %v412, %v548
      %v624 = vadd.f32 %v413, %v550
      %v625 = vadd.f32 %v414, %v619
      %v626 = vadd.f32 %v415, %v621
      %v627 = vxor.u32 %v623, 2147483648
      %v628 = vmul.f32 %v627, 1.442695
      %v629 = vpow.pop %v628
      %v630 = vadd.f32 %v629, 1.0
      %v631 = vrcp.pop %v630
      %v632 = vmul.f32 1.0, %v631
      %v633 = vxor.u32 %v624, 2147483648
      %v634 = vmul.f32 %v633, 1.442695
      %v635 = vpow.pop %v634
      %v636 = vadd.f32 %v635, 1.0
      %v637 = vrcp.pop %v636
      %v638 = vmul.f32 1.0, %v637
      %v639 = vtanh.pop %v625
      %v640 = vxor.u32 %v626, 2147483648
      %v641 = vmul.f32 %v640, 1.442695
      %v642 = vpow.pop %v641
      %v643 = vadd.f32 %v642, 1.0
      %v644 = vrcp.pop %v643
      %v645 = vmul.f32 1.0, %v644
      %v646 = vld [vmem:[#allocation4] sm:$0xff]
      %v647 = vmul.f32 %v638, %v646
      %v648 = vmul.f32 %v632, %v639
      %v649 = vadd.f32 %v647, %v648
      %650 = vst [vmem:[#allocation4] sm:$0xff] %v649
      %v651 = vtanh.pop %v649
      %v652 = vmul.f32 %v645, %v651
      %653 = vst [vmem:[#allocation3] sm:$0xff] %v652
      %s654 = sadd.s32 %s71, 1
      %p655 = scmp.lt.s32.totalorder %s654, %s70
      // Predicated region
      $region50: #{tpu_custom_call.1} parent=48 // pred_check
        %p656 = pneg %p655
      $region51: #{tpu_custom_call.1} parent=48 // pred_check_branch
        %658 = sbr.rel (%p656) target = $region53
      $region52: #{tpu_custom_call.1} parent=48 // pred_region
        %v659 = vld [vmem:[#allocation2 + $0x20] sm:$0xff]
        %v660 = vld [vmem:[#allocation2 + $0x28] sm:$0xff]
        %v661 = vld [vmem:[#allocation2 + $0x30] sm:$0xff]
        %v662 = vld [vmem:[#allocation2 + $0x38] sm:$0xff]
        %v663 = vld [vmem:[#allocation3] sm:$0xff]
        %v664 = vld [vmem:[#allocation10] sm:$0xff]
        %v665 = vld [vmem:[#allocation10 + $0x8] sm:$0xff]
        %v666 = vld [vmem:[#allocation10 + $0x10] sm:$0xff]
        %v667 = vld [vmem:[#allocation10 + $0x18] sm:$0xff]
        %v668 = vld [vmem:[#allocation10 + $0x20] sm:$0xff]
        %v669 = vld [vmem:[#allocation10 + $0x28] sm:$0xff]
        %v670 = vld [vmem:[#allocation10 + $0x30] sm:$0xff]
        %v671 = vld [vmem:[#allocation10 + $0x38] sm:$0xff]
        %v672 = vld [vmem:[#allocation10 + $0x40] sm:$0xff]
        %v673 = vld [vmem:[#allocation10 + $0x48] sm:$0xff]
        %v674 = vld [vmem:[#allocation10 + $0x50] sm:$0xff]
        %v675 = vld [vmem:[#allocation10 + $0x58] sm:$0xff]
        %v676 = vld [vmem:[#allocation10 + $0x60] sm:$0xff]
        %v677 = vld [vmem:[#allocation10 + $0x68] sm:$0xff]
        %v678 = vld [vmem:[#allocation10 + $0x70] sm:$0xff]
        %v679 = vld [vmem:[#allocation10 + $0x78] sm:$0xff]
        %v680 = vld [vmem:[#allocation10 + $0x80] sm:$0xff]
        %v681 = vld [vmem:[#allocation10 + $0x88] sm:$0xff]
        %v682 = vld [vmem:[#allocation10 + $0x90] sm:$0xff]
        %v683 = vld [vmem:[#allocation10 + $0x98] sm:$0xff]
        %v684 = vld [vmem:[#allocation10 + $0xa0] sm:$0xff]
        %v685 = vld [vmem:[#allocation10 + $0xa8] sm:$0xff]
        %v686 = vld [vmem:[#allocation10 + $0xb0] sm:$0xff]
        %v687 = vld [vmem:[#allocation10 + $0xb8] sm:$0xff]
        %v688 = vld [vmem:[#allocation10 + $0xc0] sm:$0xff]
        %v689 = vld [vmem:[#allocation10 + $0xc8] sm:$0xff]
        %v690 = vld [vmem:[#allocation10 + $0xd0] sm:$0xff]
        %v691 = vld [vmem:[#allocation10 + $0xd8] sm:$0xff]
        %v692 = vld [vmem:[#allocation10 + $0xe0] sm:$0xff]
        %v693 = vld [vmem:[#allocation10 + $0xe8] sm:$0xff]
        %v694 = vld [vmem:[#allocation10 + $0xf0] sm:$0xff]
        %v695 = vld [vmem:[#allocation10 + $0xf8] sm:$0xff]
        %v696 = vld [vmem:[#allocation10 + $0x100] sm:$0xff]
        %v697 = vld [vmem:[#allocation10 + $0x108] sm:$0xff]
        %v698 = vld [vmem:[#allocation10 + $0x110] sm:$0xff]
        %v699 = vld [vmem:[#allocation10 + $0x118] sm:$0xff]
        %v700 = vld [vmem:[#allocation10 + $0x120] sm:$0xff]
        %v701 = vld [vmem:[#allocation10 + $0x128] sm:$0xff]
        %v702 = vld [vmem:[#allocation10 + $0x130] sm:$0xff]
        %v703 = vld [vmem:[#allocation10 + $0x138] sm:$0xff]
        %v704 = vld [vmem:[#allocation10 + $0x140] sm:$0xff]
        %v705 = vld [vmem:[#allocation10 + $0x148] sm:$0xff]
        %v706 = vld [vmem:[#allocation10 + $0x150] sm:$0xff]
        %v707 = vld [vmem:[#allocation10 + $0x158] sm:$0xff]
        %v708 = vld [vmem:[#allocation10 + $0x160] sm:$0xff]
        %v709 = vld [vmem:[#allocation10 + $0x168] sm:$0xff]
        %v710 = vld [vmem:[#allocation10 + $0x170] sm:$0xff]
        %v711 = vld [vmem:[#allocation10 + $0x178] sm:$0xff]
        %v712 = vld [vmem:[#allocation10 + $0x180] sm:$0xff]
        %v713 = vld [vmem:[#allocation10 + $0x188] sm:$0xff]
        %v714 = vld [vmem:[#allocation10 + $0x190] sm:$0xff]
        %v715 = vld [vmem:[#allocation10 + $0x198] sm:$0xff]
        %v716 = vld [vmem:[#allocation10 + $0x1a0] sm:$0xff]
        %v717 = vld [vmem:[#allocation10 + $0x1a8] sm:$0xff]
        %v718 = vld [vmem:[#allocation10 + $0x1b0] sm:$0xff]
        %v719 = vld [vmem:[#allocation10 + $0x1b8] sm:$0xff]
        %v720 = vld [vmem:[#allocation10 + $0x1c0] sm:$0xff]
        %v721 = vld [vmem:[#allocation10 + $0x1c8] sm:$0xff]
        %v722 = vld [vmem:[#allocation10 + $0x1d0] sm:$0xff]
        %v723 = vld [vmem:[#allocation10 + $0x1d8] sm:$0xff]
        %v724 = vld [vmem:[#allocation10 + $0x1e0] sm:$0xff]
        %v725 = vld [vmem:[#allocation10 + $0x1e8] sm:$0xff]
        %v726 = vld [vmem:[#allocation10 + $0x1f0] sm:$0xff]
        %v727 = vld [vmem:[#allocation10 + $0x1f8] sm:$0xff]
        %728 = vmatprep.subr.mxu0 %v725
        %729 = vmatpush1.msra.mxu0 %v724
        %730 = vmatprep.subr.mxu0 %v721
        %731 = vmatpush1.msra.mxu0 %v720
        %732 = vmatprep.subr.mxu0 %v717
        %733 = vmatpush1.msra.mxu0 %v716
        %734 = vmatprep.subr.mxu0 %v713
        %735 = vmatpush1.msra.mxu0 %v712
        %736 = vmatprep.subr.mxu0 %v709
        %737 = vmatpush1.msra.mxu0 %v708
        %738 = vmatprep.subr.mxu0 %v705
        %739 = vmatpush1.msra.mxu0 %v704
        %740 = vmatprep.subr.mxu0 %v701
        %741 = vmatpush1.msra.mxu0 %v700
        %742 = vmatprep.subr.mxu0 %v697
        %743 = vmatpush1.msra.mxu0 %v696
        %744 = vmatprep.subr.mxu0 %v693
        %745 = vmatpush1.msra.mxu0 %v692
        %746 = vmatprep.subr.mxu0 %v689
        %747 = vmatpush1.msra.mxu0 %v688
        %748 = vmatprep.subr.mxu0 %v685
        %749 = vmatpush1.msra.mxu0 %v684
        %750 = vmatprep.subr.mxu0 %v681
        %751 = vmatpush1.msra.mxu0 %v680
        %752 = vmatprep.subr.mxu0 %v677
        %753 = vmatpush1.msra.mxu0 %v676
        %754 = vmatprep.subr.mxu0 %v673
        %755 = vmatpush1.msra.mxu0 %v672
        %756 = vmatprep.subr.mxu0 %v669
        %757 = vmatpush1.msra.mxu0 %v668
        %758 = vmatprep.subr.mxu0 %v665
        %759 = vmatpush1.msra.mxu0 %v664
        %760 = vmatprep.subr.mxu0 0.0
        %761 = vmatpush2.msra.mxu0 0.0
        %762 = vmatprep.subr.mxu0 0.0
        %763 = vmatpush2.msra.mxu0 0.0
        %764 = vmatprep.subr.mxu0 0.0
        %765 = vmatpush2.msra.mxu0 0.0
        %766 = vmatprep.subr.mxu0 0.0
        %767 = vmatpush2.msra.mxu0 0.0
        %768 = vmatprep.subr.mxu0 0.0
        %769 = vmatpush2.msra.mxu0 0.0
        %770 = vmatprep.subr.mxu0 0.0
        %771 = vmatpush2.msra.mxu0 0.0
        %772 = vmatprep.subr.mxu0 0.0
        %773 = vmatpush2.msra.mxu0 0.0
        %774 = vmatprep.subr.mxu0 0.0
        %775 = vmatpush2.msra.mxu0 0.0
        %776 = vmatprep.subr.mxu0 0.0
        %777 = vmatpush2.msra.mxu0 0.0
        %778 = vmatprep.subr.mxu0 0.0
        %779 = vmatpush2.msra.mxu0 0.0
        %780 = vmatprep.subr.mxu0 0.0
        %781 = vmatpush2.msra.mxu0 0.0
        %782 = vmatprep.subr.mxu0 0.0
        %783 = vmatpush2.msra.mxu0 0.0
        %784 = vmatprep.subr.mxu0 0.0
        %785 = vmatpush2.msra.mxu0 0.0
        %786 = vmatprep.subr.mxu0 0.0
        %787 = vmatpush2.msra.mxu0 0.0
        %788 = vmatprep.subr.mxu0 0.0
        %789 = vmatpush2.msra.mxu0 0.0
        %790 = vmatprep.subr.mxu0 0.0
        %791 = vmatpush2.msra.mxu0 0.0
        %792 = vmatprep.mubr.f32.mxu0 0.0
        %793 = vmatmul.mubr.f32.gmra.mxu0 %v663
        %v794 = vpop.f32.mrf.mxu0
        %v795 = vadd.f32 0.0, %v794
        %v796 = vpop.f32.mrf.mxu0
        %v797 = vadd.f32 0.0, %v796
        %798 = vdwg.mxu0
        %799 = vmatprep.subr.mxu0 %v727
        %800 = vmatpush1.msra.mxu0 %v726
        %801 = vmatprep.subr.mxu0 %v723
        %802 = vmatpush1.msra.mxu0 %v722
        %803 = vmatprep.subr.mxu0 %v719
        %804 = vmatpush1.msra.mxu0 %v718
        %805 = vmatprep.subr.mxu0 %v715
        %806 = vmatpush1.msra.mxu0 %v714
        %807 = vmatprep.subr.mxu0 %v711
        %808 = vmatpush1.msra.mxu0 %v710
        %809 = vmatprep.subr.mxu0 %v707
        %810 = vmatpush1.msra.mxu0 %v706
        %811 = vmatprep.subr.mxu0 %v703
        %812 = vmatpush1.msra.mxu0 %v702
        %813 = vmatprep.subr.mxu0 %v699
        %814 = vmatpush1.msra.mxu0 %v698
        %815 = vmatprep.subr.mxu0 %v695
        %816 = vmatpush1.msra.mxu0 %v694
        %817 = vmatprep.subr.mxu0 %v691
        %818 = vmatpush1.msra.mxu0 %v690
        %819 = vmatprep.subr.mxu0 %v687
        %820 = vmatpush1.msra.mxu0 %v686
        %821 = vmatprep.subr.mxu0 %v683
        %822 = vmatpush1.msra.mxu0 %v682
        %823 = vmatprep.subr.mxu0 %v679
        %824 = vmatpush1.msra.mxu0 %v678
        %825 = vmatprep.subr.mxu0 %v675
        %826 = vmatpush1.msra.mxu0 %v674
        %827 = vmatprep.subr.mxu0 %v671
        %828 = vmatpush1.msra.mxu0 %v670
        %829 = vmatprep.subr.mxu0 %v667
        %830 = vmatpush1.msra.mxu0 %v666
        %831 = vmatprep.subr.mxu0 0.0
        %832 = vmatpush2.msra.mxu0 0.0
        %833 = vmatprep.subr.mxu0 0.0
        %834 = vmatpush2.msra.mxu0 0.0
        %835 = vmatprep.subr.mxu0 0.0
        %836 = vmatpush2.msra.mxu0 0.0
        %837 = vmatprep.subr.mxu0 0.0
        %838 = vmatpush2.msra.mxu0 0.0
        %839 = vmatprep.subr.mxu0 0.0
        %840 = vmatpush2.msra.mxu0 0.0
        %841 = vmatprep.subr.mxu0 0.0
        %842 = vmatpush2.msra.mxu0 0.0
        %843 = vmatprep.subr.mxu0 0.0
        %844 = vmatpush2.msra.mxu0 0.0
        %845 = vmatprep.subr.mxu0 0.0
        %846 = vmatpush2.msra.mxu0 0.0
        %847 = vmatprep.subr.mxu0 0.0
        %848 = vmatpush2.msra.mxu0 0.0
        %849 = vmatprep.subr.mxu0 0.0
        %850 = vmatpush2.msra.mxu0 0.0
        %851 = vmatprep.subr.mxu0 0.0
        %852 = vmatpush2.msra.mxu0 0.0
        %853 = vmatprep.subr.mxu0 0.0
        %854 = vmatpush2.msra.mxu0 0.0
        %855 = vmatprep.subr.mxu0 0.0
        %856 = vmatpush2.msra.mxu0 0.0
        %857 = vmatprep.subr.mxu0 0.0
        %858 = vmatpush2.msra.mxu0 0.0
        %859 = vmatprep.subr.mxu0 0.0
        %860 = vmatpush2.msra.mxu0 0.0
        %861 = vmatprep.subr.mxu0 0.0
        %862 = vmatpush2.msra.mxu0 0.0
        %863 = vmatprep.mubr.f32.mxu0 0.0
        %864 = vmatmul.mubr.f32.gmra.mxu0 %v663
        %v865 = vpop.f32.mrf.mxu0
        %v866 = vadd.f32 0.0, %v865
        %v867 = vpop.f32.mrf.mxu0
        %v868 = vadd.f32 0.0, %v867
        %869 = vdwg.mxu0
        %v870 = vadd.f32 %v659, %v795
        %v871 = vadd.f32 %v660, %v797
        %v872 = vadd.f32 %v661, %v866
        %v873 = vadd.f32 %v662, %v868
        %v874 = vxor.u32 %v870, 2147483648
        %v875 = vmul.f32 %v874, 1.442695
        %v876 = vpow.pop %v875
        %v877 = vadd.f32 %v876, 1.0
        %v878 = vrcp.pop %v877
        %v879 = vmul.f32 1.0, %v878
        %v880 = vxor.u32 %v871, 2147483648
        %v881 = vmul.f32 %v880, 1.442695
        %v882 = vpow.pop %v881
        %v883 = vadd.f32 %v882, 1.0
        %v884 = vrcp.pop %v883
        %v885 = vmul.f32 1.0, %v884
        %v886 = vtanh.pop %v872
        %v887 = vxor.u32 %v873, 2147483648
        %v888 = vmul.f32 %v887, 1.442695
        %v889 = vpow.pop %v888
        %v890 = vadd.f32 %v889, 1.0
        %v891 = vrcp.pop %v890
        %v892 = vmul.f32 1.0, %v891
        %v893 = vld [vmem:[#allocation4] sm:$0xff]
        %v894 = vmul.f32 %v885, %v893
        %v895 = vmul.f32 %v879, %v886
        %v896 = vadd.f32 %v894, %v895
        %897 = vst [vmem:[#allocation4] sm:$0xff] %v896
        %v898 = vtanh.pop %v896
        %v899 = vmul.f32 %v892, %v898
        %900 = vst [vmem:[#allocation3] sm:$0xff] %v899
      $region53: #{tpu_custom_call.1} parent=48 // pred_fallthru
        _
      %s901 = sadd.s32 %s71, 2
      %p902 = scmp.lt.s32.totalorder %s901, %s70
      // Predicated region
      $region54: #{tpu_custom_call.1} parent=48 // pred_check
        %p903 = pneg %p902
      $region55: #{tpu_custom_call.1} parent=48 // pred_check_branch
        %905 = sbr.rel (%p903) target = $region57
      $region56: #{tpu_custom_call.1} parent=48 // pred_region
        %v906 = vld [vmem:[#allocation2 + $0x40] sm:$0xff]
        %v907 = vld [vmem:[#allocation2 + $0x48] sm:$0xff]
        %v908 = vld [vmem:[#allocation2 + $0x50] sm:$0xff]
        %v909 = vld [vmem:[#allocation2 + $0x58] sm:$0xff]
        %v910 = vld [vmem:[#allocation3] sm:$0xff]
        %v911 = vld [vmem:[#allocation10] sm:$0xff]
        %v912 = vld [vmem:[#allocation10 + $0x8] sm:$0xff]
        %v913 = vld [vmem:[#allocation10 + $0x10] sm:$0xff]
        %v914 = vld [vmem:[#allocation10 + $0x18] sm:$0xff]
        %v915 = vld [vmem:[#allocation10 + $0x20] sm:$0xff]
        %v916 = vld [vmem:[#allocation10 + $0x28] sm:$0xff]
        %v917 = vld [vmem:[#allocation10 + $0x30] sm:$0xff]
        %v918 = vld [vmem:[#allocation10 + $0x38] sm:$0xff]
        %v919 = vld [vmem:[#allocation10 + $0x40] sm:$0xff]
        %v920 = vld [vmem:[#allocation10 + $0x48] sm:$0xff]
        %v921 = vld [vmem:[#allocation10 + $0x50] sm:$0xff]
        %v922 = vld [vmem:[#allocation10 + $0x58] sm:$0xff]
        %v923 = vld [vmem:[#allocation10 + $0x60] sm:$0xff]
        %v924 = vld [vmem:[#allocation10 + $0x68] sm:$0xff]
        %v925 = vld [vmem:[#allocation10 + $0x70] sm:$0xff]
        %v926 = vld [vmem:[#allocation10 + $0x78] sm:$0xff]
        %v927 = vld [vmem:[#allocation10 + $0x80] sm:$0xff]
        %v928 = vld [vmem:[#allocation10 + $0x88] sm:$0xff]
        %v929 = vld [vmem:[#allocation10 + $0x90] sm:$0xff]
        %v930 = vld [vmem:[#allocation10 + $0x98] sm:$0xff]
        %v931 = vld [vmem:[#allocation10 + $0xa0] sm:$0xff]
        %v932 = vld [vmem:[#allocation10 + $0xa8] sm:$0xff]
        %v933 = vld [vmem:[#allocation10 + $0xb0] sm:$0xff]
        %v934 = vld [vmem:[#allocation10 + $0xb8] sm:$0xff]
        %v935 = vld [vmem:[#allocation10 + $0xc0] sm:$0xff]
        %v936 = vld [vmem:[#allocation10 + $0xc8] sm:$0xff]
        %v937 = vld [vmem:[#allocation10 + $0xd0] sm:$0xff]
        %v938 = vld [vmem:[#allocation10 + $0xd8] sm:$0xff]
        %v939 = vld [vmem:[#allocation10 + $0xe0] sm:$0xff]
        %v940 = vld [vmem:[#allocation10 + $0xe8] sm:$0xff]
        %v941 = vld [vmem:[#allocation10 + $0xf0] sm:$0xff]
        %v942 = vld [vmem:[#allocation10 + $0xf8] sm:$0xff]
        %v943 = vld [vmem:[#allocation10 + $0x100] sm:$0xff]
        %v944 = vld [vmem:[#allocation10 + $0x108] sm:$0xff]
        %v945 = vld [vmem:[#allocation10 + $0x110] sm:$0xff]
        %v946 = vld [vmem:[#allocation10 + $0x118] sm:$0xff]
        %v947 = vld [vmem:[#allocation10 + $0x120] sm:$0xff]
        %v948 = vld [vmem:[#allocation10 + $0x128] sm:$0xff]
        %v949 = vld [vmem:[#allocation10 + $0x130] sm:$0xff]
        %v950 = vld [vmem:[#allocation10 + $0x138] sm:$0xff]
        %v951 = vld [vmem:[#allocation10 + $0x140] sm:$0xff]
        %v952 = vld [vmem:[#allocation10 + $0x148] sm:$0xff]
        %v953 = vld [vmem:[#allocation10 + $0x150] sm:$0xff]
        %v954 = vld [vmem:[#allocation10 + $0x158] sm:$0xff]
        %v955 = vld [vmem:[#allocation10 + $0x160] sm:$0xff]
        %v956 = vld [vmem:[#allocation10 + $0x168] sm:$0xff]
        %v957 = vld [vmem:[#allocation10 + $0x170] sm:$0xff]
        %v958 = vld [vmem:[#allocation10 + $0x178] sm:$0xff]
        %v959 = vld [vmem:[#allocation10 + $0x180] sm:$0xff]
        %v960 = vld [vmem:[#allocation10 + $0x188] sm:$0xff]
        %v961 = vld [vmem:[#allocation10 + $0x190] sm:$0xff]
        %v962 = vld [vmem:[#allocation10 + $0x198] sm:$0xff]
        %v963 = vld [vmem:[#allocation10 + $0x1a0] sm:$0xff]
        %v964 = vld [vmem:[#allocation10 + $0x1a8] sm:$0xff]
        %v965 = vld [vmem:[#allocation10 + $0x1b0] sm:$0xff]
        %v966 = vld [vmem:[#allocation10 + $0x1b8] sm:$0xff]
        %v967 = vld [vmem:[#allocation10 + $0x1c0] sm:$0xff]
        %v968 = vld [vmem:[#allocation10 + $0x1c8] sm:$0xff]
        %v969 = vld [vmem:[#allocation10 + $0x1d0] sm:$0xff]
        %v970 = vld [vmem:[#allocation10 + $0x1d8] sm:$0xff]
        %v971 = vld [vmem:[#allocation10 + $0x1e0] sm:$0xff]
        %v972 = vld [vmem:[#allocation10 + $0x1e8] sm:$0xff]
        %v973 = vld [vmem:[#allocation10 + $0x1f0] sm:$0xff]
        %v974 = vld [vmem:[#allocation10 + $0x1f8] sm:$0xff]
        %975 = vmatprep.subr.mxu0 %v972
        %976 = vmatpush1.msra.mxu0 %v971
        %977 = vmatprep.subr.mxu0 %v968
        %978 = vmatpush1.msra.mxu0 %v967
        %979 = vmatprep.subr.mxu0 %v964
        %980 = vmatpush1.msra.mxu0 %v963
        %981 = vmatprep.subr.mxu0 %v960
        %982 = vmatpush1.msra.mxu0 %v959
        %983 = vmatprep.subr.mxu0 %v956
        %984 = vmatpush1.msra.mxu0 %v955
        %985 = vmatprep.subr.mxu0 %v952
        %986 = vmatpush1.msra.mxu0 %v951
        %987 = vmatprep.subr.mxu0 %v948
        %988 = vmatpush1.msra.mxu0 %v947
        %989 = vmatprep.subr.mxu0 %v944
        %990 = vmatpush1.msra.mxu0 %v943
        %991 = vmatprep.subr.mxu0 %v940
        %992 = vmatpush1.msra.mxu0 %v939
        %993 = vmatprep.subr.mxu0 %v936
        %994 = vmatpush1.msra.mxu0 %v935
        %995 = vmatprep.subr.mxu0 %v932
        %996 = vmatpush1.msra.mxu0 %v931
        %997 = vmatprep.subr.mxu0 %v928
        %998 = vmatpush1.msra.mxu0 %v927
        %999 = vmatprep.subr.mxu0 %v924
        %1000 = vmatpush1.msra.mxu0 %v923
        %1001 = vmatprep.subr.mxu0 %v920
        %1002 = vmatpush1.msra.mxu0 %v919
        %1003 = vmatprep.subr.mxu0 %v916
        %1004 = vmatpush1.msra.mxu0 %v915
        %1005 = vmatprep.subr.mxu0 %v912
        %1006 = vmatpush1.msra.mxu0 %v911
        %1007 = vmatprep.subr.mxu0 0.0
        %1008 = vmatpush2.msra.mxu0 0.0
        %1009 = vmatprep.subr.mxu0 0.0
        %1010 = vmatpush2.msra.mxu0 0.0
        %1011 = vmatprep.subr.mxu0 0.0
        %1012 = vmatpush2.msra.mxu0 0.0
        %1013 = vmatprep.subr.mxu0 0.0
        %1014 = vmatpush2.msra.mxu0 0.0
        %1015 = vmatprep.subr.mxu0 0.0
        %1016 = vmatpush2.msra.mxu0 0.0
        %1017 = vmatprep.subr.mxu0 0.0
        %1018 = vmatpush2.msra.mxu0 0.0
        %1019 = vmatprep.subr.mxu0 0.0
        %1020 = vmatpush2.msra.mxu0 0.0
        %1021 = vmatprep.subr.mxu0 0.0
        %1022 = vmatpush2.msra.mxu0 0.0
        %1023 = vmatprep.subr.mxu0 0.0
        %1024 = vmatpush2.msra.mxu0 0.0
        %1025 = vmatprep.subr.mxu0 0.0
        %1026 = vmatpush2.msra.mxu0 0.0
        %1027 = vmatprep.subr.mxu0 0.0
        %1028 = vmatpush2.msra.mxu0 0.0
        %1029 = vmatprep.subr.mxu0 0.0
        %1030 = vmatpush2.msra.mxu0 0.0
        %1031 = vmatprep.subr.mxu0 0.0
        %1032 = vmatpush2.msra.mxu0 0.0
        %1033 = vmatprep.subr.mxu0 0.0
        %1034 = vmatpush2.msra.mxu0 0.0
        %1035 = vmatprep.subr.mxu0 0.0
        %1036 = vmatpush2.msra.mxu0 0.0
        %1037 = vmatprep.subr.mxu0 0.0
        %1038 = vmatpush2.msra.mxu0 0.0
        %1039 = vmatprep.mubr.f32.mxu0 0.0
        %1040 = vmatmul.mubr.f32.gmra.mxu0 %v910
        %v1041 = vpop.f32.mrf.mxu0
        %v1042 = vadd.f32 0.0, %v1041
        %v1043 = vpop.f32.mrf.mxu0
        %v1044 = vadd.f32 0.0, %v1043
        %1045 = vdwg.mxu0
        %1046 = vmatprep.subr.mxu0 %v974
        %1047 = vmatpush1.msra.mxu0 %v973
        %1048 = vmatprep.subr.mxu0 %v970
        %1049 = vmatpush1.msra.mxu0 %v969
        %1050 = vmatprep.subr.mxu0 %v966
        %1051 = vmatpush1.msra.mxu0 %v965
        %1052 = vmatprep.subr.mxu0 %v962
        %1053 = vmatpush1.msra.mxu0 %v961
        %1054 = vmatprep.subr.mxu0 %v958
        %1055 = vmatpush1.msra.mxu0 %v957
        %1056 = vmatprep.subr.mxu0 %v954
        %1057 = vmatpush1.msra.mxu0 %v953
        %1058 = vmatprep.subr.mxu0 %v950
        %1059 = vmatpush1.msra.mxu0 %v949
        %1060 = vmatprep.subr.mxu0 %v946
        %1061 = vmatpush1.msra.mxu0 %v945
        %1062 = vmatprep.subr.mxu0 %v942
        %1063 = vmatpush1.msra.mxu0 %v941
        %1064 = vmatprep.subr.mxu0 %v938
        %1065 = vmatpush1.msra.mxu0 %v937
        %1066 = vmatprep.subr.mxu0 %v934
        %1067 = vmatpush1.msra.mxu0 %v933
        %1068 = vmatprep.subr.mxu0 %v930
        %1069 = vmatpush1.msra.mxu0 %v929
        %1070 = vmatprep.subr.mxu0 %v926
        %1071 = vmatpush1.msra.mxu0 %v925
        %1072 = vmatprep.subr.mxu0 %v922
        %1073 = vmatpush1.msra.mxu0 %v921
        %1074 = vmatprep.subr.mxu0 %v918
        %1075 = vmatpush1.msra.mxu0 %v917
        %1076 = vmatprep.subr.mxu0 %v914
        %1077 = vmatpush1.msra.mxu0 %v913
        %1078 = vmatprep.subr.mxu0 0.0
        %1079 = vmatpush2.msra.mxu0 0.0
        %1080 = vmatprep.subr.mxu0 0.0
        %1081 = vmatpush2.msra.mxu0 0.0
        %1082 = vmatprep.subr.mxu0 0.0
        %1083 = vmatpush2.msra.mxu0 0.0
        %1084 = vmatprep.subr.mxu0 0.0
        %1085 = vmatpush2.msra.mxu0 0.0
        %1086 = vmatprep.subr.mxu0 0.0
        %1087 = vmatpush2.msra.mxu0 0.0
        %1088 = vmatprep.subr.mxu0 0.0
        %1089 = vmatpush2.msra.mxu0 0.0
        %1090 = vmatprep.subr.mxu0 0.0
        %1091 = vmatpush2.msra.mxu0 0.0
        %1092 = vmatprep.subr.mxu0 0.0
        %1093 = vmatpush2.msra.mxu0 0.0
        %1094 = vmatprep.subr.mxu0 0.0
        %1095 = vmatpush2.msra.mxu0 0.0
        %1096 = vmatprep.subr.mxu0 0.0
        %1097 = vmatpush2.msra.mxu0 0.0
        %1098 = vmatprep.subr.mxu0 0.0
        %1099 = vmatpush2.msra.mxu0 0.0
        %1100 = vmatprep.subr.mxu0 0.0
        %1101 = vmatpush2.msra.mxu0 0.0
        %1102 = vmatprep.subr.mxu0 0.0
        %1103 = vmatpush2.msra.mxu0 0.0
        %1104 = vmatprep.subr.mxu0 0.0
        %1105 = vmatpush2.msra.mxu0 0.0
        %1106 = vmatprep.subr.mxu0 0.0
        %1107 = vmatpush2.msra.mxu0 0.0
        %1108 = vmatprep.subr.mxu0 0.0
        %1109 = vmatpush2.msra.mxu0 0.0
        %1110 = vmatprep.mubr.f32.mxu0 0.0
        %1111 = vmatmul.mubr.f32.gmra.mxu0 %v910
        %v1112 = vpop.f32.mrf.mxu0
        %v1113 = vadd.f32 0.0, %v1112
        %v1114 = vpop.f32.mrf.mxu0
        %v1115 = vadd.f32 0.0, %v1114
        %1116 = vdwg.mxu0
        %v1117 = vadd.f32 %v906, %v1042
        %v1118 = vadd.f32 %v907, %v1044
        %v1119 = vadd.f32 %v908, %v1113
        %v1120 = vadd.f32 %v909, %v1115
        %v1121 = vxor.u32 %v1117, 2147483648
        %v1122 = vmul.f32 %v1121, 1.442695
        %v1123 = vpow.pop %v1122
        %v1124 = vadd.f32 %v1123, 1.0
        %v1125 = vrcp.pop %v1124
        %v1126 = vmul.f32 1.0, %v1125
        %v1127 = vxor.u32 %v1118, 2147483648
        %v1128 = vmul.f32 %v1127, 1.442695
        %v1129 = vpow.pop %v1128
        %v1130 = vadd.f32 %v1129, 1.0
        %v1131 = vrcp.pop %v1130
        %v1132 = vmul.f32 1.0, %v1131
        %v1133 = vtanh.pop %v1119
        %v1134 = vxor.u32 %v1120, 2147483648
        %v1135 = vmul.f32 %v1134, 1.442695
        %v1136 = vpow.pop %v1135
        %v1137 = vadd.f32 %v1136, 1.0
        %v1138 = vrcp.pop %v1137
        %v1139 = vmul.f32 1.0, %v1138
        %v1140 = vld [vmem:[#allocation4] sm:$0xff]
        %v1141 = vmul.f32 %v1132, %v1140
        %v1142 = vmul.f32 %v1126, %v1133
        %v1143 = vadd.f32 %v1141, %v1142
        %1144 = vst [vmem:[#allocation4] sm:$0xff] %v1143
        %v1145 = vtanh.pop %v1143
        %v1146 = vmul.f32 %v1139, %v1145
        %1147 = vst [vmem:[#allocation3] sm:$0xff] %v1146
      $region57: #{tpu_custom_call.1} parent=48 // pred_fallthru
        _
      %s1148 = sadd.s32 %s71, 3
      %p1149 = scmp.lt.s32.totalorder %s1148, %s70
      // Predicated region
      $region58: #{tpu_custom_call.1} parent=48 // pred_check
        %p1150 = pneg %p1149
      $region59: #{tpu_custom_call.1} parent=48 // pred_check_branch
        %1152 = sbr.rel (%p1150) target = $region61
      $region60: #{tpu_custom_call.1} parent=48 // pred_region
        %v1153 = vld [vmem:[#allocation2 + $0x60] sm:$0xff]
        %v1154 = vld [vmem:[#allocation2 + $0x68] sm:$0xff]
        %v1155 = vld [vmem:[#allocation2 + $0x70] sm:$0xff]
        %v1156 = vld [vmem:[#allocation2 + $0x78] sm:$0xff]
        %v1157 = vld [vmem:[#allocation3] sm:$0xff]
        %v1158 = vld [vmem:[#allocation10] sm:$0xff]
        %v1159 = vld [vmem:[#allocation10 + $0x8] sm:$0xff]
        %v1160 = vld [vmem:[#allocation10 + $0x10] sm:$0xff]
        %v1161 = vld [vmem:[#allocation10 + $0x18] sm:$0xff]
        %v1162 = vld [vmem:[#allocation10 + $0x20] sm:$0xff]
        %v1163 = vld [vmem:[#allocation10 + $0x28] sm:$0xff]
        %v1164 = vld [vmem:[#allocation10 + $0x30] sm:$0xff]
        %v1165 = vld [vmem:[#allocation10 + $0x38] sm:$0xff]
        %v1166 = vld [vmem:[#allocation10 + $0x40] sm:$0xff]
        %v1167 = vld [vmem:[#allocation10 + $0x48] sm:$0xff]
        %v1168 = vld [vmem:[#allocation10 + $0x50] sm:$0xff]
        %v1169 = vld [vmem:[#allocation10 + $0x58] sm:$0xff]
        %v1170 = vld [vmem:[#allocation10 + $0x60] sm:$0xff]
        %v1171 = vld [vmem:[#allocation10 + $0x68] sm:$0xff]
        %v1172 = vld [vmem:[#allocation10 + $0x70] sm:$0xff]
        %v1173 = vld [vmem:[#allocation10 + $0x78] sm:$0xff]
        %v1174 = vld [vmem:[#allocation10 + $0x80] sm:$0xff]
        %v1175 = vld [vmem:[#allocation10 + $0x88] sm:$0xff]
        %v1176 = vld [vmem:[#allocation10 + $0x90] sm:$0xff]
        %v1177 = vld [vmem:[#allocation10 + $0x98] sm:$0xff]
        %v1178 = vld [vmem:[#allocation10 + $0xa0] sm:$0xff]
        %v1179 = vld [vmem:[#allocation10 + $0xa8] sm:$0xff]
        %v1180 = vld [vmem:[#allocation10 + $0xb0] sm:$0xff]
        %v1181 = vld [vmem:[#allocation10 + $0xb8] sm:$0xff]
        %v1182 = vld [vmem:[#allocation10 + $0xc0] sm:$0xff]
        %v1183 = vld [vmem:[#allocation10 + $0xc8] sm:$0xff]
        %v1184 = vld [vmem:[#allocation10 + $0xd0] sm:$0xff]
        %v1185 = vld [vmem:[#allocation10 + $0xd8] sm:$0xff]
        %v1186 = vld [vmem:[#allocation10 + $0xe0] sm:$0xff]
        %v1187 = vld [vmem:[#allocation10 + $0xe8] sm:$0xff]
        %v1188 = vld [vmem:[#allocation10 + $0xf0] sm:$0xff]
        %v1189 = vld [vmem:[#allocation10 + $0xf8] sm:$0xff]
        %v1190 = vld [vmem:[#allocation10 + $0x100] sm:$0xff]
        %v1191 = vld [vmem:[#allocation10 + $0x108] sm:$0xff]
        %v1192 = vld [vmem:[#allocation10 + $0x110] sm:$0xff]
        %v1193 = vld [vmem:[#allocation10 + $0x118] sm:$0xff]
        %v1194 = vld [vmem:[#allocation10 + $0x120] sm:$0xff]
        %v1195 = vld [vmem:[#allocation10 + $0x128] sm:$0xff]
        %v1196 = vld [vmem:[#allocation10 + $0x130] sm:$0xff]
        %v1197 = vld [vmem:[#allocation10 + $0x138] sm:$0xff]
        %v1198 = vld [vmem:[#allocation10 + $0x140] sm:$0xff]
        %v1199 = vld [vmem:[#allocation10 + $0x148] sm:$0xff]
        %v1200 = vld [vmem:[#allocation10 + $0x150] sm:$0xff]
        %v1201 = vld [vmem:[#allocation10 + $0x158] sm:$0xff]
        %v1202 = vld [vmem:[#allocation10 + $0x160] sm:$0xff]
        %v1203 = vld [vmem:[#allocation10 + $0x168] sm:$0xff]
        %v1204 = vld [vmem:[#allocation10 + $0x170] sm:$0xff]
        %v1205 = vld [vmem:[#allocation10 + $0x178] sm:$0xff]
        %v1206 = vld [vmem:[#allocation10 + $0x180] sm:$0xff]
        %v1207 = vld [vmem:[#allocation10 + $0x188] sm:$0xff]
        %v1208 = vld [vmem:[#allocation10 + $0x190] sm:$0xff]
        %v1209 = vld [vmem:[#allocation10 + $0x198] sm:$0xff]
        %v1210 = vld [vmem:[#allocation10 + $0x1a0] sm:$0xff]
        %v1211 = vld [vmem:[#allocation10 + $0x1a8] sm:$0xff]
        %v1212 = vld [vmem:[#allocation10 + $0x1b0] sm:$0xff]
        %v1213 = vld [vmem:[#allocation10 + $0x1b8] sm:$0xff]
        %v1214 = vld [vmem:[#allocation10 + $0x1c0] sm:$0xff]
        %v1215 = vld [vmem:[#allocation10 + $0x1c8] sm:$0xff]
        %v1216 = vld [vmem:[#allocation10 + $0x1d0] sm:$0xff]
        %v1217 = vld [vmem:[#allocation10 + $0x1d8] sm:$0xff]
        %v1218 = vld [vmem:[#allocation10 + $0x1e0] sm:$0xff]
        %v1219 = vld [vmem:[#allocation10 + $0x1e8] sm:$0xff]
        %v1220 = vld [vmem:[#allocation10 + $0x1f0] sm:$0xff]
        %v1221 = vld [vmem:[#allocation10 + $0x1f8] sm:$0xff]
        %1222 = vmatprep.subr.mxu0 %v1219
        %1223 = vmatpush1.msra.mxu0 %v1218
        %1224 = vmatprep.subr.mxu0 %v1215
        %1225 = vmatpush1.msra.mxu0 %v1214
        %1226 = vmatprep.subr.mxu0 %v1211
        %1227 = vmatpush1.msra.mxu0 %v1210
        %1228 = vmatprep.subr.mxu0 %v1207
        %1229 = vmatpush1.msra.mxu0 %v1206
        %1230 = vmatprep.subr.mxu0 %v1203
        %1231 = vmatpush1.msra.mxu0 %v1202
        %1232 = vmatprep.subr.mxu0 %v1199
        %1233 = vmatpush1.msra.mxu0 %v1198
        %1234 = vmatprep.subr.mxu0 %v1195
        %1235 = vmatpush1.msra.mxu0 %v1194
        %1236 = vmatprep.subr.mxu0 %v1191
        %1237 = vmatpush1.msra.mxu0 %v1190
        %1238 = vmatprep.subr.mxu0 %v1187
        %1239 = vmatpush1.msra.mxu0 %v1186
        %1240 = vmatprep.subr.mxu0 %v1183
        %1241 = vmatpush1.msra.mxu0 %v1182
        %1242 = vmatprep.subr.mxu0 %v1179
        %1243 = vmatpush1.msra.mxu0 %v1178
        %1244 = vmatprep.subr.mxu0 %v1175
        %1245 = vmatpush1.msra.mxu0 %v1174
        %1246 = vmatprep.subr.mxu0 %v1171
        %1247 = vmatpush1.msra.mxu0 %v1170
        %1248 = vmatprep.subr.mxu0 %v1167
        %1249 = vmatpush1.msra.mxu0 %v1166
        %1250 = vmatprep.subr.mxu0 %v1163
        %1251 = vmatpush1.msra.mxu0 %v1162
        %1252 = vmatprep.subr.mxu0 %v1159
        %1253 = vmatpush1.msra.mxu0 %v1158
        %1254 = vmatprep.subr.mxu0 0.0
        %1255 = vmatpush2.msra.mxu0 0.0
        %1256 = vmatprep.subr.mxu0 0.0
        %1257 = vmatpush2.msra.mxu0 0.0
        %1258 = vmatprep.subr.mxu0 0.0
        %1259 = vmatpush2.msra.mxu0 0.0
        %1260 = vmatprep.subr.mxu0 0.0
        %1261 = vmatpush2.msra.mxu0 0.0
        %1262 = vmatprep.subr.mxu0 0.0
        %1263 = vmatpush2.msra.mxu0 0.0
        %1264 = vmatprep.subr.mxu0 0.0
        %1265 = vmatpush2.msra.mxu0 0.0
        %1266 = vmatprep.subr.mxu0 0.0
        %1267 = vmatpush2.msra.mxu0 0.0
        %1268 = vmatprep.subr.mxu0 0.0
        %1269 = vmatpush2.msra.mxu0 0.0
        %1270 = vmatprep.subr.mxu0 0.0
        %1271 = vmatpush2.msra.mxu0 0.0
        %1272 = vmatprep.subr.mxu0 0.0
        %1273 = vmatpush2.msra.mxu0 0.0
        %1274 = vmatprep.subr.mxu0 0.0
        %1275 = vmatpush2.msra.mxu0 0.0
        %1276 = vmatprep.subr.mxu0 0.0
        %1277 = vmatpush2.msra.mxu0 0.0
        %1278 = vmatprep.subr.mxu0 0.0
        %1279 = vmatpush2.msra.mxu0 0.0
        %1280 = vmatprep.subr.mxu0 0.0
        %1281 = vmatpush2.msra.mxu0 0.0
        %1282 = vmatprep.subr.mxu0 0.0
        %1283 = vmatpush2.msra.mxu0 0.0
        %1284 = vmatprep.subr.mxu0 0.0
        %1285 = vmatpush2.msra.mxu0 0.0
        %1286 = vmatprep.mubr.f32.mxu0 0.0
        %1287 = vmatmul.mubr.f32.gmra.mxu0 %v1157
        %v1288 = vpop.f32.mrf.mxu0
        %v1289 = vadd.f32 0.0, %v1288
        %v1290 = vpop.f32.mrf.mxu0
        %v1291 = vadd.f32 0.0, %v1290
        %1292 = vdwg.mxu0
        %1293 = vmatprep.subr.mxu0 %v1221
        %1294 = vmatpush1.msra.mxu0 %v1220
        %1295 = vmatprep.subr.mxu0 %v1217
        %1296 = vmatpush1.msra.mxu0 %v1216
        %1297 = vmatprep.subr.mxu0 %v1213
        %1298 = vmatpush1.msra.mxu0 %v1212
        %1299 = vmatprep.subr.mxu0 %v1209
        %1300 = vmatpush1.msra.mxu0 %v1208
        %1301 = vmatprep.subr.mxu0 %v1205
        %1302 = vmatpush1.msra.mxu0 %v1204
        %1303 = vmatprep.subr.mxu0 %v1201
        %1304 = vmatpush1.msra.mxu0 %v1200
        %1305 = vmatprep.subr.mxu0 %v1197
        %1306 = vmatpush1.msra.mxu0 %v1196
        %1307 = vmatprep.subr.mxu0 %v1193
        %1308 = vmatpush1.msra.mxu0 %v1192
        %1309 = vmatprep.subr.mxu0 %v1189
        %1310 = vmatpush1.msra.mxu0 %v1188
        %1311 = vmatprep.subr.mxu0 %v1185
        %1312 = vmatpush1.msra.mxu0 %v1184
        %1313 = vmatprep.subr.mxu0 %v1181
        %1314 = vmatpush1.msra.mxu0 %v1180
        %1315 = vmatprep.subr.mxu0 %v1177
        %1316 = vmatpush1.msra.mxu0 %v1176
        %1317 = vmatprep.subr.mxu0 %v1173
        %1318 = vmatpush1.msra.mxu0 %v1172
        %1319 = vmatprep.subr.mxu0 %v1169
        %1320 = vmatpush1.msra.mxu0 %v1168
        %1321 = vmatprep.subr.mxu0 %v1165
        %1322 = vmatpush1.msra.mxu0 %v1164
        %1323 = vmatprep.subr.mxu0 %v1161
        %1324 = vmatpush1.msra.mxu0 %v1160
        %1325 = vmatprep.subr.mxu0 0.0
        %1326 = vmatpush2.msra.mxu0 0.0
        %1327 = vmatprep.subr.mxu0 0.0
        %1328 = vmatpush2.msra.mxu0 0.0
        %1329 = vmatprep.subr.mxu0 0.0
        %1330 = vmatpush2.msra.mxu0 0.0
        %1331 = vmatprep.subr.mxu0 0.0
        %1332 = vmatpush2.msra.mxu0 0.0
        %1333 = vmatprep.subr.mxu0 0.0
        %1334 = vmatpush2.msra.mxu0 0.0
        %1335 = vmatprep.subr.mxu0 0.0
        %1336 = vmatpush2.msra.mxu0 0.0
        %1337 = vmatprep.subr.mxu0 0.0
        %1338 = vmatpush2.msra.mxu0 0.0
        %1339 = vmatprep.subr.mxu0 0.0
        %1340 = vmatpush2.msra.mxu0 0.0
        %1341 = vmatprep.subr.mxu0 0.0
        %1342 = vmatpush2.msra.mxu0 0.0
        %1343 = vmatprep.subr.mxu0 0.0
        %1344 = vmatpush2.msra.mxu0 0.0
        %1345 = vmatprep.subr.mxu0 0.0
        %1346 = vmatpush2.msra.mxu0 0.0
        %1347 = vmatprep.subr.mxu0 0.0
        %1348 = vmatpush2.msra.mxu0 0.0
        %1349 = vmatprep.subr.mxu0 0.0
        %1350 = vmatpush2.msra.mxu0 0.0
        %1351 = vmatprep.subr.mxu0 0.0
        %1352 = vmatpush2.msra.mxu0 0.0
        %1353 = vmatprep.subr.mxu0 0.0
        %1354 = vmatpush2.msra.mxu0 0.0
        %1355 = vmatprep.subr.mxu0 0.0
        %1356 = vmatpush2.msra.mxu0 0.0
        %1357 = vmatprep.mubr.f32.mxu0 0.0
        %1358 = vmatmul.mubr.f32.gmra.mxu0 %v1157
        %v1359 = vpop.f32.mrf.mxu0
        %v1360 = vadd.f32 0.0, %v1359
        %v1361 = vpop.f32.mrf.mxu0
        %v1362 = vadd.f32 0.0, %v1361
        %1363 = vdwg.mxu0
        %v1364 = vadd.f32 %v1153, %v1289
        %v1365 = vadd.f32 %v1154, %v1291
        %v1366 = vadd.f32 %v1155, %v1360
        %v1367 = vadd.f32 %v1156, %v1362
        %v1368 = vxor.u32 %v1364, 2147483648
        %v1369 = vmul.f32 %v1368, 1.442695
        %v1370 = vpow.pop %v1369
        %v1371 = vadd.f32 %v1370, 1.0
        %v1372 = vrcp.pop %v1371
        %v1373 = vmul.f32 1.0, %v1372
        %v1374 = vxor.u32 %v1365, 2147483648
        %v1375 = vmul.f32 %v1374, 1.442695
        %v1376 = vpow.pop %v1375
        %v1377 = vadd.f32 %v1376, 1.0
        %v1378 = vrcp.pop %v1377
        %v1379 = vmul.f32 1.0, %v1378
        %v1380 = vtanh.pop %v1366
        %v1381 = vxor.u32 %v1367, 2147483648
        %v1382 = vmul.f32 %v1381, 1.442695
        %v1383 = vpow.pop %v1382
        %v1384 = vadd.f32 %v1383, 1.0
        %v1385 = vrcp.pop %v1384
        %v1386 = vmul.f32 1.0, %v1385
        %v1387 = vld [vmem:[#allocation4] sm:$0xff]
        %v1388 = vmul.f32 %v1379, %v1387
        %v1389 = vmul.f32 %v1373, %v1380
        %v1390 = vadd.f32 %v1388, %v1389
        %1391 = vst [vmem:[#allocation4] sm:$0xff] %v1390
        %v1392 = vtanh.pop %v1390
        %v1393 = vmul.f32 %v1386, %v1392
        %1394 = vst [vmem:[#allocation3] sm:$0xff] %v1393
      $region61: #{tpu_custom_call.1} parent=48 // pred_fallthru
        _
      %s1395 = sadd.s32 %s71, 4
      %p1396 = scmp.lt.s32.totalorder %s1395, %s70
      // Predicated region
      $region62: #{tpu_custom_call.1} parent=48 // pred_check
        %p1397 = pneg %p1396
      $region63: #{tpu_custom_call.1} parent=48 // pred_check_branch
        %1399 = sbr.rel (%p1397) target = $region65
      $region64: #{tpu_custom_call.1} parent=48 // pred_region
        %v1400 = vld [vmem:[#allocation2 + $0x80] sm:$0xff]
        %v1401 = vld [vmem:[#allocation2 + $0x88] sm:$0xff]
        %v1402 = vld [vmem:[#allocation2 + $0x90] sm:$0xff]
        %v1403 = vld [vmem:[#allocation2 + $0x98] sm:$0xff]
        %v1404 = vld [vmem:[#allocation3] sm:$0xff]
        %v1405 = vld [vmem:[#allocation10] sm:$0xff]
        %v1406 = vld [vmem:[#allocation10 + $0x8] sm:$0xff]
        %v1407 = vld [vmem:[#allocation10 + $0x10] sm:$0xff]
        %v1408 = vld [vmem:[#allocation10 + $0x18] sm:$0xff]
        %v1409 = vld [vmem:[#allocation10 + $0x20] sm:$0xff]
        %v1410 = vld [vmem:[#allocation10 + $0x28] sm:$0xff]
        %v1411 = vld [vmem:[#allocation10 + $0x30] sm:$0xff]
        %v1412 = vld [vmem:[#allocation10 + $0x38] sm:$0xff]
        %v1413 = vld [vmem:[#allocation10 + $0x40] sm:$0xff]
        %v1414 = vld [vmem:[#allocation10 + $0x48] sm:$0xff]
        %v1415 = vld [vmem:[#allocation10 + $0x50] sm:$0xff]
        %v1416 = vld [vmem:[#allocation10 + $0x58] sm:$0xff]
        %v1417 = vld [vmem:[#allocation10 + $0x60] sm:$0xff]
        %v1418 = vld [vmem:[#allocation10 + $0x68] sm:$0xff]
        %v1419 = vld [vmem:[#allocation10 + $0x70] sm:$0xff]
        %v1420 = vld [vmem:[#allocation10 + $0x78] sm:$0xff]
        %v1421 = vld [vmem:[#allocation10 + $0x80] sm:$0xff]
        %v1422 = vld [vmem:[#allocation10 + $0x88] sm:$0xff]
        %v1423 = vld [vmem:[#allocation10 + $0x90] sm:$0xff]
        %v1424 = vld [vmem:[#allocation10 + $0x98] sm:$0xff]
        %v1425 = vld [vmem:[#allocation10 + $0xa0] sm:$0xff]
        %v1426 = vld [vmem:[#allocation10 + $0xa8] sm:$0xff]
        %v1427 = vld [vmem:[#allocation10 + $0xb0] sm:$0xff]
        %v1428 = vld [vmem:[#allocation10 + $0xb8] sm:$0xff]
        %v1429 = vld [vmem:[#allocation10 + $0xc0] sm:$0xff]
        %v1430 = vld [vmem:[#allocation10 + $0xc8] sm:$0xff]
        %v1431 = vld [vmem:[#allocation10 + $0xd0] sm:$0xff]
        %v1432 = vld [vmem:[#allocation10 + $0xd8] sm:$0xff]
        %v1433 = vld [vmem:[#allocation10 + $0xe0] sm:$0xff]
        %v1434 = vld [vmem:[#allocation10 + $0xe8] sm:$0xff]
        %v1435 = vld [vmem:[#allocation10 + $0xf0] sm:$0xff]
        %v1436 = vld [vmem:[#allocation10 + $0xf8] sm:$0xff]
        %v1437 = vld [vmem:[#allocation10 + $0x100] sm:$0xff]
        %v1438 = vld [vmem:[#allocation10 + $0x108] sm:$0xff]
        %v1439 = vld [vmem:[#allocation10 + $0x110] sm:$0xff]
        %v1440 = vld [vmem:[#allocation10 + $0x118] sm:$0xff]
        %v1441 = vld [vmem:[#allocation10 + $0x120] sm:$0xff]
        %v1442 = vld [vmem:[#allocation10 + $0x128] sm:$0xff]
        %v1443 = vld [vmem:[#allocation10 + $0x130] sm:$0xff]
        %v1444 = vld [vmem:[#allocation10 + $0x138] sm:$0xff]
        %v1445 = vld [vmem:[#allocation10 + $0x140] sm:$0xff]
        %v1446 = vld [vmem:[#allocation10 + $0x148] sm:$0xff]
        %v1447 = vld [vmem:[#allocation10 + $0x150] sm:$0xff]
        %v1448 = vld [vmem:[#allocation10 + $0x158] sm:$0xff]
        %v1449 = vld [vmem:[#allocation10 + $0x160] sm:$0xff]
        %v1450 = vld [vmem:[#allocation10 + $0x168] sm:$0xff]
        %v1451 = vld [vmem:[#allocation10 + $0x170] sm:$0xff]
        %v1452 = vld [vmem:[#allocation10 + $0x178] sm:$0xff]
        %v1453 = vld [vmem:[#allocation10 + $0x180] sm:$0xff]
        %v1454 = vld [vmem:[#allocation10 + $0x188] sm:$0xff]
        %v1455 = vld [vmem:[#allocation10 + $0x190] sm:$0xff]
        %v1456 = vld [vmem:[#allocation10 + $0x198] sm:$0xff]
        %v1457 = vld [vmem:[#allocation10 + $0x1a0] sm:$0xff]
        %v1458 = vld [vmem:[#allocation10 + $0x1a8] sm:$0xff]
        %v1459 = vld [vmem:[#allocation10 + $0x1b0] sm:$0xff]
        %v1460 = vld [vmem:[#allocation10 + $0x1b8] sm:$0xff]
        %v1461 = vld [vmem:[#allocation10 + $0x1c0] sm:$0xff]
        %v1462 = vld [vmem:[#allocation10 + $0x1c8] sm:$0xff]
        %v1463 = vld [vmem:[#allocation10 + $0x1d0] sm:$0xff]
        %v1464 = vld [vmem:[#allocation10 + $0x1d8] sm:$0xff]
        %v1465 = vld [vmem:[#allocation10 + $0x1e0] sm:$0xff]
        %v1466 = vld [vmem:[#allocation10 + $0x1e8] sm:$0xff]
        %v1467 = vld [vmem:[#allocation10 + $0x1f0] sm:$0xff]
        %v1468 = vld [vmem:[#allocation10 + $0x1f8] sm:$0xff]
        %1469 = vmatprep.subr.mxu0 %v1466
        %1470 = vmatpush1.msra.mxu0 %v1465
        %1471 = vmatprep.subr.mxu0 %v1462
        %1472 = vmatpush1.msra.mxu0 %v1461
        %1473 = vmatprep.subr.mxu0 %v1458
        %1474 = vmatpush1.msra.mxu0 %v1457
        %1475 = vmatprep.subr.mxu0 %v1454
        %1476 = vmatpush1.msra.mxu0 %v1453
        %1477 = vmatprep.subr.mxu0 %v1450
        %1478 = vmatpush1.msra.mxu0 %v1449
        %1479 = vmatprep.subr.mxu0 %v1446
        %1480 = vmatpush1.msra.mxu0 %v1445
        %1481 = vmatprep.subr.mxu0 %v1442
        %1482 = vmatpush1.msra.mxu0 %v1441
        %1483 = vmatprep.subr.mxu0 %v1438
        %1484 = vmatpush1.msra.mxu0 %v1437
        %1485 = vmatprep.subr.mxu0 %v1434
        %1486 = vmatpush1.msra.mxu0 %v1433
        %1487 = vmatprep.subr.mxu0 %v1430
        %1488 = vmatpush1.msra.mxu0 %v1429
        %1489 = vmatprep.subr.mxu0 %v1426
        %1490 = vmatpush1.msra.mxu0 %v1425
        %1491 = vmatprep.subr.mxu0 %v1422
        %1492 = vmatpush1.msra.mxu0 %v1421
        %1493 = vmatprep.subr.mxu0 %v1418
        %1494 = vmatpush1.msra.mxu0 %v1417
        %1495 = vmatprep.subr.mxu0 %v1414
        %1496 = vmatpush1.msra.mxu0 %v1413
        %1497 = vmatprep.subr.mxu0 %v1410
        %1498 = vmatpush1.msra.mxu0 %v1409
        %1499 = vmatprep.subr.mxu0 %v1406
        %1500 = vmatpush1.msra.mxu0 %v1405
        %1501 = vmatprep.subr.mxu0 0.0
        %1502 = vmatpush2.msra.mxu0 0.0
        %1503 = vmatprep.subr.mxu0 0.0
        %1504 = vmatpush2.msra.mxu0 0.0
        %1505 = vmatprep.subr.mxu0 0.0
        %1506 = vmatpush2.msra.mxu0 0.0
        %1507 = vmatprep.subr.mxu0 0.0
        %1508 = vmatpush2.msra.mxu0 0.0
        %1509 = vmatprep.subr.mxu0 0.0
        %1510 = vmatpush2.msra.mxu0 0.0
        %1511 = vmatprep.subr.mxu0 0.0
        %1512 = vmatpush2.msra.mxu0 0.0
        %1513 = vmatprep.subr.mxu0 0.0
        %1514 = vmatpush2.msra.mxu0 0.0
        %1515 = vmatprep.subr.mxu0 0.0
        %1516 = vmatpush2.msra.mxu0 0.0
        %1517 = vmatprep.subr.mxu0 0.0
        %1518 = vmatpush2.msra.mxu0 0.0
        %1519 = vmatprep.subr.mxu0 0.0
        %1520 = vmatpush2.msra.mxu0 0.0
        %1521 = vmatprep.subr.mxu0 0.0
        %1522 = vmatpush2.msra.mxu0 0.0
        %1523 = vmatprep.subr.mxu0 0.0
        %1524 = vmatpush2.msra.mxu0 0.0
        %1525 = vmatprep.subr.mxu0 0.0
        %1526 = vmatpush2.msra.mxu0 0.0
        %1527 = vmatprep.subr.mxu0 0.0
        %1528 = vmatpush2.msra.mxu0 0.0
        %1529 = vmatprep.subr.mxu0 0.0
        %1530 = vmatpush2.msra.mxu0 0.0
        %1531 = vmatprep.subr.mxu0 0.0
        %1532 = vmatpush2.msra.mxu0 0.0
        %1533 = vmatprep.mubr.f32.mxu0 0.0
        %1534 = vmatmul.mubr.f32.gmra.mxu0 %v1404
        %v1535 = vpop.f32.mrf.mxu0
        %v1536 = vadd.f32 0.0, %v1535
        %v1537 = vpop.f32.mrf.mxu0
        %v1538 = vadd.f32 0.0, %v1537
        %1539 = vdwg.mxu0
        %1540 = vmatprep.subr.mxu0 %v1468
        %1541 = vmatpush1.msra.mxu0 %v1467
        %1542 = vmatprep.subr.mxu0 %v1464
        %1543 = vmatpush1.msra.mxu0 %v1463
        %1544 = vmatprep.subr.mxu0 %v1460
        %1545 = vmatpush1.msra.mxu0 %v1459
        %1546 = vmatprep.subr.mxu0 %v1456
        %1547 = vmatpush1.msra.mxu0 %v1455
        %1548 = vmatprep.subr.mxu0 %v1452
        %1549 = vmatpush1.msra.mxu0 %v1451
        %1550 = vmatprep.subr.mxu0 %v1448
        %1551 = vmatpush1.msra.mxu0 %v1447
        %1552 = vmatprep.subr.mxu0 %v1444
        %1553 = vmatpush1.msra.mxu0 %v1443
        %1554 = vmatprep.subr.mxu0 %v1440
        %1555 = vmatpush1.msra.mxu0 %v1439
        %1556 = vmatprep.subr.mxu0 %v1436
        %1557 = vmatpush1.msra.mxu0 %v1435
        %1558 = vmatprep.subr.mxu0 %v1432
        %1559 = vmatpush1.msra.mxu0 %v1431
        %1560 = vmatprep.subr.mxu0 %v1428
        %1561 = vmatpush1.msra.mxu0 %v1427
        %1562 = vmatprep.subr.mxu0 %v1424
        %1563 = vmatpush1.msra.mxu0 %v1423
        %1564 = vmatprep.subr.mxu0 %v1420
        %1565 = vmatpush1.msra.mxu0 %v1419
        %1566 = vmatprep.subr.mxu0 %v1416
        %1567 = vmatpush1.msra.mxu0 %v1415
        %1568 = vmatprep.subr.mxu0 %v1412
        %1569 = vmatpush1.msra.mxu0 %v1411
        %1570 = vmatprep.subr.mxu0 %v1408
        %1571 = vmatpush1.msra.mxu0 %v1407
        %1572 = vmatprep.subr.mxu0 0.0
        %1573 = vmatpush2.msra.mxu0 0.0
        %1574 = vmatprep.subr.mxu0 0.0
        %1575 = vmatpush2.msra.mxu0 0.0
        %1576 = vmatprep.subr.mxu0 0.0
        %1577 = vmatpush2.msra.mxu0 0.0
        %1578 = vmatprep.subr.mxu0 0.0
        %1579 = vmatpush2.msra.mxu0 0.0
        %1580 = vmatprep.subr.mxu0 0.0
        %1581 = vmatpush2.msra.mxu0 0.0
        %1582 = vmatprep.subr.mxu0 0.0
        %1583 = vmatpush2.msra.mxu0 0.0
        %1584 = vmatprep.subr.mxu0 0.0
        %1585 = vmatpush2.msra.mxu0 0.0
        %1586 = vmatprep.subr.mxu0 0.0
        %1587 = vmatpush2.msra.mxu0 0.0
        %1588 = vmatprep.subr.mxu0 0.0
        %1589 = vmatpush2.msra.mxu0 0.0
        %1590 = vmatprep.subr.mxu0 0.0
        %1591 = vmatpush2.msra.mxu0 0.0
        %1592 = vmatprep.subr.mxu0 0.0
        %1593 = vmatpush2.msra.mxu0 0.0
        %1594 = vmatprep.subr.mxu0 0.0
        %1595 = vmatpush2.msra.mxu0 0.0
        %1596 = vmatprep.subr.mxu0 0.0
        %1597 = vmatpush2.msra.mxu0 0.0
        %1598 = vmatprep.subr.mxu0 0.0
        %1599 = vmatpush2.msra.mxu0 0.0
        %1600 = vmatprep.subr.mxu0 0.0
        %1601 = vmatpush2.msra.mxu0 0.0
        %1602 = vmatprep.subr.mxu0 0.0
        %1603 = vmatpush2.msra.mxu0 0.0
        %1604 = vmatprep.mubr.f32.mxu0 0.0
        %1605 = vmatmul.mubr.f32.gmra.mxu0 %v1404
        %v1606 = vpop.f32.mrf.mxu0
        %v1607 = vadd.f32 0.0, %v1606
        %v1608 = vpop.f32.mrf.mxu0
        %v1609 = vadd.f32 0.0, %v1608
        %1610 = vdwg.mxu0
        %v1611 = vadd.f32 %v1400, %v1536
        %v1612 = vadd.f32 %v1401, %v1538
        %v1613 = vadd.f32 %v1402, %v1607
        %v1614 = vadd.f32 %v1403, %v1609
        %v1615 = vxor.u32 %v1611, 2147483648
        %v1616 = vmul.f32 %v1615, 1.442695
        %v1617 = vpow.pop %v1616
        %v1618 = vadd.f32 %v1617, 1.0
        %v1619 = vrcp.pop %v1618
        %v1620 = vmul.f32 1.0, %v1619
        %v1621 = vxor.u32 %v1612, 2147483648
        %v1622 = vmul.f32 %v1621, 1.442695
        %v1623 = vpow.pop %v1622
        %v1624 = vadd.f32 %v1623, 1.0
        %v1625 = vrcp.pop %v1624
        %v1626 = vmul.f32 1.0, %v1625
        %v1627 = vtanh.pop %v1613
        %v1628 = vxor.u32 %v1614, 2147483648
        %v1629 = vmul.f32 %v1628, 1.442695
        %v1630 = vpow.pop %v1629
        %v1631 = vadd.f32 %v1630, 1.0
        %v1632 = vrcp.pop %v1631
        %v1633 = vmul.f32 1.0, %v1632
        %v1634 = vld [vmem:[#allocation4] sm:$0xff]
        %v1635 = vmul.f32 %v1626, %v1634
        %v1636 = vmul.f32 %v1620, %v1627
        %v1637 = vadd.f32 %v1635, %v1636
        %1638 = vst [vmem:[#allocation4] sm:$0xff] %v1637
        %v1639 = vtanh.pop %v1637
        %v1640 = vmul.f32 %v1633, %v1639
        %1641 = vst [vmem:[#allocation3] sm:$0xff] %v1640
      $region65: #{tpu_custom_call.1} parent=48 // pred_fallthru
        _
      %s1642 = sadd.s32 %s71, 5
      %p1643 = scmp.lt.s32.totalorder %s1642, %s70
      // Predicated region
      $region66: #{tpu_custom_call.1} parent=48 // pred_check
        %p1644 = pneg %p1643
      $region67: #{tpu_custom_call.1} parent=48 // pred_check_branch
        %1646 = sbr.rel (%p1644) target = $region69
      $region68: #{tpu_custom_call.1} parent=48 // pred_region
        %v1647 = vld [vmem:[#allocation2 + $0xa0] sm:$0xff]
        %v1648 = vld [vmem:[#allocation2 + $0xa8] sm:$0xff]
        %v1649 = vld [vmem:[#allocation2 + $0xb0] sm:$0xff]
        %v1650 = vld [vmem:[#allocation2 + $0xb8] sm:$0xff]
        %v1651 = vld [vmem:[#allocation3] sm:$0xff]
        %v1652 = vld [vmem:[#allocation10] sm:$0xff]
        %v1653 = vld [vmem:[#allocation10 + $0x8] sm:$0xff]
        %v1654 = vld [vmem:[#allocation10 + $0x10] sm:$0xff]
        %v1655 = vld [vmem:[#allocation10 + $0x18] sm:$0xff]
        %v1656 = vld [vmem:[#allocation10 + $0x20] sm:$0xff]
        %v1657 = vld [vmem:[#allocation10 + $0x28] sm:$0xff]
        %v1658 = vld [vmem:[#allocation10 + $0x30] sm:$0xff]
        %v1659 = vld [vmem:[#allocation10 + $0x38] sm:$0xff]
        %v1660 = vld [vmem:[#allocation10 + $0x40] sm:$0xff]
        %v1661 = vld [vmem:[#allocation10 + $0x48] sm:$0xff]
        %v1662 = vld [vmem:[#allocation10 + $0x50] sm:$0xff]
        %v1663 = vld [vmem:[#allocation10 + $0x58] sm:$0xff]
        %v1664 = vld [vmem:[#allocation10 + $0x60] sm:$0xff]
        %v1665 = vld [vmem:[#allocation10 + $0x68] sm:$0xff]
        %v1666 = vld [vmem:[#allocation10 + $0x70] sm:$0xff]
        %v1667 = vld [vmem:[#allocation10 + $0x78] sm:$0xff]
        %v1668 = vld [vmem:[#allocation10 + $0x80] sm:$0xff]
        %v1669 = vld [vmem:[#allocation10 + $0x88] sm:$0xff]
        %v1670 = vld [vmem:[#allocation10 + $0x90] sm:$0xff]
        %v1671 = vld [vmem:[#allocation10 + $0x98] sm:$0xff]
        %v1672 = vld [vmem:[#allocation10 + $0xa0] sm:$0xff]
        %v1673 = vld [vmem:[#allocation10 + $0xa8] sm:$0xff]
        %v1674 = vld [vmem:[#allocation10 + $0xb0] sm:$0xff]
        %v1675 = vld [vmem:[#allocation10 + $0xb8] sm:$0xff]
        %v1676 = vld [vmem:[#allocation10 + $0xc0] sm:$0xff]
        %v1677 = vld [vmem:[#allocation10 + $0xc8] sm:$0xff]
        %v1678 = vld [vmem:[#allocation10 + $0xd0] sm:$0xff]
        %v1679 = vld [vmem:[#allocation10 + $0xd8] sm:$0xff]
        %v1680 = vld [vmem:[#allocation10 + $0xe0] sm:$0xff]
        %v1681 = vld [vmem:[#allocation10 + $0xe8] sm:$0xff]
        %v1682 = vld [vmem:[#allocation10 + $0xf0] sm:$0xff]
        %v1683 = vld [vmem:[#allocation10 + $0xf8] sm:$0xff]
        %v1684 = vld [vmem:[#allocation10 + $0x100] sm:$0xff]
        %v1685 = vld [vmem:[#allocation10 + $0x108] sm:$0xff]
        %v1686 = vld [vmem:[#allocation10 + $0x110] sm:$0xff]
        %v1687 = vld [vmem:[#allocation10 + $0x118] sm:$0xff]
        %v1688 = vld [vmem:[#allocation10 + $0x120] sm:$0xff]
        %v1689 = vld [vmem:[#allocation10 + $0x128] sm:$0xff]
        %v1690 = vld [vmem:[#allocation10 + $0x130] sm:$0xff]
        %v1691 = vld [vmem:[#allocation10 + $0x138] sm:$0xff]
        %v1692 = vld [vmem:[#allocation10 + $0x140] sm:$0xff]
        %v1693 = vld [vmem:[#allocation10 + $0x148] sm:$0xff]
        %v1694 = vld [vmem:[#allocation10 + $0x150] sm:$0xff]
        %v1695 = vld [vmem:[#allocation10 + $0x158] sm:$0xff]
        %v1696 = vld [vmem:[#allocation10 + $0x160] sm:$0xff]
        %v1697 = vld [vmem:[#allocation10 + $0x168] sm:$0xff]
        %v1698 = vld [vmem:[#allocation10 + $0x170] sm:$0xff]
        %v1699 = vld [vmem:[#allocation10 + $0x178] sm:$0xff]
        %v1700 = vld [vmem:[#allocation10 + $0x180] sm:$0xff]
        %v1701 = vld [vmem:[#allocation10 + $0x188] sm:$0xff]
        %v1702 = vld [vmem:[#allocation10 + $0x190] sm:$0xff]
        %v1703 = vld [vmem:[#allocation10 + $0x198] sm:$0xff]
        %v1704 = vld [vmem:[#allocation10 + $0x1a0] sm:$0xff]
        %v1705 = vld [vmem:[#allocation10 + $0x1a8] sm:$0xff]
        %v1706 = vld [vmem:[#allocation10 + $0x1b0] sm:$0xff]
        %v1707 = vld [vmem:[#allocation10 + $0x1b8] sm:$0xff]
        %v1708 = vld [vmem:[#allocation10 + $0x1c0] sm:$0xff]
        %v1709 = vld [vmem:[#allocation10 + $0x1c8] sm:$0xff]
        %v1710 = vld [vmem:[#allocation10 + $0x1d0] sm:$0xff]
        %v1711 = vld [vmem:[#allocation10 + $0x1d8] sm:$0xff]
        %v1712 = vld [vmem:[#allocation10 + $0x1e0] sm:$0xff]
        %v1713 = vld [vmem:[#allocation10 + $0x1e8] sm:$0xff]
        %v1714 = vld [vmem:[#allocation10 + $0x1f0] sm:$0xff]
        %v1715 = vld [vmem:[#allocation10 + $0x1f8] sm:$0xff]
        %1716 = vmatprep.subr.mxu0 %v1713
        %1717 = vmatpush1.msra.mxu0 %v1712
        %1718 = vmatprep.subr.mxu0 %v1709
        %1719 = vmatpush1.msra.mxu0 %v1708
        %1720 = vmatprep.subr.mxu0 %v1705
        %1721 = vmatpush1.msra.mxu0 %v1704
        %1722 = vmatprep.subr.mxu0 %v1701
        %1723 = vmatpush1.msra.mxu0 %v1700
        %1724 = vmatprep.subr.mxu0 %v1697
        %1725 = vmatpush1.msra.mxu0 %v1696
        %1726 = vmatprep.subr.mxu0 %v1693
        %1727 = vmatpush1.msra.mxu0 %v1692
        %1728 = vmatprep.subr.mxu0 %v1689
        %1729 = vmatpush1.msra.mxu0 %v1688
        %1730 = vmatprep.subr.mxu0 %v1685
        %1731 = vmatpush1.msra.mxu0 %v1684
        %1732 = vmatprep.subr.mxu0 %v1681
        %1733 = vmatpush1.msra.mxu0 %v1680
        %1734 = vmatprep.subr.mxu0 %v1677
        %1735 = vmatpush1.msra.mxu0 %v1676
        %1736 = vmatprep.subr.mxu0 %v1673
        %1737 = vmatpush1.msra.mxu0 %v1672
        %1738 = vmatprep.subr.mxu0 %v1669
        %1739 = vmatpush1.msra.mxu0 %v1668
        %1740 = vmatprep.subr.mxu0 %v1665
        %1741 = vmatpush1.msra.mxu0 %v1664
        %1742 = vmatprep.subr.mxu0 %v1661
        %1743 = vmatpush1.msra.mxu0 %v1660
        %1744 = vmatprep.subr.mxu0 %v1657
        %1745 = vmatpush1.msra.mxu0 %v1656
        %1746 = vmatprep.subr.mxu0 %v1653
        %1747 = vmatpush1.msra.mxu0 %v1652
        %1748 = vmatprep.subr.mxu0 0.0
        %1749 = vmatpush2.msra.mxu0 0.0
        %1750 = vmatprep.subr.mxu0 0.0
        %1751 = vmatpush2.msra.mxu0 0.0
        %1752 = vmatprep.subr.mxu0 0.0
        %1753 = vmatpush2.msra.mxu0 0.0
        %1754 = vmatprep.subr.mxu0 0.0
        %1755 = vmatpush2.msra.mxu0 0.0
        %1756 = vmatprep.subr.mxu0 0.0
        %1757 = vmatpush2.msra.mxu0 0.0
        %1758 = vmatprep.subr.mxu0 0.0
        %1759 = vmatpush2.msra.mxu0 0.0
        %1760 = vmatprep.subr.mxu0 0.0
        %1761 = vmatpush2.msra.mxu0 0.0
        %1762 = vmatprep.subr.mxu0 0.0
        %1763 = vmatpush2.msra.mxu0 0.0
        %1764 = vmatprep.subr.mxu0 0.0
        %1765 = vmatpush2.msra.mxu0 0.0
        %1766 = vmatprep.subr.mxu0 0.0
        %1767 = vmatpush2.msra.mxu0 0.0
        %1768 = vmatprep.subr.mxu0 0.0
        %1769 = vmatpush2.msra.mxu0 0.0
        %1770 = vmatprep.subr.mxu0 0.0
        %1771 = vmatpush2.msra.mxu0 0.0
        %1772 = vmatprep.subr.mxu0 0.0
        %1773 = vmatpush2.msra.mxu0 0.0
        %1774 = vmatprep.subr.mxu0 0.0
        %1775 = vmatpush2.msra.mxu0 0.0
        %1776 = vmatprep.subr.mxu0 0.0
        %1777 = vmatpush2.msra.mxu0 0.0
        %1778 = vmatprep.subr.mxu0 0.0
        %1779 = vmatpush2.msra.mxu0 0.0
        %1780 = vmatprep.mubr.f32.mxu0 0.0
        %1781 = vmatmul.mubr.f32.gmra.mxu0 %v1651
        %v1782 = vpop.f32.mrf.mxu0
        %v1783 = vadd.f32 0.0, %v1782
        %v1784 = vpop.f32.mrf.mxu0
        %v1785 = vadd.f32 0.0, %v1784
        %1786 = vdwg.mxu0
        %1787 = vmatprep.subr.mxu0 %v1715
        %1788 = vmatpush1.msra.mxu0 %v1714
        %1789 = vmatprep.subr.mxu0 %v1711
        %1790 = vmatpush1.msra.mxu0 %v1710
        %1791 = vmatprep.subr.mxu0 %v1707
        %1792 = vmatpush1.msra.mxu0 %v1706
        %1793 = vmatprep.subr.mxu0 %v1703
        %1794 = vmatpush1.msra.mxu0 %v1702
        %1795 = vmatprep.subr.mxu0 %v1699
        %1796 = vmatpush1.msra.mxu0 %v1698
        %1797 = vmatprep.subr.mxu0 %v1695
        %1798 = vmatpush1.msra.mxu0 %v1694
        %1799 = vmatprep.subr.mxu0 %v1691
        %1800 = vmatpush1.msra.mxu0 %v1690
        %1801 = vmatprep.subr.mxu0 %v1687
        %1802 = vmatpush1.msra.mxu0 %v1686
        %1803 = vmatprep.subr.mxu0 %v1683
        %1804 = vmatpush1.msra.mxu0 %v1682
        %1805 = vmatprep.subr.mxu0 %v1679
        %1806 = vmatpush1.msra.mxu0 %v1678
        %1807 = vmatprep.subr.mxu0 %v1675
        %1808 = vmatpush1.msra.mxu0 %v1674
        %1809 = vmatprep.subr.mxu0 %v1671
        %1810 = vmatpush1.msra.mxu0 %v1670
        %1811 = vmatprep.subr.mxu0 %v1667
        %1812 = vmatpush1.msra.mxu0 %v1666
        %1813 = vmatprep.subr.mxu0 %v1663
        %1814 = vmatpush1.msra.mxu0 %v1662
        %1815 = vmatprep.subr.mxu0 %v1659
        %1816 = vmatpush1.msra.mxu0 %v1658
        %1817 = vmatprep.subr.mxu0 %v1655
        %1818 = vmatpush1.msra.mxu0 %v1654
        %1819 = vmatprep.subr.mxu0 0.0
        %1820 = vmatpush2.msra.mxu0 0.0
        %1821 = vmatprep.subr.mxu0 0.0
        %1822 = vmatpush2.msra.mxu0 0.0
        %1823 = vmatprep.subr.mxu0 0.0
        %1824 = vmatpush2.msra.mxu0 0.0
        %1825 = vmatprep.subr.mxu0 0.0
        %1826 = vmatpush2.msra.mxu0 0.0
        %1827 = vmatprep.subr.mxu0 0.0
        %1828 = vmatpush2.msra.mxu0 0.0
        %1829 = vmatprep.subr.mxu0 0.0
        %1830 = vmatpush2.msra.mxu0 0.0
        %1831 = vmatprep.subr.mxu0 0.0
        %1832 = vmatpush2.msra.mxu0 0.0
        %1833 = vmatprep.subr.mxu0 0.0
        %1834 = vmatpush2.msra.mxu0 0.0
        %1835 = vmatprep.subr.mxu0 0.0
        %1836 = vmatpush2.msra.mxu0 0.0
        %1837 = vmatprep.subr.mxu0 0.0
        %1838 = vmatpush2.msra.mxu0 0.0
        %1839 = vmatprep.subr.mxu0 0.0
        %1840 = vmatpush2.msra.mxu0 0.0
        %1841 = vmatprep.subr.mxu0 0.0
        %1842 = vmatpush2.msra.mxu0 0.0
        %1843 = vmatprep.subr.mxu0 0.0
        %1844 = vmatpush2.msra.mxu0 0.0
        %1845 = vmatprep.subr.mxu0 0.0
        %1846 = vmatpush2.msra.mxu0 0.0
        %1847 = vmatprep.subr.mxu0 0.0
        %1848 = vmatpush2.msra.mxu0 0.0
        %1849 = vmatprep.subr.mxu0 0.0
        %1850 = vmatpush2.msra.mxu0 0.0
        %1851 = vmatprep.mubr.f32.mxu0 0.0
        %1852 = vmatmul.mubr.f32.gmra.mxu0 %v1651
        %v1853 = vpop.f32.mrf.mxu0
        %v1854 = vadd.f32 0.0, %v1853
        %v1855 = vpop.f32.mrf.mxu0
        %v1856 = vadd.f32 0.0, %v1855
        %1857 = vdwg.mxu0
        %v1858 = vadd.f32 %v1647, %v1783
        %v1859 = vadd.f32 %v1648, %v1785
        %v1860 = vadd.f32 %v1649, %v1854
        %v1861 = vadd.f32 %v1650, %v1856
        %v1862 = vxor.u32 %v1858, 2147483648
        %v1863 = vmul.f32 %v1862, 1.442695
        %v1864 = vpow.pop %v1863
        %v1865 = vadd.f32 %v1864, 1.0
        %v1866 = vrcp.pop %v1865
        %v1867 = vmul.f32 1.0, %v1866
        %v1868 = vxor.u32 %v1859, 2147483648
        %v1869 = vmul.f32 %v1868, 1.442695
        %v1870 = vpow.pop %v1869
        %v1871 = vadd.f32 %v1870, 1.0
        %v1872 = vrcp.pop %v1871
        %v1873 = vmul.f32 1.0, %v1872
        %v1874 = vtanh.pop %v1860
        %v1875 = vxor.u32 %v1861, 2147483648
        %v1876 = vmul.f32 %v1875, 1.442695
        %v1877 = vpow.pop %v1876
        %v1878 = vadd.f32 %v1877, 1.0
        %v1879 = vrcp.pop %v1878
        %v1880 = vmul.f32 1.0, %v1879
        %v1881 = vld [vmem:[#allocation4] sm:$0xff]
        %v1882 = vmul.f32 %v1873, %v1881
        %v1883 = vmul.f32 %v1867, %v1874
        %v1884 = vadd.f32 %v1882, %v1883
        %1885 = vst [vmem:[#allocation4] sm:$0xff] %v1884
        %v1886 = vtanh.pop %v1884
        %v1887 = vmul.f32 %v1880, %v1886
        %1888 = vst [vmem:[#allocation3] sm:$0xff] %v1887
      $region69: #{tpu_custom_call.1} parent=48 // pred_fallthru
        _
      %s1889 = sadd.s32 %s71, 6
      %p1890 = scmp.lt.s32.totalorder %s1889, %s70
      // Predicated region
      $region70: #{tpu_custom_call.1} parent=48 // pred_check
        %p1891 = pneg %p1890
      $region71: #{tpu_custom_call.1} parent=48 // pred_check_branch
        %1893 = sbr.rel (%p1891) target = $region73
      $region72: #{tpu_custom_call.1} parent=48 // pred_region
        %v1894 = vld [vmem:[#allocation2 + $0xc0] sm:$0xff]
        %v1895 = vld [vmem:[#allocation2 + $0xc8] sm:$0xff]
        %v1896 = vld [vmem:[#allocation2 + $0xd0] sm:$0xff]
        %v1897 = vld [vmem:[#allocation2 + $0xd8] sm:$0xff]
        %v1898 = vld [vmem:[#allocation3] sm:$0xff]
        %v1899 = vld [vmem:[#allocation10] sm:$0xff]
        %v1900 = vld [vmem:[#allocation10 + $0x8] sm:$0xff]
        %v1901 = vld [vmem:[#allocation10 + $0x10] sm:$0xff]
        %v1902 = vld [vmem:[#allocation10 + $0x18] sm:$0xff]
        %v1903 = vld [vmem:[#allocation10 + $0x20] sm:$0xff]
        %v1904 = vld [vmem:[#allocation10 + $0x28] sm:$0xff]
        %v1905 = vld [vmem:[#allocation10 + $0x30] sm:$0xff]
        %v1906 = vld [vmem:[#allocation10 + $0x38] sm:$0xff]
        %v1907 = vld [vmem:[#allocation10 + $0x40] sm:$0xff]
        %v1908 = vld [vmem:[#allocation10 + $0x48] sm:$0xff]
        %v1909 = vld [vmem:[#allocation10 + $0x50] sm:$0xff]
        %v1910 = vld [vmem:[#allocation10 + $0x58] sm:$0xff]
        %v1911 = vld [vmem:[#allocation10 + $0x60] sm:$0xff]
        %v1912 = vld [vmem:[#allocation10 + $0x68] sm:$0xff]
        %v1913 = vld [vmem:[#allocation10 + $0x70] sm:$0xff]
        %v1914 = vld [vmem:[#allocation10 + $0x78] sm:$0xff]
        %v1915 = vld [vmem:[#allocation10 + $0x80] sm:$0xff]
        %v1916 = vld [vmem:[#allocation10 + $0x88] sm:$0xff]
        %v1917 = vld [vmem:[#allocation10 + $0x90] sm:$0xff]
        %v1918 = vld [vmem:[#allocation10 + $0x98] sm:$0xff]
        %v1919 = vld [vmem:[#allocation10 + $0xa0] sm:$0xff]
        %v1920 = vld [vmem:[#allocation10 + $0xa8] sm:$0xff]
        %v1921 = vld [vmem:[#allocation10 + $0xb0] sm:$0xff]
        %v1922 = vld [vmem:[#allocation10 + $0xb8] sm:$0xff]
        %v1923 = vld [vmem:[#allocation10 + $0xc0] sm:$0xff]
        %v1924 = vld [vmem:[#allocation10 + $0xc8] sm:$0xff]
        %v1925 = vld [vmem:[#allocation10 + $0xd0] sm:$0xff]
        %v1926 = vld [vmem:[#allocation10 + $0xd8] sm:$0xff]
        %v1927 = vld [vmem:[#allocation10 + $0xe0] sm:$0xff]
        %v1928 = vld [vmem:[#allocation10 + $0xe8] sm:$0xff]
        %v1929 = vld [vmem:[#allocation10 + $0xf0] sm:$0xff]
        %v1930 = vld [vmem:[#allocation10 + $0xf8] sm:$0xff]
        %v1931 = vld [vmem:[#allocation10 + $0x100] sm:$0xff]
        %v1932 = vld [vmem:[#allocation10 + $0x108] sm:$0xff]
        %v1933 = vld [vmem:[#allocation10 + $0x110] sm:$0xff]
        %v1934 = vld [vmem:[#allocation10 + $0x118] sm:$0xff]
        %v1935 = vld [vmem:[#allocation10 + $0x120] sm:$0xff]
        %v1936 = vld [vmem:[#allocation10 + $0x128] sm:$0xff]
        %v1937 = vld [vmem:[#allocation10 + $0x130] sm:$0xff]
        %v1938 = vld [vmem:[#allocation10 + $0x138] sm:$0xff]
        %v1939 = vld [vmem:[#allocation10 + $0x140] sm:$0xff]
        %v1940 = vld [vmem:[#allocation10 + $0x148] sm:$0xff]
        %v1941 = vld [vmem:[#allocation10 + $0x150] sm:$0xff]
        %v1942 = vld [vmem:[#allocation10 + $0x158] sm:$0xff]
        %v1943 = vld [vmem:[#allocation10 + $0x160] sm:$0xff]
        %v1944 = vld [vmem:[#allocation10 + $0x168] sm:$0xff]
        %v1945 = vld [vmem:[#allocation10 + $0x170] sm:$0xff]
        %v1946 = vld [vmem:[#allocation10 + $0x178] sm:$0xff]
        %v1947 = vld [vmem:[#allocation10 + $0x180] sm:$0xff]
        %v1948 = vld [vmem:[#allocation10 + $0x188] sm:$0xff]
        %v1949 = vld [vmem:[#allocation10 + $0x190] sm:$0xff]
        %v1950 = vld [vmem:[#allocation10 + $0x198] sm:$0xff]
        %v1951 = vld [vmem:[#allocation10 + $0x1a0] sm:$0xff]
        %v1952 = vld [vmem:[#allocation10 + $0x1a8] sm:$0xff]
        %v1953 = vld [vmem:[#allocation10 + $0x1b0] sm:$0xff]
        %v1954 = vld [vmem:[#allocation10 + $0x1b8] sm:$0xff]
        %v1955 = vld [vmem:[#allocation10 + $0x1c0] sm:$0xff]
        %v1956 = vld [vmem:[#allocation10 + $0x1c8] sm:$0xff]
        %v1957 = vld [vmem:[#allocation10 + $0x1d0] sm:$0xff]
        %v1958 = vld [vmem:[#allocation10 + $0x1d8] sm:$0xff]
        %v1959 = vld [vmem:[#allocation10 + $0x1e0] sm:$0xff]
        %v1960 = vld [vmem:[#allocation10 + $0x1e8] sm:$0xff]
        %v1961 = vld [vmem:[#allocation10 + $0x1f0] sm:$0xff]
        %v1962 = vld [vmem:[#allocation10 + $0x1f8] sm:$0xff]
        %1963 = vmatprep.subr.mxu0 %v1960
        %1964 = vmatpush1.msra.mxu0 %v1959
        %1965 = vmatprep.subr.mxu0 %v1956
        %1966 = vmatpush1.msra.mxu0 %v1955
        %1967 = vmatprep.subr.mxu0 %v1952
        %1968 = vmatpush1.msra.mxu0 %v1951
        %1969 = vmatprep.subr.mxu0 %v1948
        %1970 = vmatpush1.msra.mxu0 %v1947
        %1971 = vmatprep.subr.mxu0 %v1944
        %1972 = vmatpush1.msra.mxu0 %v1943
        %1973 = vmatprep.subr.mxu0 %v1940
        %1974 = vmatpush1.msra.mxu0 %v1939
        %1975 = vmatprep.subr.mxu0 %v1936
        %1976 = vmatpush1.msra.mxu0 %v1935
        %1977 = vmatprep.subr.mxu0 %v1932
        %1978 = vmatpush1.msra.mxu0 %v1931
        %1979 = vmatprep.subr.mxu0 %v1928
        %1980 = vmatpush1.msra.mxu0 %v1927
        %1981 = vmatprep.subr.mxu0 %v1924
        %1982 = vmatpush1.msra.mxu0 %v1923
        %1983 = vmatprep.subr.mxu0 %v1920
        %1984 = vmatpush1.msra.mxu0 %v1919
        %1985 = vmatprep.subr.mxu0 %v1916
        %1986 = vmatpush1.msra.mxu0 %v1915
        %1987 = vmatprep.subr.mxu0 %v1912
        %1988 = vmatpush1.msra.mxu0 %v1911
        %1989 = vmatprep.subr.mxu0 %v1908
        %1990 = vmatpush1.msra.mxu0 %v1907
        %1991 = vmatprep.subr.mxu0 %v1904
        %1992 = vmatpush1.msra.mxu0 %v1903
        %1993 = vmatprep.subr.mxu0 %v1900
        %1994 = vmatpush1.msra.mxu0 %v1899
        %1995 = vmatprep.subr.mxu0 0.0
        %1996 = vmatpush2.msra.mxu0 0.0
        %1997 = vmatprep.subr.mxu0 0.0
        %1998 = vmatpush2.msra.mxu0 0.0
        %1999 = vmatprep.subr.mxu0 0.0
        %2000 = vmatpush2.msra.mxu0 0.0
        %2001 = vmatprep.subr.mxu0 0.0
        %2002 = vmatpush2.msra.mxu0 0.0
        %2003 = vmatprep.subr.mxu0 0.0
        %2004 = vmatpush2.msra.mxu0 0.0
        %2005 = vmatprep.subr.mxu0 0.0
        %2006 = vmatpush2.msra.mxu0 0.0
        %2007 = vmatprep.subr.mxu0 0.0
        %2008 = vmatpush2.msra.mxu0 0.0
        %2009 = vmatprep.subr.mxu0 0.0
        %2010 = vmatpush2.msra.mxu0 0.0
        %2011 = vmatprep.subr.mxu0 0.0
        %2012 = vmatpush2.msra.mxu0 0.0
        %2013 = vmatprep.subr.mxu0 0.0
        %2014 = vmatpush2.msra.mxu0 0.0
        %2015 = vmatprep.subr.mxu0 0.0
        %2016 = vmatpush2.msra.mxu0 0.0
        %2017 = vmatprep.subr.mxu0 0.0
        %2018 = vmatpush2.msra.mxu0 0.0
        %2019 = vmatprep.subr.mxu0 0.0
        %2020 = vmatpush2.msra.mxu0 0.0
        %2021 = vmatprep.subr.mxu0 0.0
        %2022 = vmatpush2.msra.mxu0 0.0
        %2023 = vmatprep.subr.mxu0 0.0
        %2024 = vmatpush2.msra.mxu0 0.0
        %2025 = vmatprep.subr.mxu0 0.0
        %2026 = vmatpush2.msra.mxu0 0.0
        %2027 = vmatprep.mubr.f32.mxu0 0.0
        %2028 = vmatmul.mubr.f32.gmra.mxu0 %v1898
        %v2029 = vpop.f32.mrf.mxu0
        %v2030 = vadd.f32 0.0, %v2029
        %v2031 = vpop.f32.mrf.mxu0
        %v2032 = vadd.f32 0.0, %v2031
        %2033 = vdwg.mxu0
        %2034 = vmatprep.subr.mxu0 %v1962
        %2035 = vmatpush1.msra.mxu0 %v1961
        %2036 = vmatprep.subr.mxu0 %v1958
        %2037 = vmatpush1.msra.mxu0 %v1957
        %2038 = vmatprep.subr.mxu0 %v1954
        %2039 = vmatpush1.msra.mxu0 %v1953
        %2040 = vmatprep.subr.mxu0 %v1950
        %2041 = vmatpush1.msra.mxu0 %v1949
        %2042 = vmatprep.subr.mxu0 %v1946
        %2043 = vmatpush1.msra.mxu0 %v1945
        %2044 = vmatprep.subr.mxu0 %v1942
        %2045 = vmatpush1.msra.mxu0 %v1941
        %2046 = vmatprep.subr.mxu0 %v1938
        %2047 = vmatpush1.msra.mxu0 %v1937
        %2048 = vmatprep.subr.mxu0 %v1934
        %2049 = vmatpush1.msra.mxu0 %v1933
        %2050 = vmatprep.subr.mxu0 %v1930
        %2051 = vmatpush1.msra.mxu0 %v1929
        %2052 = vmatprep.subr.mxu0 %v1926
        %2053 = vmatpush1.msra.mxu0 %v1925
        %2054 = vmatprep.subr.mxu0 %v1922
        %2055 = vmatpush1.msra.mxu0 %v1921
        %2056 = vmatprep.subr.mxu0 %v1918
        %2057 = vmatpush1.msra.mxu0 %v1917
        %2058 = vmatprep.subr.mxu0 %v1914
        %2059 = vmatpush1.msra.mxu0 %v1913
        %2060 = vmatprep.subr.mxu0 %v1910
        %2061 = vmatpush1.msra.mxu0 %v1909
        %2062 = vmatprep.subr.mxu0 %v1906
        %2063 = vmatpush1.msra.mxu0 %v1905
        %2064 = vmatprep.subr.mxu0 %v1902
        %2065 = vmatpush1.msra.mxu0 %v1901
        %2066 = vmatprep.subr.mxu0 0.0
        %2067 = vmatpush2.msra.mxu0 0.0
        %2068 = vmatprep.subr.mxu0 0.0
        %2069 = vmatpush2.msra.mxu0 0.0
        %2070 = vmatprep.subr.mxu0 0.0
        %2071 = vmatpush2.msra.mxu0 0.0
        %2072 = vmatprep.subr.mxu0 0.0
        %2073 = vmatpush2.msra.mxu0 0.0
        %2074 = vmatprep.subr.mxu0 0.0
        %2075 = vmatpush2.msra.mxu0 0.0
        %2076 = vmatprep.subr.mxu0 0.0
        %2077 = vmatpush2.msra.mxu0 0.0
        %2078 = vmatprep.subr.mxu0 0.0
        %2079 = vmatpush2.msra.mxu0 0.0
        %2080 = vmatprep.subr.mxu0 0.0
        %2081 = vmatpush2.msra.mxu0 0.0
        %2082 = vmatprep.subr.mxu0 0.0
        %2083 = vmatpush2.msra.mxu0 0.0
        %2084 = vmatprep.subr.mxu0 0.0
        %2085 = vmatpush2.msra.mxu0 0.0
        %2086 = vmatprep.subr.mxu0 0.0
        %2087 = vmatpush2.msra.mxu0 0.0
        %2088 = vmatprep.subr.mxu0 0.0
        %2089 = vmatpush2.msra.mxu0 0.0
        %2090 = vmatprep.subr.mxu0 0.0
        %2091 = vmatpush2.msra.mxu0 0.0
        %2092 = vmatprep.subr.mxu0 0.0
        %2093 = vmatpush2.msra.mxu0 0.0
        %2094 = vmatprep.subr.mxu0 0.0
        %2095 = vmatpush2.msra.mxu0 0.0
        %2096 = vmatprep.subr.mxu0 0.0
        %2097 = vmatpush2.msra.mxu0 0.0
        %2098 = vmatprep.mubr.f32.mxu0 0.0
        %2099 = vmatmul.mubr.f32.gmra.mxu0 %v1898
        %v2100 = vpop.f32.mrf.mxu0
        %v2101 = vadd.f32 0.0, %v2100
        %v2102 = vpop.f32.mrf.mxu0
        %v2103 = vadd.f32 0.0, %v2102
        %2104 = vdwg.mxu0
        %v2105 = vadd.f32 %v1894, %v2030
        %v2106 = vadd.f32 %v1895, %v2032
        %v2107 = vadd.f32 %v1896, %v2101
        %v2108 = vadd.f32 %v1897, %v2103
        %v2109 = vxor.u32 %v2105, 2147483648
        %v2110 = vmul.f32 %v2109, 1.442695
        %v2111 = vpow.pop %v2110
        %v2112 = vadd.f32 %v2111, 1.0
        %v2113 = vrcp.pop %v2112
        %v2114 = vmul.f32 1.0, %v2113
        %v2115 = vxor.u32 %v2106, 2147483648
        %v2116 = vmul.f32 %v2115, 1.442695
        %v2117 = vpow.pop %v2116
        %v2118 = vadd.f32 %v2117, 1.0
        %v2119 = vrcp.pop %v2118
        %v2120 = vmul.f32 1.0, %v2119
        %v2121 = vtanh.pop %v2107
        %v2122 = vxor.u32 %v2108, 2147483648
        %v2123 = vmul.f32 %v2122, 1.442695
        %v2124 = vpow.pop %v2123
        %v2125 = vadd.f32 %v2124, 1.0
        %v2126 = vrcp.pop %v2125
        %v2127 = vmul.f32 1.0, %v2126
        %v2128 = vld [vmem:[#allocation4] sm:$0xff]
        %v2129 = vmul.f32 %v2120, %v2128
        %v2130 = vmul.f32 %v2114, %v2121
        %v2131 = vadd.f32 %v2129, %v2130
        %2132 = vst [vmem:[#allocation4] sm:$0xff] %v2131
        %v2133 = vtanh.pop %v2131
        %v2134 = vmul.f32 %v2127, %v2133
        %2135 = vst [vmem:[#allocation3] sm:$0xff] %v2134
      $region73: #{tpu_custom_call.1} parent=48 // pred_fallthru
        _
      %s2136 = sadd.s32 %s71, 7
      %p2137 = scmp.lt.s32.totalorder %s2136, %s70
      // Predicated region
      $region74: #{tpu_custom_call.1} parent=48 // pred_check
        %p2138 = pneg %p2137
      $region75: #{tpu_custom_call.1} parent=48 // pred_check_branch
        %2140 = sbr.rel (%p2138) target = $region77
      $region76: #{tpu_custom_call.1} parent=48 // pred_region
        %v2141 = vld [vmem:[#allocation2 + $0xe0] sm:$0xff]
        %v2142 = vld [vmem:[#allocation2 + $0xe8] sm:$0xff]
        %v2143 = vld [vmem:[#allocation2 + $0xf0] sm:$0xff]
        %v2144 = vld [vmem:[#allocation2 + $0xf8] sm:$0xff]
        %v2145 = vld [vmem:[#allocation3] sm:$0xff]
        %v2146 = vld [vmem:[#allocation10] sm:$0xff]
        %v2147 = vld [vmem:[#allocation10 + $0x8] sm:$0xff]
        %v2148 = vld [vmem:[#allocation10 + $0x10] sm:$0xff]
        %v2149 = vld [vmem:[#allocation10 + $0x18] sm:$0xff]
        %v2150 = vld [vmem:[#allocation10 + $0x20] sm:$0xff]
        %v2151 = vld [vmem:[#allocation10 + $0x28] sm:$0xff]
        %v2152 = vld [vmem:[#allocation10 + $0x30] sm:$0xff]
        %v2153 = vld [vmem:[#allocation10 + $0x38] sm:$0xff]
        %v2154 = vld [vmem:[#allocation10 + $0x40] sm:$0xff]
        %v2155 = vld [vmem:[#allocation10 + $0x48] sm:$0xff]
        %v2156 = vld [vmem:[#allocation10 + $0x50] sm:$0xff]
        %v2157 = vld [vmem:[#allocation10 + $0x58] sm:$0xff]
        %v2158 = vld [vmem:[#allocation10 + $0x60] sm:$0xff]
        %v2159 = vld [vmem:[#allocation10 + $0x68] sm:$0xff]
        %v2160 = vld [vmem:[#allocation10 + $0x70] sm:$0xff]
        %v2161 = vld [vmem:[#allocation10 + $0x78] sm:$0xff]
        %v2162 = vld [vmem:[#allocation10 + $0x80] sm:$0xff]
        %v2163 = vld [vmem:[#allocation10 + $0x88] sm:$0xff]
        %v2164 = vld [vmem:[#allocation10 + $0x90] sm:$0xff]
        %v2165 = vld [vmem:[#allocation10 + $0x98] sm:$0xff]
        %v2166 = vld [vmem:[#allocation10 + $0xa0] sm:$0xff]
        %v2167 = vld [vmem:[#allocation10 + $0xa8] sm:$0xff]
        %v2168 = vld [vmem:[#allocation10 + $0xb0] sm:$0xff]
        %v2169 = vld [vmem:[#allocation10 + $0xb8] sm:$0xff]
        %v2170 = vld [vmem:[#allocation10 + $0xc0] sm:$0xff]
        %v2171 = vld [vmem:[#allocation10 + $0xc8] sm:$0xff]
        %v2172 = vld [vmem:[#allocation10 + $0xd0] sm:$0xff]
        %v2173 = vld [vmem:[#allocation10 + $0xd8] sm:$0xff]
        %v2174 = vld [vmem:[#allocation10 + $0xe0] sm:$0xff]
        %v2175 = vld [vmem:[#allocation10 + $0xe8] sm:$0xff]
        %v2176 = vld [vmem:[#allocation10 + $0xf0] sm:$0xff]
        %v2177 = vld [vmem:[#allocation10 + $0xf8] sm:$0xff]
        %v2178 = vld [vmem:[#allocation10 + $0x100] sm:$0xff]
        %v2179 = vld [vmem:[#allocation10 + $0x108] sm:$0xff]
        %v2180 = vld [vmem:[#allocation10 + $0x110] sm:$0xff]
        %v2181 = vld [vmem:[#allocation10 + $0x118] sm:$0xff]
        %v2182 = vld [vmem:[#allocation10 + $0x120] sm:$0xff]
        %v2183 = vld [vmem:[#allocation10 + $0x128] sm:$0xff]
        %v2184 = vld [vmem:[#allocation10 + $0x130] sm:$0xff]
        %v2185 = vld [vmem:[#allocation10 + $0x138] sm:$0xff]
        %v2186 = vld [vmem:[#allocation10 + $0x140] sm:$0xff]
        %v2187 = vld [vmem:[#allocation10 + $0x148] sm:$0xff]
        %v2188 = vld [vmem:[#allocation10 + $0x150] sm:$0xff]
        %v2189 = vld [vmem:[#allocation10 + $0x158] sm:$0xff]
        %v2190 = vld [vmem:[#allocation10 + $0x160] sm:$0xff]
        %v2191 = vld [vmem:[#allocation10 + $0x168] sm:$0xff]
        %v2192 = vld [vmem:[#allocation10 + $0x170] sm:$0xff]
        %v2193 = vld [vmem:[#allocation10 + $0x178] sm:$0xff]
        %v2194 = vld [vmem:[#allocation10 + $0x180] sm:$0xff]
        %v2195 = vld [vmem:[#allocation10 + $0x188] sm:$0xff]
        %v2196 = vld [vmem:[#allocation10 + $0x190] sm:$0xff]
        %v2197 = vld [vmem:[#allocation10 + $0x198] sm:$0xff]
        %v2198 = vld [vmem:[#allocation10 + $0x1a0] sm:$0xff]
        %v2199 = vld [vmem:[#allocation10 + $0x1a8] sm:$0xff]
        %v2200 = vld [vmem:[#allocation10 + $0x1b0] sm:$0xff]
        %v2201 = vld [vmem:[#allocation10 + $0x1b8] sm:$0xff]
        %v2202 = vld [vmem:[#allocation10 + $0x1c0] sm:$0xff]
        %v2203 = vld [vmem:[#allocation10 + $0x1c8] sm:$0xff]
        %v2204 = vld [vmem:[#allocation10 + $0x1d0] sm:$0xff]
        %v2205 = vld [vmem:[#allocation10 + $0x1d8] sm:$0xff]
        %v2206 = vld [vmem:[#allocation10 + $0x1e0] sm:$0xff]
        %v2207 = vld [vmem:[#allocation10 + $0x1e8] sm:$0xff]
        %v2208 = vld [vmem:[#allocation10 + $0x1f0] sm:$0xff]
        %v2209 = vld [vmem:[#allocation10 + $0x1f8] sm:$0xff]
        %2210 = vmatprep.subr.mxu0 %v2207
        %2211 = vmatpush1.msra.mxu0 %v2206
        %2212 = vmatprep.subr.mxu0 %v2203
        %2213 = vmatpush1.msra.mxu0 %v2202
        %2214 = vmatprep.subr.mxu0 %v2199
        %2215 = vmatpush1.msra.mxu0 %v2198
        %2216 = vmatprep.subr.mxu0 %v2195
        %2217 = vmatpush1.msra.mxu0 %v2194
        %2218 = vmatprep.subr.mxu0 %v2191
        %2219 = vmatpush1.msra.mxu0 %v2190
        %2220 = vmatprep.subr.mxu0 %v2187
        %2221 = vmatpush1.msra.mxu0 %v2186
        %2222 = vmatprep.subr.mxu0 %v2183
        %2223 = vmatpush1.msra.mxu0 %v2182
        %2224 = vmatprep.subr.mxu0 %v2179
        %2225 = vmatpush1.msra.mxu0 %v2178
        %2226 = vmatprep.subr.mxu0 %v2175
        %2227 = vmatpush1.msra.mxu0 %v2174
        %2228 = vmatprep.subr.mxu0 %v2171
        %2229 = vmatpush1.msra.mxu0 %v2170
        %2230 = vmatprep.subr.mxu0 %v2167
        %2231 = vmatpush1.msra.mxu0 %v2166
        %2232 = vmatprep.subr.mxu0 %v2163
        %2233 = vmatpush1.msra.mxu0 %v2162
        %2234 = vmatprep.subr.mxu0 %v2159
        %2235 = vmatpush1.msra.mxu0 %v2158
        %2236 = vmatprep.subr.mxu0 %v2155
        %2237 = vmatpush1.msra.mxu0 %v2154
        %2238 = vmatprep.subr.mxu0 %v2151
        %2239 = vmatpush1.msra.mxu0 %v2150
        %2240 = vmatprep.subr.mxu0 %v2147
        %2241 = vmatpush1.msra.mxu0 %v2146
        %2242 = vmatprep.subr.mxu0 0.0
        %2243 = vmatpush2.msra.mxu0 0.0
        %2244 = vmatprep.subr.mxu0 0.0
        %2245 = vmatpush2.msra.mxu0 0.0
        %2246 = vmatprep.subr.mxu0 0.0
        %2247 = vmatpush2.msra.mxu0 0.0
        %2248 = vmatprep.subr.mxu0 0.0
        %2249 = vmatpush2.msra.mxu0 0.0
        %2250 = vmatprep.subr.mxu0 0.0
        %2251 = vmatpush2.msra.mxu0 0.0
        %2252 = vmatprep.subr.mxu0 0.0
        %2253 = vmatpush2.msra.mxu0 0.0
        %2254 = vmatprep.subr.mxu0 0.0
        %2255 = vmatpush2.msra.mxu0 0.0
        %2256 = vmatprep.subr.mxu0 0.0
        %2257 = vmatpush2.msra.mxu0 0.0
        %2258 = vmatprep.subr.mxu0 0.0
        %2259 = vmatpush2.msra.mxu0 0.0
        %2260 = vmatprep.subr.mxu0 0.0
        %2261 = vmatpush2.msra.mxu0 0.0
        %2262 = vmatprep.subr.mxu0 0.0
        %2263 = vmatpush2.msra.mxu0 0.0
        %2264 = vmatprep.subr.mxu0 0.0
        %2265 = vmatpush2.msra.mxu0 0.0
        %2266 = vmatprep.subr.mxu0 0.0
        %2267 = vmatpush2.msra.mxu0 0.0
        %2268 = vmatprep.subr.mxu0 0.0
        %2269 = vmatpush2.msra.mxu0 0.0
        %2270 = vmatprep.subr.mxu0 0.0
        %2271 = vmatpush2.msra.mxu0 0.0
        %2272 = vmatprep.subr.mxu0 0.0
        %2273 = vmatpush2.msra.mxu0 0.0
        %2274 = vmatprep.mubr.f32.mxu0 0.0
        %2275 = vmatmul.mubr.f32.gmra.mxu0 %v2145
        %v2276 = vpop.f32.mrf.mxu0
        %v2277 = vadd.f32 0.0, %v2276
        %v2278 = vpop.f32.mrf.mxu0
        %v2279 = vadd.f32 0.0, %v2278
        %2280 = vdwg.mxu0
        %2281 = vmatprep.subr.mxu0 %v2209
        %2282 = vmatpush1.msra.mxu0 %v2208
        %2283 = vmatprep.subr.mxu0 %v2205
        %2284 = vmatpush1.msra.mxu0 %v2204
        %2285 = vmatprep.subr.mxu0 %v2201
        %2286 = vmatpush1.msra.mxu0 %v2200
        %2287 = vmatprep.subr.mxu0 %v2197
        %2288 = vmatpush1.msra.mxu0 %v2196
        %2289 = vmatprep.subr.mxu0 %v2193
        %2290 = vmatpush1.msra.mxu0 %v2192
        %2291 = vmatprep.subr.mxu0 %v2189
        %2292 = vmatpush1.msra.mxu0 %v2188
        %2293 = vmatprep.subr.mxu0 %v2185
        %2294 = vmatpush1.msra.mxu0 %v2184
        %2295 = vmatprep.subr.mxu0 %v2181
        %2296 = vmatpush1.msra.mxu0 %v2180
        %2297 = vmatprep.subr.mxu0 %v2177
        %2298 = vmatpush1.msra.mxu0 %v2176
        %2299 = vmatprep.subr.mxu0 %v2173
        %2300 = vmatpush1.msra.mxu0 %v2172
        %2301 = vmatprep.subr.mxu0 %v2169
        %2302 = vmatpush1.msra.mxu0 %v2168
        %2303 = vmatprep.subr.mxu0 %v2165
        %2304 = vmatpush1.msra.mxu0 %v2164
        %2305 = vmatprep.subr.mxu0 %v2161
        %2306 = vmatpush1.msra.mxu0 %v2160
        %2307 = vmatprep.subr.mxu0 %v2157
        %2308 = vmatpush1.msra.mxu0 %v2156
        %2309 = vmatprep.subr.mxu0 %v2153
        %2310 = vmatpush1.msra.mxu0 %v2152
        %2311 = vmatprep.subr.mxu0 %v2149
        %2312 = vmatpush1.msra.mxu0 %v2148
        %2313 = vmatprep.subr.mxu0 0.0
        %2314 = vmatpush2.msra.mxu0 0.0
        %2315 = vmatprep.subr.mxu0 0.0
        %2316 = vmatpush2.msra.mxu0 0.0
        %2317 = vmatprep.subr.mxu0 0.0
        %2318 = vmatpush2.msra.mxu0 0.0
        %2319 = vmatprep.subr.mxu0 0.0
        %2320 = vmatpush2.msra.mxu0 0.0
        %2321 = vmatprep.subr.mxu0 0.0
        %2322 = vmatpush2.msra.mxu0 0.0
        %2323 = vmatprep.subr.mxu0 0.0
        %2324 = vmatpush2.msra.mxu0 0.0
        %2325 = vmatprep.subr.mxu0 0.0
        %2326 = vmatpush2.msra.mxu0 0.0
        %2327 = vmatprep.subr.mxu0 0.0
        %2328 = vmatpush2.msra.mxu0 0.0
        %2329 = vmatprep.subr.mxu0 0.0
        %2330 = vmatpush2.msra.mxu0 0.0
        %2331 = vmatprep.subr.mxu0 0.0
        %2332 = vmatpush2.msra.mxu0 0.0
        %2333 = vmatprep.subr.mxu0 0.0
        %2334 = vmatpush2.msra.mxu0 0.0
        %2335 = vmatprep.subr.mxu0 0.0
        %2336 = vmatpush2.msra.mxu0 0.0
        %2337 = vmatprep.subr.mxu0 0.0
        %2338 = vmatpush2.msra.mxu0 0.0
        %2339 = vmatprep.subr.mxu0 0.0
        %2340 = vmatpush2.msra.mxu0 0.0
        %2341 = vmatprep.subr.mxu0 0.0
        %2342 = vmatpush2.msra.mxu0 0.0
        %2343 = vmatprep.subr.mxu0 0.0
        %2344 = vmatpush2.msra.mxu0 0.0
        %2345 = vmatprep.mubr.f32.mxu0 0.0
        %2346 = vmatmul.mubr.f32.gmra.mxu0 %v2145
        %v2347 = vpop.f32.mrf.mxu0
        %v2348 = vadd.f32 0.0, %v2347
        %v2349 = vpop.f32.mrf.mxu0
        %v2350 = vadd.f32 0.0, %v2349
        %2351 = vdwg.mxu0
        %v2352 = vadd.f32 %v2141, %v2277
        %v2353 = vadd.f32 %v2142, %v2279
        %v2354 = vadd.f32 %v2143, %v2348
        %v2355 = vadd.f32 %v2144, %v2350
        %v2356 = vxor.u32 %v2352, 2147483648
        %v2357 = vmul.f32 %v2356, 1.442695
        %v2358 = vpow.pop %v2357
        %v2359 = vadd.f32 %v2358, 1.0
        %v2360 = vrcp.pop %v2359
        %v2361 = vmul.f32 1.0, %v2360
        %v2362 = vxor.u32 %v2353, 2147483648
        %v2363 = vmul.f32 %v2362, 1.442695
        %v2364 = vpow.pop %v2363
        %v2365 = vadd.f32 %v2364, 1.0
        %v2366 = vrcp.pop %v2365
        %v2367 = vmul.f32 1.0, %v2366
        %v2368 = vtanh.pop %v2354
        %v2369 = vxor.u32 %v2355, 2147483648
        %v2370 = vmul.f32 %v2369, 1.442695
        %v2371 = vpow.pop %v2370
        %v2372 = vadd.f32 %v2371, 1.0
        %v2373 = vrcp.pop %v2372
        %v2374 = vmul.f32 1.0, %v2373
        %v2375 = vld [vmem:[#allocation4] sm:$0xff]
        %v2376 = vmul.f32 %v2367, %v2375
        %v2377 = vmul.f32 %v2361, %v2368
        %v2378 = vadd.f32 %v2376, %v2377
        %2379 = vst [vmem:[#allocation4] sm:$0xff] %v2378
        %v2380 = vtanh.pop %v2378
        %v2381 = vmul.f32 %v2374, %v2380
        %2382 = vst [vmem:[#allocation3] sm:$0xff] %v2381
      $region77: #{tpu_custom_call.1} parent=48 // pred_fallthru
        _
    $region49: #{tpu_custom_call.1} parent=1 // pred_fallthru
      _
    // Predicated region
    $region78: #{tpu_custom_call.1} parent=1 // pred_check
      %p2383 = pneg %p72
    $region79: #{tpu_custom_call.1} parent=1 // pred_check_branch
      %2385 = sbr.rel (%p2383) target = $region81
    $region80: #{tpu_custom_call.1} parent=1 // pred_region
      %v2386 = vld [vmem:[#allocation3] sm:$0xff]
      %v2387 = vld [vmem:[%s5] sm:$0xff]
      %2389 = vset.pattern.permute.xlu0 0
      %2390 = vperm.xlu0 %2389, %v2387
      %v2391 = vpop.permute.xlu0 %2390
      %v2393 = vmul.f32 %v2386, %v2391
      %v2394 = vld [vmem:[#allocation12] sm:$0xff]
      %v2395 = vld [vmem:[#allocation12 + $0x8] sm:$0xff]
      %v2396 = vld [vmem:[#allocation12 + $0x10] sm:$0xff]
      %v2397 = vld [vmem:[#allocation12 + $0x18] sm:$0xff]
      %v2398 = vld [vmem:[#allocation12 + $0x20] sm:$0xff]
      %v2399 = vld [vmem:[#allocation12 + $0x28] sm:$0xff]
      %v2400 = vld [vmem:[#allocation12 + $0x30] sm:$0xff]
      %v2401 = vld [vmem:[#allocation12 + $0x38] sm:$0xff]
      %v2402 = vld [vmem:[#allocation12 + $0x40] sm:$0xff]
      %v2403 = vld [vmem:[#allocation12 + $0x48] sm:$0xff]
      %v2404 = vld [vmem:[#allocation12 + $0x50] sm:$0xff]
      %v2405 = vld [vmem:[#allocation12 + $0x58] sm:$0xff]
      %v2406 = vld [vmem:[#allocation12 + $0x60] sm:$0xff]
      %v2407 = vld [vmem:[#allocation12 + $0x68] sm:$0xff]
      %v2408 = vld [vmem:[#allocation12 + $0x70] sm:$0xff]
      %v2409 = vld [vmem:[#allocation12 + $0x78] sm:$0xff]
      %v2410 = vld [vmem:[%s7] sm:$0x1]
      %v2412 = vlaneseq
      %v2413 = vshrl.u32 %v2412, 7
      %v2414 = vsub.s32 0, %v2413
      %v2415 = vrot.slane %v2410, %v2414
      %2417 = vmatprep.subr.mxu0 0.0
      %2418 = vmatpush1.msra.mxu0 %v2409
      %2419 = vmatprep.subr.mxu0 0.0
      %2420 = vmatpush1.msra.mxu0 %v2408
      %2421 = vmatprep.subr.mxu0 0.0
      %2422 = vmatpush1.msra.mxu0 %v2407
      %2423 = vmatprep.subr.mxu0 0.0
      %2424 = vmatpush1.msra.mxu0 %v2406
      %2425 = vmatprep.subr.mxu0 0.0
      %2426 = vmatpush1.msra.mxu0 %v2405
      %2427 = vmatprep.subr.mxu0 0.0
      %2428 = vmatpush1.msra.mxu0 %v2404
      %2429 = vmatprep.subr.mxu0 0.0
      %2430 = vmatpush1.msra.mxu0 %v2403
      %2431 = vmatprep.subr.mxu0 0.0
      %2432 = vmatpush1.msra.mxu0 %v2402
      %2433 = vmatprep.subr.mxu0 0.0
      %2434 = vmatpush1.msra.mxu0 %v2401
      %2435 = vmatprep.subr.mxu0 0.0
      %2436 = vmatpush1.msra.mxu0 %v2400
      %2437 = vmatprep.subr.mxu0 0.0
      %2438 = vmatpush1.msra.mxu0 %v2399
      %2439 = vmatprep.subr.mxu0 0.0
      %2440 = vmatpush1.msra.mxu0 %v2398
      %2441 = vmatprep.subr.mxu0 0.0
      %2442 = vmatpush1.msra.mxu0 %v2397
      %2443 = vmatprep.subr.mxu0 0.0
      %2444 = vmatpush1.msra.mxu0 %v2396
      %2445 = vmatprep.subr.mxu0 0.0
      %2446 = vmatpush1.msra.mxu0 %v2395
      %2447 = vmatprep.subr.mxu0 0.0
      %2448 = vmatpush1.msra.mxu0 %v2394
      %2449 = vmatprep.subr.mxu0 0.0
      %2450 = vmatpush2.msra.mxu0 0.0
      %2451 = vmatprep.subr.mxu0 0.0
      %2452 = vmatpush2.msra.mxu0 0.0
      %2453 = vmatprep.subr.mxu0 0.0
      %2454 = vmatpush2.msra.mxu0 0.0
      %2455 = vmatprep.subr.mxu0 0.0
      %2456 = vmatpush2.msra.mxu0 0.0
      %2457 = vmatprep.subr.mxu0 0.0
      %2458 = vmatpush2.msra.mxu0 0.0
      %2459 = vmatprep.subr.mxu0 0.0
      %2460 = vmatpush2.msra.mxu0 0.0
      %2461 = vmatprep.subr.mxu0 0.0
      %2462 = vmatpush2.msra.mxu0 0.0
      %2463 = vmatprep.subr.mxu0 0.0
      %2464 = vmatpush2.msra.mxu0 0.0
      %2465 = vmatprep.subr.mxu0 0.0
      %2466 = vmatpush2.msra.mxu0 0.0
      %2467 = vmatprep.subr.mxu0 0.0
      %2468 = vmatpush2.msra.mxu0 0.0
      %2469 = vmatprep.subr.mxu0 0.0
      %2470 = vmatpush2.msra.mxu0 0.0
      %2471 = vmatprep.subr.mxu0 0.0
      %2472 = vmatpush2.msra.mxu0 0.0
      %2473 = vmatprep.subr.mxu0 0.0
      %2474 = vmatpush2.msra.mxu0 0.0
      %2475 = vmatprep.subr.mxu0 0.0
      %2476 = vmatpush2.msra.mxu0 0.0
      %2477 = vmatprep.subr.mxu0 0.0
      %2478 = vmatpush2.msra.mxu0 0.0
      %2479 = vmatprep.subr.mxu0 0.0
      %2480 = vmatpush2.msra.mxu0 0.0
      %2481 = vmatprep.mubr.f32.mxu0 0.0
      %2482 = vmatmul.mubr.f32.gmra.mxu0 %v2393
      %v2483 = vpop.f32.mrf.mxu0
      %v2484 = vadd.f32 %v2415, %v2483
      %v2485 = vpop.f32.mrf.mxu0
      %2486 = vdwg.mxu0
      %2487 = vst [vmem:[#allocation13] sm:$0xff] %v2484
    $region81: #{tpu_custom_call.1} parent=1 // pred_fallthru
      _
    // Predicated region
    $region82: #{tpu_custom_call.1} parent=1 // pred_check
      _
    $region83: #{tpu_custom_call.1} parent=1 // pred_check_branch
      %2489 = sbr.rel (0) target = $region85
    $region84: #{tpu_custom_call.1} parent=1 // pred_region
      %s2491 = ssub.s32 128, 128
      %2492 = vsyncadd [#allocation9], %s2491
      %s2494 = sshll.u32 [#allocation13], 4
      %s2495 = int_to_ptr.vmem [resolvable:$true] %s2494
      %2497 = dma.vmem_to_hbm [thread:$0]  %s2495, 128, %s8, [#allocation9]
    $region85: #{tpu_custom_call.1} parent=1 // pred_fallthru
      _
    // Predicated region
    $region86: #{tpu_custom_call.1} parent=1 // pred_check
      _
    $region87: #{tpu_custom_call.1} parent=1 // pred_check_branch
      %2499 = sbr.rel (0) target = $region89
    $region88: #{tpu_custom_call.1} parent=1 // pred_region
      %2500 = dma.done [#allocation9], 128
    $region89: #{tpu_custom_call.1} parent=1 // pred_fallthru
      _
    %2501 = vsyncpa [#allocation8], 1
    %2502 = vsyncpa [#allocation11], 1
    %2503 = vsyncpa [#allocation9], 1

</llo_original>
